<compile_context>
chip_gen: v7x
topology: tpu7x:2x2x1
jax: 0.10.0
libtpu: 0.0.40
codegen_flags: <defaults>
</compile_context>

<pallas_src>
import functools

import jax
import jax.numpy as jnp
from jax import lax
from jax.experimental import pallas as pl
from jax.experimental.pallas import tpu as pltpu


# ----------------------------- fused kernel ---------------------------------

def _up_mix_ffn_kernel(x_ref, w1_ref, b1_ref, w2e_ref, b2_ref, w3_ref, b3_ref,
                       o_ref, lpad_ref, *, n_y, n_x):
    n, _ = x_ref.shape               # (n_y*n_x, d)
    d_mid = w1_ref.shape[1]          # 4*d
    half = d_mid // 2
    H, W = 2 * n_y, 2 * n_x

    # ---- conv_1 (1x1) on pre-upsample pixels (commutes with nearest 2x) ----
    x = x_ref[...]                                                   # (n, d)
    h = jnp.dot(x.astype(jnp.bfloat16), w1_ref[...],
                preferred_element_type=jnp.float32) + b1_ref[...]    # (n, 4d)

    # ---- low-res padded scratch: one dense interior store ------------------
    lpad_ref[1:n_y + 1, 1:n_x + 1, :] = h.reshape(n_y, n_x, d_mid)
    # Re-zero only the 1-pixel border (tiny), every step: correct even when the
    # batch axis is megacore-split and this core never sees program_id == 0.
    zrow = jnp.zeros((1, n_x + 2, d_mid), jnp.float32)
    zcol = jnp.zeros((n_y + 2, 1, d_mid), jnp.float32)
    lpad_ref[0:1, :, :] = zrow
    lpad_ref[n_y + 1:n_y + 2, :, :] = zrow
    lpad_ref[:, 0:1, :] = zcol
    lpad_ref[:, n_x + 1:n_x + 2, :] = zcol

    w2e = w2e_ref[...]               # (16, 4d) phase-summed 2x2 taps
    b2 = b2_ref[...]                 # (1, 4d)

    # ---- parity masks for the phase -> full-res interleave -----------------
    xi = lax.broadcasted_iota(jnp.int32, (n_y, W, 1), 1)
    x_even = (xi % 2) == 0
    yi = lax.broadcasted_iota(jnp.int32, (H, W, 1), 0)
    y_even = (yi % 2) == 0

    def xdup(t):    # (n_y, n_x, C) -> (n_y, W, C) nearest duplication along x
        c = t.shape[-1]
        return jnp.broadcast_to(t[:, :, None, :], (n_y, n_x, 2, c)
                                ).reshape(n_y, W, c)

    def ydup(t):    # (n_y, W, C) -> (H, W, C) nearest duplication along y
        c = t.shape[-1]
        return jnp.broadcast_to(t[:, None, :, :], (n_y, 2, W, c)
                                ).reshape(H, W, c)

    # ---- per-phase 2x2 depthwise conv + GLU at LOW resolution --------------
    gx = []
    for py in range(2):
        gp = []
        for px in range(2):
            base = (py * 2 + px) * 4
            # b2 folded into the first FMA; taps read straight from the scratch
            acc = lpad_ref[py:py + n_y, px:px + n_x, :] * w2e[base + 0] + b2
            acc = acc + lpad_ref[py:py + n_y, px + 1:px + 1 + n_x, :] * w2e[base + 1]
            acc = acc + lpad_ref[py + 1:py + 1 + n_y, px:px + n_x, :] * w2e[base + 2]
            acc = acc + lpad_ref[py + 1:py + 1 + n_y, px + 1:px + 1 + n_x, :] * w2e[base + 3]
            # GLU: gate = FIRST channel half (torch chunk order)
            g = acc[:, :, half:] * jnp.maximum(acc[:, :, :half], 0.0)
            gp.append(g)                                         # (n_y, n_x, 2d)
        # interleave the two x-phases for this y-phase
        gx.append(jnp.where(x_even, xdup(gp[0]), xdup(gp[1])))   # (n_y, W, 2d)
    # interleave the two y-phases
    g_full = jnp.where(y_even, ydup(gx[0]), ydup(gx[1]))         # (H, W, 2d)

    # ---- conv_3 (1x1): single matmul with M = H*W, one dense store ---------
    g2 = g_full.reshape(H * W, half)
    out = jnp.dot(g2.astype(jnp.bfloat16), w3_ref[...],
                  preferred_element_type=jnp.float32) + b3_ref[...]   # (H*W, d)
    o_ref[...] = out.astype(o_ref.dtype)


# ----------------------------- wrapper ---------------------------------------

def _phase_taps(w2):
    """(9, 4d) 3x3 depthwise taps (ky,kx row-major) -> (16, 4d) phase 2x2 taps.

    Row order: ((py*2+px)*2 + a)*2 + b, where (py,px) is the output parity
    phase and (a,b) indexes the 2x2 low-res neighbourhood.
    """
    groups = (((0,), (1, 2)), ((0, 1), (2,)))   # Gy[py][a] == Gx[px][b]
    rows = []
    for py in range(2):
        for px in range(2):
            for a in range(2):
                for b in range(2):
                    t = 0.0
                    for dy in groups[py][a]:
                        for dx in groups[px][b]:
                            t = t + w2[dy * 3 + dx]
                    rows.append(t)
    return jnp.stack(rows, axis=0)


def up_mix_ffn(x, params):
    """x: (B, n, d) with n a perfect square. Returns (B, 4n, d)."""
    B, n, d = x.shape
    n_y = int(round(n ** 0.5))
    n_x = n_y
    assert n_y * n_x == n, "sequence length must be a perfect square"
    d_mid = params['w1'].shape[1]
    half = d_mid // 2
    H, W = 2 * n_y, 2 * n_x
    n_out = H * W

    # bf16 matmul weights (halves weight DMA, full MXU rate); f32 taps/biases.
    w1 = params['w1'].astype(jnp.bfloat16)
    w3 = params['w3'].astype(jnp.bfloat16)
    b1 = params['b1'].reshape(1, d_mid).astype(jnp.float32)
    w2e = _phase_taps(params['w2'].astype(jnp.float32))           # (16, 4d)
    b2 = params['b2'].reshape(1, d_mid).astype(jnp.float32)
    b3 = params['b3'].reshape(1, d).astype(jnp.float32)

    flops = B * (2 * n * d * d_mid            # conv_1
                 + 2 * 4 * n * 4 * d_mid      # 2x2 dwconv x 4 phases
                 + 3 * n_out * half           # GLU
                 + 2 * n_out * half * d)      # conv_3
    bytes_accessed = 4 * (B * (n * d + n_out * d)
                          + d * d_mid + 16 * d_mid + 2 * d_mid + half * d + d)

    kernel = functools.partial(_up_mix_ffn_kernel, n_y=n_y, n_x=n_x)
    return pl.pallas_call(
        kernel,
        out_shape=jax.ShapeDtypeStruct((B, n_out, d), jnp.float32),
        grid=(B,),
        in_specs=[
            pl.BlockSpec((pl.Squeezed(), n, d), lambda b: (b, 0, 0)),
            pl.BlockSpec((d, d_mid), lambda b: (0, 0)),
            pl.BlockSpec((1, d_mid), lambda b: (0, 0)),
            pl.BlockSpec((16, d_mid), lambda b: (0, 0)),
            pl.BlockSpec((1, d_mid), lambda b: (0, 0)),
            pl.BlockSpec((half, d), lambda b: (0, 0)),
            pl.BlockSpec((1, d), lambda b: (0, 0)),
        ],
        out_specs=pl.BlockSpec((pl.Squeezed(), n_out, d), lambda b: (b, 0, 0)),
        scratch_shapes=[pltpu.VMEM((n_y + 2, n_x + 2, d_mid), jnp.float32)],
        compiler_params=pltpu.CompilerParams(
            dimension_semantics=("parallel",),    # both TCs on v7x
        ),
        cost_estimate=pl.CostEstimate(flops=int(flops), transcendentals=0,
                                      bytes_accessed=int(bytes_accessed)),
    )(x, w1, b1, w2e, b2, w3, b3)


up_mix_ffn_jit = jax.jit(up_mix_ffn)


# ----------------------------- pure-JAX reference ----------------------------

def up_mix_ffn_reference(x, params):
    """Mirrors the PyTorch forward exactly (upsample BEFORE conv_1), in f32."""
    B, n, d = x.shape
    n_y = int(round(n ** 0.5))
    n_x = n_y
    d_mid = params['w1'].shape[1]
    H, W = 2 * n_y, 2 * n_x
    xs = x.reshape(B, n_y, n_x, d)                                # NHWC
    xs = jnp.repeat(jnp.repeat(xs, 2, axis=1), 2, axis=2)         # nearest 2x
    h = jnp.einsum('bhwc,cm->bhwm', xs, params['w1']) + params['b1']
    hp = jnp.pad(h, ((0, 0), (1, 1), (1, 1), (0, 0)))
    acc = jnp.zeros_like(h)
    for dy in range(3):
        for dx in range(3):
            acc = acc + hp[:, dy:dy + H, dx:dx + W, :] * params['w2'][dy * 3 + dx]
    h2 = acc + params['b2']
    gate = h2[..., :d_mid // 2]
    val = h2[..., d_mid // 2:]
    g = val * jax.nn.relu(gate)                                   # gate, x = chunk
    out = jnp.einsum('bhwc,cd->bhwd', g, params['w3']) + params['b3']
    return out.reshape(B, H * W, d)


# ----------------------------- params / main ---------------------------------

def init_params(key, d_model):
    d_mid = 4 * d_model
    ks = jax.random.split(key, 6)
    s = 0.05
    return {
        'w1': jax.random.normal(ks[0], (d_model, d_mid), jnp.float32) * s,
        'b1': jax.random.normal(ks[1], (d_mid,), jnp.float32) * s,
        'w2': jax.random.normal(ks[2], (9, d_mid), jnp.float32) * s,   # (ky,kx) taps
        'b2': jax.random.normal(ks[3], (d_mid,), jnp.float32) * s,
        'w3': jax.random.normal(ks[4], (d_mid // 2, d_model), jnp.float32) * s,
        'b3': jax.random.normal(ks[5], (d_model,), jnp.float32) * s,
    }


if __name__ == "__main__":
    key = jax.random.PRNGKey(0)
    B, n = 2, 64                      # n_y = n_x = 8 -> upsampled 16x16

    # d_model=32: previous demo config; d_model=64: gate/val split is 128-lane
    # aligned (review-preferred configuration).
    for d_model in (32, 64):
        kp, kx = jax.random.split(jax.random.fold_in(key, d_model))
        params = init_params(kp, d_model)
        x = jax.random.normal(kx, (B, n, d_model), dtype=jnp.float32)

        out = jax.block_until_ready(up_mix_ffn_jit(x, params))
        ref = up_mix_ffn_reference(x, params)
        err = float(jnp.max(jnp.abs(out - ref)))

        assert out.shape == (B, 4 * n, d_model)
        assert bool(jnp.isfinite(out).all())
        assert err < 5e-3, f"d_model={d_model}: max abs err vs reference = {err}"

    print("KERNEL_OK")
</pallas_src>

<mosaic_0001>
module attributes {stable_mosaic.version = 11 : i64} {
  func.func @_up_mix_ffn_kernel(%arg0: i32, %arg1: memref<1x64x32xf32, #tpu.memory_space<vmem>>, %arg2: memref<32x128xbf16, #tpu.memory_space<vmem>>, %arg3: memref<1x128xf32, #tpu.memory_space<vmem>>, %arg4: memref<16x128xf32, #tpu.memory_space<vmem>>, %arg5: memref<1x128xf32, #tpu.memory_space<vmem>>, %arg6: memref<64x32xbf16, #tpu.memory_space<vmem>>, %arg7: memref<1x32xf32, #tpu.memory_space<vmem>>, %arg8: memref<1x256x32xf32, #tpu.memory_space<vmem>>, %arg9: memref<10x10x128xf32, #tpu.memory_space<vmem>>) attributes {dimension_semantics = [#tpu.dimension_semantics<parallel>], iteration_bounds = array<i64: 2>, scalar_prefetch = 0 : i64, scratch_operands = 1 : i64, tpu.core_type = #tpu.core_type<tc>, window_params = [{transform_indices = @transform_0, window_bounds = array<i64: 1, 64, 32>}, {pipeline_mode = #tpu.pipeline_mode<synchronous>, transform_indices = @transform_1, window_bounds = array<i64: 32, 128>}, {pipeline_mode = #tpu.pipeline_mode<synchronous>, transform_indices = @transform_2, window_bounds = array<i64: 1, 128>}, {pipeline_mode = #tpu.pipeline_mode<synchronous>, transform_indices = @transform_3, window_bounds = array<i64: 16, 128>}, {pipeline_mode = #tpu.pipeline_mode<synchronous>, transform_indices = @transform_4, window_bounds = array<i64: 1, 128>}, {pipeline_mode = #tpu.pipeline_mode<synchronous>, transform_indices = @transform_5, window_bounds = array<i64: 64, 32>}, {pipeline_mode = #tpu.pipeline_mode<synchronous>, transform_indices = @transform_6, window_bounds = array<i64: 1, 32>}, {transform_indices = @transform_7, window_bounds = array<i64: 1, 256, 32>}]} {
    %c0 = arith.constant 0 : index
    %c0_0 = arith.constant 0 : index
    %c0_1 = arith.constant 0 : index
    %0 = vector.load %arg1[%c0, %c0_0, %c0_1] : memref<1x64x32xf32, #tpu.memory_space<vmem>>, vector<1x64x32xf32>
    %1 = vector.shape_cast %0 : vector<1x64x32xf32> to vector<64x32xf32>
    %2 = arith.truncf %1 : vector<64x32xf32> to vector<64x32xbf16>
    %c0_2 = arith.constant 0 : index
    %c0_3 = arith.constant 0 : index
    %3 = vector.load %arg2[%c0_2, %c0_3] : memref<32x128xbf16, #tpu.memory_space<vmem>>, vector<32x128xbf16>
    %cst = arith.constant dense<0.000000e+00> : vector<64x128xf32>
    %4 = tpu.matmul %2, %3, %cst {dimension_numbers = #tpu.dot_dimension_numbers<[1], [0], [0], [1], [0, 0, 1, 1], [], []>} : vector<64x32xbf16>, vector<32x128xbf16>, vector<64x128xf32> -> vector<64x128xf32>
    %c0_4 = arith.constant 0 : index
    %c0_5 = arith.constant 0 : index
    %5 = vector.load %arg3[%c0_4, %c0_5] : memref<1x128xf32, #tpu.memory_space<vmem>>, vector<1x128xf32>
    %6 = vector.broadcast %5 : vector<1x128xf32> to vector<64x128xf32>
    %7 = arith.addf %4, %6 : vector<64x128xf32>
    %8 = vector.shape_cast %7 : vector<64x128xf32> to vector<8x8x128xf32>
    %c1 = arith.constant 1 : index
    %c1_6 = arith.constant 1 : index
    %c0_7 = arith.constant 0 : index
    %9 = vector.load %arg9[%c1, %c1_6, %c0_7] : memref<10x10x128xf32, #tpu.memory_space<vmem>>, vector<8x8x128xf32>
    tpu.vector_store %arg9[%c1, %c1_6, %c0_7], %8 {strides = array<i32>} : memref<10x10x128xf32, #tpu.memory_space<vmem>>, vector<8x8x128xf32>,
    %cst_8 = arith.constant 0.000000e+00 : f32
    %10 = vector.broadcast %cst_8 : f32 to vector<1x10x128xf32>
    %cst_9 = arith.constant 0.000000e+00 : f32
    %11 = vector.broadcast %cst_9 : f32 to vector<10x1x128xf32>
    %c0_10 = arith.constant 0 : index
    %c0_11 = arith.constant 0 : index
    %c0_12 = arith.constant 0 : index
    %12 = vector.load %arg9[%c0_10, %c0_11, %c0_12] : memref<10x10x128xf32, #tpu.memory_space<vmem>>, vector<1x10x128xf32>
    tpu.vector_store %arg9[%c0_10, %c0_11, %c0_12], %10 {strides = array<i32>} : memref<10x10x128xf32, #tpu.memory_space<vmem>>, vector<1x10x128xf32>,
    %c9 = arith.constant 9 : index
    %c0_13 = arith.constant 0 : index
    %c0_14 = arith.constant 0 : index
    %13 = vector.load %arg9[%c9, %c0_13, %c0_14] : memref<10x10x128xf32, #tpu.memory_space<vmem>>, vector<1x10x128xf32>
    tpu.vector_store %arg9[%c9, %c0_13, %c0_14], %10 {strides = array<i32>} : memref<10x10x128xf32, #tpu.memory_space<vmem>>, vector<1x10x128xf32>,
    %c0_15 = arith.constant 0 : index
    %c0_16 = arith.constant 0 : index
    %c0_17 = arith.constant 0 : index
    %14 = vector.load %arg9[%c0_15, %c0_16, %c0_17] : memref<10x10x128xf32, #tpu.memory_space<vmem>>, vector<10x1x128xf32>
    tpu.vector_store %arg9[%c0_15, %c0_16, %c0_17], %11 {strides = array<i32>} : memref<10x10x128xf32, #tpu.memory_space<vmem>>, vector<10x1x128xf32>,
    %c0_18 = arith.constant 0 : index
    %c9_19 = arith.constant 9 : index
    %c0_20 = arith.constant 0 : index
    %15 = vector.load %arg9[%c0_18, %c9_19, %c0_20] : memref<10x10x128xf32, #tpu.memory_space<vmem>>, vector<10x1x128xf32>
    tpu.vector_store %arg9[%c0_18, %c9_19, %c0_20], %11 {strides = array<i32>} : memref<10x10x128xf32, #tpu.memory_space<vmem>>, vector<10x1x128xf32>,
    %c0_21 = arith.constant 0 : index
    %c0_22 = arith.constant 0 : index
    %16 = vector.load %arg4[%c0_21, %c0_22] : memref<16x128xf32, #tpu.memory_space<vmem>>, vector<16x128xf32>
    %c0_23 = arith.constant 0 : index
    %c0_24 = arith.constant 0 : index
    %17 = vector.load %arg5[%c0_23, %c0_24] : memref<1x128xf32, #tpu.memory_space<vmem>>, vector<1x128xf32>
    %18 = tpu.iota {dimensions = array<i32: 1>} : vector<8x16x1xi32>
    %c2_i32 = arith.constant 2 : i32
    %c0_i32 = arith.constant 0 : i32
    %19 = arith.cmpi eq, %c2_i32, %c0_i32 : i32
    %c1_i32 = arith.constant 1 : i32
    %20 = arith.select %19, %c1_i32, %c2_i32 : i32
    %21 = vector.broadcast %20 : i32 to vector<8x16x1xi32>
    %22 = arith.remsi %18, %21 : vector<8x16x1xi32>
    %c0_i32_25 = arith.constant 0 : i32
    %23 = vector.broadcast %c0_i32_25 : i32 to vector<8x16x1xi32>
    %24 = arith.cmpi ne, %22, %23 : vector<8x16x1xi32>
    %c0_i32_26 = arith.constant 0 : i32
    %25 = vector.broadcast %c0_i32_26 : i32 to vector<8x16x1xi32>
    %26 = arith.cmpi slt, %22, %25 : vector<8x16x1xi32>
    %c0_i32_27 = arith.constant 0 : i32
    %27 = arith.cmpi slt, %20, %c0_i32_27 : i32
    %28 = vector.broadcast %27 : i1 to vector<8x16x1xi1>
    %29 = vector.broadcast %28 : vector<8x16x1xi1> to vector<8x16x1xi1>
    %30 = arith.xori %26, %29 : vector<8x16x1xi1>
    %31 = arith.andi %30, %24 : vector<8x16x1xi1>
    %32 = vector.broadcast %20 : i32 to vector<8x16x1xi32>
    %33 = arith.addi %22, %32 : vector<8x16x1xi32>
    %34 = arith.select %31, %33, %22 : vector<8x16x1xi1>, vector<8x16x1xi32>
    %c0_i32_28 = arith.constant 0 : i32
    %35 = vector.broadcast %c0_i32_28 : i32 to vector<8x16x1xi32>
    %36 = arith.cmpi eq, %34, %35 : vector<8x16x1xi32>
    %37 = tpu.iota {dimensions = array<i32: 0>} : vector<16x16x1xi32>
    %c2_i32_29 = arith.constant 2 : i32
    %c0_i32_30 = arith.constant 0 : i32
    %38 = arith.cmpi eq, %c2_i32_29, %c0_i32_30 : i32
    %c1_i32_31 = arith.constant 1 : i32
    %39 = arith.select %38, %c1_i32_31, %c2_i32_29 : i32
    %40 = vector.broadcast %39 : i32 to vector<16x16x1xi32>
    %41 = arith.remsi %37, %40 : vector<16x16x1xi32>
    %c0_i32_32 = arith.constant 0 : i32
    %42 = vector.broadcast %c0_i32_32 : i32 to vector<16x16x1xi32>
    %43 = arith.cmpi ne, %41, %42 : vector<16x16x1xi32>
    %c0_i32_33 = arith.constant 0 : i32
    %44 = vector.broadcast %c0_i32_33 : i32 to vector<16x16x1xi32>
    %45 = arith.cmpi slt, %41, %44 : vector<16x16x1xi32>
    %c0_i32_34 = arith.constant 0 : i32
    %46 = arith.cmpi slt, %39, %c0_i32_34 : i32
    %47 = vector.broadcast %46 : i1 to vector<16x16x1xi1>
    %48 = vector.broadcast %47 : vector<16x16x1xi1> to vector<16x16x1xi1>
    %49 = arith.xori %45, %48 : vector<16x16x1xi1>
    %50 = arith.andi %49, %43 : vector<16x16x1xi1>
    %51 = vector.broadcast %39 : i32 to vector<16x16x1xi32>
    %52 = arith.addi %41, %51 : vector<16x16x1xi32>
    %53 = arith.select %50, %52, %41 : vector<16x16x1xi1>, vector<16x16x1xi32>
    %c0_i32_35 = arith.constant 0 : i32
    %54 = vector.broadcast %c0_i32_35 : i32 to vector<16x16x1xi32>
    %55 = arith.cmpi eq, %53, %54 : vector<16x16x1xi32>
    %c0_36 = arith.constant 0 : index
    %c0_37 = arith.constant 0 : index
    %c0_38 = arith.constant 0 : index
    %56 = vector.load %arg9[%c0_36, %c0_37, %c0_38] : memref<10x10x128xf32, #tpu.memory_space<vmem>>, vector<8x8x128xf32>
    %57 = vector.extract_strided_slice %16 {offsets = [0, 0], sizes = [1, 128], strides = [1, 1]} : vector<16x128xf32> to vector<1x128xf32>
    %58 = vector.shape_cast %57 : vector<1x128xf32> to vector<128xf32>
    %59 = vector.shape_cast %58 : vector<128xf32> to vector<1x1x128xf32>
    %60 = vector.broadcast %59 : vector<1x1x128xf32> to vector<8x8x128xf32>
    %61 = arith.mulf %56, %60 : vector<8x8x128xf32>
    %62 = vector.shape_cast %17 : vector<1x128xf32> to vector<1x1x128xf32>
    %63 = vector.broadcast %62 : vector<1x1x128xf32> to vector<8x8x128xf32>
    %64 = arith.addf %61, %63 : vector<8x8x128xf32>
    %c0_39 = arith.constant 0 : index
    %c1_40 = arith.constant 1 : index
    %c0_41 = arith.constant 0 : index
    %65 = vector.load %arg9[%c0_39, %c1_40, %c0_41] : memref<10x10x128xf32, #tpu.memory_space<vmem>>, vector<8x8x128xf32>
    %66 = vector.extract_strided_slice %16 {offsets = [1, 0], sizes = [1, 128], strides = [1, 1]} : vector<16x128xf32> to vector<1x128xf32>
    %67 = vector.shape_cast %66 : vector<1x128xf32> to vector<128xf32>
    %68 = vector.shape_cast %67 : vector<128xf32> to vector<1x1x128xf32>
    %69 = vector.broadcast %68 : vector<1x1x128xf32> to vector<8x8x128xf32>
    %70 = arith.mulf %65, %69 : vector<8x8x128xf32>
    %71 = arith.addf %64, %70 : vector<8x8x128xf32>
    %c1_42 = arith.constant 1 : index
    %c0_43 = arith.constant 0 : index
    %c0_44 = arith.constant 0 : index
    %72 = vector.load %arg9[%c1_42, %c0_43, %c0_44] : memref<10x10x128xf32, #tpu.memory_space<vmem>>, vector<8x8x128xf32>
    %73 = vector.extract_strided_slice %16 {offsets = [2, 0], sizes = [1, 128], strides = [1, 1]} : vector<16x128xf32> to vector<1x128xf32>
    %74 = vector.shape_cast %73 : vector<1x128xf32> to vector<128xf32>
    %75 = vector.shape_cast %74 : vector<128xf32> to vector<1x1x128xf32>
    %76 = vector.broadcast %75 : vector<1x1x128xf32> to vector<8x8x128xf32>
    %77 = arith.mulf %72, %76 : vector<8x8x128xf32>
    %78 = arith.addf %71, %77 : vector<8x8x128xf32>
    %c1_45 = arith.constant 1 : index
    %c1_46 = arith.constant 1 : index
    %c0_47 = arith.constant 0 : index
    %79 = vector.load %arg9[%c1_45, %c1_46, %c0_47] : memref<10x10x128xf32, #tpu.memory_space<vmem>>, vector<8x8x128xf32>
    %80 = vector.extract_strided_slice %16 {offsets = [3, 0], sizes = [1, 128], strides = [1, 1]} : vector<16x128xf32> to vector<1x128xf32>
    %81 = vector.shape_cast %80 : vector<1x128xf32> to vector<128xf32>
    %82 = vector.shape_cast %81 : vector<128xf32> to vector<1x1x128xf32>
    %83 = vector.broadcast %82 : vector<1x1x128xf32> to vector<8x8x128xf32>
    %84 = arith.mulf %79, %83 : vector<8x8x128xf32>
    %85 = arith.addf %78, %84 : vector<8x8x128xf32>
    %86 = vector.extract_strided_slice %85 {offsets = [0, 0, 64], sizes = [8, 8, 64], strides = [1, 1, 1]} : vector<8x8x128xf32> to vector<8x8x64xf32>
    %87 = vector.extract_strided_slice %85 {offsets = [0, 0, 0], sizes = [8, 8, 64], strides = [1, 1, 1]} : vector<8x8x128xf32> to vector<8x8x64xf32>
    %cst_48 = arith.constant 0.000000e+00 : f32
    %88 = vector.broadcast %cst_48 : f32 to vector<8x8x64xf32>
    %89 = arith.maximumf %87, %88 : vector<8x8x64xf32>
    %90 = arith.mulf %86, %89 : vector<8x8x64xf32>
    %c0_49 = arith.constant 0 : index
    %c1_50 = arith.constant 1 : index
    %c0_51 = arith.constant 0 : index
    %91 = vector.load %arg9[%c0_49, %c1_50, %c0_51] : memref<10x10x128xf32, #tpu.memory_space<vmem>>, vector<8x8x128xf32>
    %92 = vector.extract_strided_slice %16 {offsets = [4, 0], sizes = [1, 128], strides = [1, 1]} : vector<16x128xf32> to vector<1x128xf32>
    %93 = vector.shape_cast %92 : vector<1x128xf32> to vector<128xf32>
    %94 = vector.shape_cast %93 : vector<128xf32> to vector<1x1x128xf32>
    %95 = vector.broadcast %94 : vector<1x1x128xf32> to vector<8x8x128xf32>
    %96 = arith.mulf %91, %95 : vector<8x8x128xf32>
    %97 = vector.shape_cast %17 : vector<1x128xf32> to vector<1x1x128xf32>
    %98 = vector.broadcast %97 : vector<1x1x128xf32> to vector<8x8x128xf32>
    %99 = arith.addf %96, %98 : vector<8x8x128xf32>
    %c0_52 = arith.constant 0 : index
    %c2 = arith.constant 2 : index
    %c0_53 = arith.constant 0 : index
    %100 = vector.load %arg9[%c0_52, %c2, %c0_53] : memref<10x10x128xf32, #tpu.memory_space<vmem>>, vector<8x8x128xf32>
    %101 = vector.extract_strided_slice %16 {offsets = [5, 0], sizes = [1, 128], strides = [1, 1]} : vector<16x128xf32> to vector<1x128xf32>
    %102 = vector.shape_cast %101 : vector<1x128xf32> to vector<128xf32>
    %103 = vector.shape_cast %102 : vector<128xf32> to vector<1x1x128xf32>
    %104 = vector.broadcast %103 : vector<1x1x128xf32> to vector<8x8x128xf32>
    %105 = arith.mulf %100, %104 : vector<8x8x128xf32>
    %106 = arith.addf %99, %105 : vector<8x8x128xf32>
    %c1_54 = arith.constant 1 : index
    %c1_55 = arith.constant 1 : index
    %c0_56 = arith.constant 0 : index
    %107 = vector.load %arg9[%c1_54, %c1_55, %c0_56] : memref<10x10x128xf32, #tpu.memory_space<vmem>>, vector<8x8x128xf32>
    %108 = vector.extract_strided_slice %16 {offsets = [6, 0], sizes = [1, 128], strides = [1, 1]} : vector<16x128xf32> to vector<1x128xf32>
    %109 = vector.shape_cast %108 : vector<1x128xf32> to vector<128xf32>
    %110 = vector.shape_cast %109 : vector<128xf32> to vector<1x1x128xf32>
    %111 = vector.broadcast %110 : vector<1x1x128xf32> to vector<8x8x128xf32>
    %112 = arith.mulf %107, %111 : vector<8x8x128xf32>
    %113 = arith.addf %106, %112 : vector<8x8x128xf32>
    %c1_57 = arith.constant 1 : index
    %c2_58 = arith.constant 2 : index
    %c0_59 = arith.constant 0 : index
    %114 = vector.load %arg9[%c1_57, %c2_58, %c0_59] : memref<10x10x128xf32, #tpu.memory_space<vmem>>, vector<8x8x128xf32>
    %115 = vector.extract_strided_slice %16 {offsets = [7, 0], sizes = [1, 128], strides = [1, 1]} : vector<16x128xf32> to vector<1x128xf32>
    %116 = vector.shape_cast %115 : vector<1x128xf32> to vector<128xf32>
    %117 = vector.shape_cast %116 : vector<128xf32> to vector<1x1x128xf32>
    %118 = vector.broadcast %117 : vector<1x1x128xf32> to vector<8x8x128xf32>
    %119 = arith.mulf %114, %118 : vector<8x8x128xf32>
    %120 = arith.addf %113, %119 : vector<8x8x128xf32>
    %121 = vector.extract_strided_slice %120 {offsets = [0, 0, 64], sizes = [8, 8, 64], strides = [1, 1, 1]} : vector<8x8x128xf32> to vector<8x8x64xf32>
    %122 = vector.extract_strided_slice %120 {offsets = [0, 0, 0], sizes = [8, 8, 64], strides = [1, 1, 1]} : vector<8x8x128xf32> to vector<8x8x64xf32>
    %cst_60 = arith.constant 0.000000e+00 : f32
    %123 = vector.broadcast %cst_60 : f32 to vector<8x8x64xf32>
    %124 = arith.maximumf %122, %123 : vector<8x8x64xf32>
    %125 = arith.mulf %121, %124 : vector<8x8x64xf32>
    %126 = vector.shape_cast %90 : vector<8x8x64xf32> to vector<8x8x1x64xf32>
    %127 = vector.shape_cast %126 : vector<8x8x1x64xf32> to vector<8x8x1x64xf32>
    %128 = vector.broadcast %127 : vector<8x8x1x64xf32> to vector<8x8x2x64xf32>
    %129 = vector.shape_cast %128 : vector<8x8x2x64xf32> to vector<8x16x64xf32>
    %130 = vector.shape_cast %125 : vector<8x8x64xf32> to vector<8x8x1x64xf32>
    %131 = vector.shape_cast %130 : vector<8x8x1x64xf32> to vector<8x8x1x64xf32>
    %132 = vector.broadcast %131 : vector<8x8x1x64xf32> to vector<8x8x2x64xf32>
    %133 = vector.shape_cast %132 : vector<8x8x2x64xf32> to vector<8x16x64xf32>
    %134 = vector.shape_cast %36 : vector<8x16x1xi1> to vector<8x16x1xi1>
    %135 = vector.broadcast %134 : vector<8x16x1xi1> to vector<8x16x64xi1>
    %136 = arith.select %135, %129, %133 : vector<8x16x64xi1>, vector<8x16x64xf32>
    %c1_61 = arith.constant 1 : index
    %c0_62 = arith.constant 0 : index
    %c0_63 = arith.constant 0 : index
    %137 = vector.load %arg9[%c1_61, %c0_62, %c0_63] : memref<10x10x128xf32, #tpu.memory_space<vmem>>, vector<8x8x128xf32>
    %138 = vector.extract_strided_slice %16 {offsets = [8, 0], sizes = [1, 128], strides = [1, 1]} : vector<16x128xf32> to vector<1x128xf32>
    %139 = vector.shape_cast %138 : vector<1x128xf32> to vector<128xf32>
    %140 = vector.shape_cast %139 : vector<128xf32> to vector<1x1x128xf32>
    %141 = vector.broadcast %140 : vector<1x1x128xf32> to vector<8x8x128xf32>
    %142 = arith.mulf %137, %141 : vector<8x8x128xf32>
    %143 = vector.shape_cast %17 : vector<1x128xf32> to vector<1x1x128xf32>
    %144 = vector.broadcast %143 : vector<1x1x128xf32> to vector<8x8x128xf32>
    %145 = arith.addf %142, %144 : vector<8x8x128xf32>
    %c1_64 = arith.constant 1 : index
    %c1_65 = arith.constant 1 : index
    %c0_66 = arith.constant 0 : index
    %146 = vector.load %arg9[%c1_64, %c1_65, %c0_66] : memref<10x10x128xf32, #tpu.memory_space<vmem>>, vector<8x8x128xf32>
    %147 = vector.extract_strided_slice %16 {offsets = [9, 0], sizes = [1, 128], strides = [1, 1]} : vector<16x128xf32> to vector<1x128xf32>
    %148 = vector.shape_cast %147 : vector<1x128xf32> to vector<128xf32>
    %149 = vector.shape_cast %148 : vector<128xf32> to vector<1x1x128xf32>
    %150 = vector.broadcast %149 : vector<1x1x128xf32> to vector<8x8x128xf32>
    %151 = arith.mulf %146, %150 : vector<8x8x128xf32>
    %152 = arith.addf %145, %151 : vector<8x8x128xf32>
    %c2_67 = arith.constant 2 : index
    %c0_68 = arith.constant 0 : index
    %c0_69 = arith.constant 0 : index
    %153 = vector.load %arg9[%c2_67, %c0_68, %c0_69] : memref<10x10x128xf32, #tpu.memory_space<vmem>>, vector<8x8x128xf32>
    %154 = vector.extract_strided_slice %16 {offsets = [10, 0], sizes = [1, 128], strides = [1, 1]} : vector<16x128xf32> to vector<1x128xf32>
    %155 = vector.shape_cast %154 : vector<1x128xf32> to vector<128xf32>
    %156 = vector.shape_cast %155 : vector<128xf32> to vector<1x1x128xf32>
    %157 = vector.broadcast %156 : vector<1x1x128xf32> to vector<8x8x128xf32>
    %158 = arith.mulf %153, %157 : vector<8x8x128xf32>
    %159 = arith.addf %152, %158 : vector<8x8x128xf32>
    %c2_70 = arith.constant 2 : index
    %c1_71 = arith.constant 1 : index
    %c0_72 = arith.constant 0 : index
    %160 = vector.load %arg9[%c2_70, %c1_71, %c0_72] : memref<10x10x128xf32, #tpu.memory_space<vmem>>, vector<8x8x128xf32>
    %161 = vector.extract_strided_slice %16 {offsets = [11, 0], sizes = [1, 128], strides = [1, 1]} : vector<16x128xf32> to vector<1x128xf32>
    %162 = vector.shape_cast %161 : vector<1x128xf32> to vector<128xf32>
    %163 = vector.shape_cast %162 : vector<128xf32> to vector<1x1x128xf32>
    %164 = vector.broadcast %163 : vector<1x1x128xf32> to vector<8x8x128xf32>
    %165 = arith.mulf %160, %164 : vector<8x8x128xf32>
    %166 = arith.addf %159, %165 : vector<8x8x128xf32>
    %167 = vector.extract_strided_slice %166 {offsets = [0, 0, 64], sizes = [8, 8, 64], strides = [1, 1, 1]} : vector<8x8x128xf32> to vector<8x8x64xf32>
    %168 = vector.extract_strided_slice %166 {offsets = [0, 0, 0], sizes = [8, 8, 64], strides = [1, 1, 1]} : vector<8x8x128xf32> to vector<8x8x64xf32>
    %cst_73 = arith.constant 0.000000e+00 : f32
    %169 = vector.broadcast %cst_73 : f32 to vector<8x8x64xf32>
    %170 = arith.maximumf %168, %169 : vector<8x8x64xf32>
    %171 = arith.mulf %167, %170 : vector<8x8x64xf32>
    %c1_74 = arith.constant 1 : index
    %c1_75 = arith.constant 1 : index
    %c0_76 = arith.constant 0 : index
    %172 = vector.load %arg9[%c1_74, %c1_75, %c0_76] : memref<10x10x128xf32, #tpu.memory_space<vmem>>, vector<8x8x128xf32>
    %173 = vector.extract_strided_slice %16 {offsets = [12, 0], sizes = [1, 128], strides = [1, 1]} : vector<16x128xf32> to vector<1x128xf32>
    %174 = vector.shape_cast %173 : vector<1x128xf32> to vector<128xf32>
    %175 = vector.shape_cast %174 : vector<128xf32> to vector<1x1x128xf32>
    %176 = vector.broadcast %175 : vector<1x1x128xf32> to vector<8x8x128xf32>
    %177 = arith.mulf %172, %176 : vector<8x8x128xf32>
    %178 = vector.shape_cast %17 : vector<1x128xf32> to vector<1x1x128xf32>
    %179 = vector.broadcast %178 : vector<1x1x128xf32> to vector<8x8x128xf32>
    %180 = arith.addf %177, %179 : vector<8x8x128xf32>
    %c1_77 = arith.constant 1 : index
    %c2_78 = arith.constant 2 : index
    %c0_79 = arith.constant 0 : index
    %181 = vector.load %arg9[%c1_77, %c2_78, %c0_79] : memref<10x10x128xf32, #tpu.memory_space<vmem>>, vector<8x8x128xf32>
    %182 = vector.extract_strided_slice %16 {offsets = [13, 0], sizes = [1, 128], strides = [1, 1]} : vector<16x128xf32> to vector<1x128xf32>
    %183 = vector.shape_cast %182 : vector<1x128xf32> to vector<128xf32>
    %184 = vector.shape_cast %183 : vector<128xf32> to vector<1x1x128xf32>
    %185 = vector.broadcast %184 : vector<1x1x128xf32> to vector<8x8x128xf32>
    %186 = arith.mulf %181, %185 : vector<8x8x128xf32>
    %187 = arith.addf %180, %186 : vector<8x8x128xf32>
    %c2_80 = arith.constant 2 : index
    %c1_81 = arith.constant 1 : index
    %c0_82 = arith.constant 0 : index
    %188 = vector.load %arg9[%c2_80, %c1_81, %c0_82] : memref<10x10x128xf32, #tpu.memory_space<vmem>>, vector<8x8x128xf32>
    %189 = vector.extract_strided_slice %16 {offsets = [14, 0], sizes = [1, 128], strides = [1, 1]} : vector<16x128xf32> to vector<1x128xf32>
    %190 = vector.shape_cast %189 : vector<1x128xf32> to vector<128xf32>
    %191 = vector.shape_cast %190 : vector<128xf32> to vector<1x1x128xf32>
    %192 = vector.broadcast %191 : vector<1x1x128xf32> to vector<8x8x128xf32>
    %193 = arith.mulf %188, %192 : vector<8x8x128xf32>
    %194 = arith.addf %187, %193 : vector<8x8x128xf32>
    %c2_83 = arith.constant 2 : index
    %c2_84 = arith.constant 2 : index
    %c0_85 = arith.constant 0 : index
    %195 = vector.load %arg9[%c2_83, %c2_84, %c0_85] : memref<10x10x128xf32, #tpu.memory_space<vmem>>, vector<8x8x128xf32>
    %196 = vector.extract_strided_slice %16 {offsets = [15, 0], sizes = [1, 128], strides = [1, 1]} : vector<16x128xf32> to vector<1x128xf32>
    %197 = vector.shape_cast %196 : vector<1x128xf32> to vector<128xf32>
    %198 = vector.shape_cast %197 : vector<128xf32> to vector<1x1x128xf32>
    %199 = vector.broadcast %198 : vector<1x1x128xf32> to vector<8x8x128xf32>
    %200 = arith.mulf %195, %199 : vector<8x8x128xf32>
    %201 = arith.addf %194, %200 : vector<8x8x128xf32>
    %202 = vector.extract_strided_slice %201 {offsets = [0, 0, 64], sizes = [8, 8, 64], strides = [1, 1, 1]} : vector<8x8x128xf32> to vector<8x8x64xf32>
    %203 = vector.extract_strided_slice %201 {offsets = [0, 0, 0], sizes = [8, 8, 64], strides = [1, 1, 1]} : vector<8x8x128xf32> to vector<8x8x64xf32>
    %cst_86 = arith.constant 0.000000e+00 : f32
    %204 = vector.broadcast %cst_86 : f32 to vector<8x8x64xf32>
    %205 = arith.maximumf %203, %204 : vector<8x8x64xf32>
    %206 = arith.mulf %202, %205 : vector<8x8x64xf32>
    %207 = vector.shape_cast %171 : vector<8x8x64xf32> to vector<8x8x1x64xf32>
    %208 = vector.shape_cast %207 : vector<8x8x1x64xf32> to vector<8x8x1x64xf32>
    %209 = vector.broadcast %208 : vector<8x8x1x64xf32> to vector<8x8x2x64xf32>
    %210 = vector.shape_cast %209 : vector<8x8x2x64xf32> to vector<8x16x64xf32>
    %211 = vector.shape_cast %206 : vector<8x8x64xf32> to vector<8x8x1x64xf32>
    %212 = vector.shape_cast %211 : vector<8x8x1x64xf32> to vector<8x8x1x64xf32>
    %213 = vector.broadcast %212 : vector<8x8x1x64xf32> to vector<8x8x2x64xf32>
    %214 = vector.shape_cast %213 : vector<8x8x2x64xf32> to vector<8x16x64xf32>
    %215 = vector.shape_cast %36 : vector<8x16x1xi1> to vector<8x16x1xi1>
    %216 = vector.broadcast %215 : vector<8x16x1xi1> to vector<8x16x64xi1>
    %217 = arith.select %216, %210, %214 : vector<8x16x64xi1>, vector<8x16x64xf32>
    %218 = vector.shape_cast %136 : vector<8x16x64xf32> to vector<8x1x16x64xf32>
    %219 = vector.shape_cast %218 : vector<8x1x16x64xf32> to vector<8x1x16x64xf32>
    %220 = vector.broadcast %219 : vector<8x1x16x64xf32> to vector<8x2x16x64xf32>
    %221 = vector.shape_cast %220 : vector<8x2x16x64xf32> to vector<16x16x64xf32>
    %222 = vector.shape_cast %217 : vector<8x16x64xf32> to vector<8x1x16x64xf32>
    %223 = vector.shape_cast %222 : vector<8x1x16x64xf32> to vector<8x1x16x64xf32>
    %224 = vector.broadcast %223 : vector<8x1x16x64xf32> to vector<8x2x16x64xf32>
    %225 = vector.shape_cast %224 : vector<8x2x16x64xf32> to vector<16x16x64xf32>
    %226 = vector.shape_cast %55 : vector<16x16x1xi1> to vector<16x16x1xi1>
    %227 = vector.broadcast %226 : vector<16x16x1xi1> to vector<16x16x64xi1>
    %228 = arith.select %227, %221, %225 : vector<16x16x64xi1>, vector<16x16x64xf32>
    %229 = vector.shape_cast %228 : vector<16x16x64xf32> to vector<256x64xf32>
    %230 = arith.truncf %229 : vector<256x64xf32> to vector<256x64xbf16>
    %c0_87 = arith.constant 0 : index
    %c0_88 = arith.constant 0 : index
    %231 = vector.load %arg6[%c0_87, %c0_88] : memref<64x32xbf16, #tpu.memory_space<vmem>>, vector<64x32xbf16>
    %cst_89 = arith.constant dense<0.000000e+00> : vector<256x32xf32>
    %232 = tpu.matmul %230, %231, %cst_89 {dimension_numbers = #tpu.dot_dimension_numbers<[1], [0], [0], [1], [0, 0, 1, 1], [], []>} : vector<256x64xbf16>, vector<64x32xbf16>, vector<256x32xf32> -> vector<256x32xf32>
    %c0_90 = arith.constant 0 : index
    %c0_91 = arith.constant 0 : index
    %233 = vector.load %arg7[%c0_90, %c0_91] : memref<1x32xf32, #tpu.memory_space<vmem>>, vector<1x32xf32>
    %234 = vector.broadcast %233 : vector<1x32xf32> to vector<256x32xf32>
    %235 = arith.addf %232, %234 : vector<256x32xf32>
    %c0_92 = arith.constant 0 : index
    %c0_93 = arith.constant 0 : index
    %c0_94 = arith.constant 0 : index
    %236 = vector.load %arg8[%c0_92, %c0_93, %c0_94] : memref<1x256x32xf32, #tpu.memory_space<vmem>>, vector<1x256x32xf32>
    %237 = vector.shape_cast %236 : vector<1x256x32xf32> to vector<256x32xf32>
    %238 = vector.shape_cast %235 : vector<256x32xf32> to vector<1x256x32xf32>
    tpu.vector_store %arg8[%c0_92, %c0_93, %c0_94], %238 {strides = array<i32>} : memref<1x256x32xf32, #tpu.memory_space<vmem>>, vector<1x256x32xf32>,
    return
  }
  func.func @transform_0(%arg0: i32) -> (i32, i32, i32) {
    %c0_i32 = arith.constant 0 : i32
    %c0_i32_0 = arith.constant 0 : i32
    %c0_i32_1 = arith.constant 0 : i32
    return %arg0, %c0_i32, %c0_i32_0 : i32, i32, i32
  }
  func.func @transform_1(%arg0: i32) -> (i32, i32) {
    %c0_i32 = arith.constant 0 : i32
    %c0_i32_0 = arith.constant 0 : i32
    %c0_i32_1 = arith.constant 0 : i32
    return %c0_i32, %c0_i32_0 : i32, i32
  }
  func.func @transform_2(%arg0: i32) -> (i32, i32) {
    %c0_i32 = arith.constant 0 : i32
    %c0_i32_0 = arith.constant 0 : i32
    %c0_i32_1 = arith.constant 0 : i32
    return %c0_i32, %c0_i32_0 : i32, i32
  }
  func.func @transform_3(%arg0: i32) -> (i32, i32) {
    %c0_i32 = arith.constant 0 : i32
    %c0_i32_0 = arith.constant 0 : i32
    %c0_i32_1 = arith.constant 0 : i32
    return %c0_i32, %c0_i32_0 : i32, i32
  }
  func.func @transform_4(%arg0: i32) -> (i32, i32) {
    %c0_i32 = arith.constant 0 : i32
    %c0_i32_0 = arith.constant 0 : i32
    %c0_i32_1 = arith.constant 0 : i32
    return %c0_i32, %c0_i32_0 : i32, i32
  }
  func.func @transform_5(%arg0: i32) -> (i32, i32) {
    %c0_i32 = arith.constant 0 : i32
    %c0_i32_0 = arith.constant 0 : i32
    %c0_i32_1 = arith.constant 0 : i32
    return %c0_i32, %c0_i32_0 : i32, i32
  }
  func.func @transform_6(%arg0: i32) -> (i32, i32) {
    %c0_i32 = arith.constant 0 : i32
    %c0_i32_0 = arith.constant 0 : i32
    %c0_i32_1 = arith.constant 0 : i32
    return %c0_i32, %c0_i32_0 : i32, i32
  }
  func.func @transform_7(%arg0: i32) -> (i32, i32, i32) {
    %c0_i32 = arith.constant 0 : i32
    %c0_i32_0 = arith.constant 0 : i32
    %c0_i32_1 = arith.constant 0 : i32
    return %arg0, %c0_i32, %c0_i32_0 : i32, i32, i32
  }
}

</mosaic_0001>

<llo_original>
// kernel: up_mix_ffn.1
$region0: #{up_mix_ffn.1}
  #allocation0 [shape = 'u32[]', space=smem, size = 0x4, offset = 0x4, fixed_abs, tag = 'smem constant byte address 0x4 - core index']
  #allocation1 [shape = 'u32[144,128]{1,0:T(1,128)}', space=vmem, size = 0x12000, scoped, tag = 'internal scratch']
  #allocation2 [shape = 'f32[10,10,128]{2,1,0:T(8,128)}', space=vmem, size = 0x14000, scoped, tag = 'scratch operand']
  %s0 = inlined_call_operand.vmem [shape: f32[2,64,32], index: 0, kind: input, shape index: {}]
  %s1 = inlined_call_operand.vmem [shape: bf16[32,128], index: 1, kind: input, shape index: {}]
  %s2 = inlined_call_operand.vmem [shape: f32[1,128], index: 2, kind: input, shape index: {}]
  %s3 = inlined_call_operand.vmem [shape: f32[16,128], index: 3, kind: input, shape index: {}]
  %s4 = inlined_call_operand.vmem [shape: f32[1,128], index: 4, kind: input, shape index: {}]
  %s5 = inlined_call_operand.vmem [shape: bf16[64,32], index: 5, kind: input, shape index: {}]
  %s6 = inlined_call_operand.vmem [shape: f32[1,32], index: 6, kind: input, shape index: {}]
  %s7 = inlined_call_operand.vmem [shape: f32[2,256,32], index: 7, kind: output, shape index: {}]
  %s8 = sld [smem:[#allocation0]]
  $region61: #{up_mix_ffn.1} parent=0
    _
  %s10 = ssub.s32 1, %s8
  %s11 = scalar_select 0, %s10, %s8
  loop: start=0, step=1, limit=4
  $region2: #{up_mix_ffn.1} parent=0 // loop_pre_header
    _
  $region3: #{up_mix_ffn.1} parent=0 // loop_header
    %s13 = sphi 0, %s17
    %p14 = scmp.ge.s32.totalorder %s13, 4
    %s23 = sphi 0, %s25
    %s26 = sphi 0, %s23
    %s27 = sphi 0, %s26
    %s43 = sphi 0, %s27
    %s47 = sphi 0, %s47
    %s49 = sphi 0, %s47
    %s50 = sphi 0, %s49
    %s64 = sphi 0, %s50
    %s68 = sphi 0, %s68
    %s70 = sphi 0, %s68
    %s71 = sphi 0, %s70
    %s85 = sphi 0, %s71
    %s89 = sphi 0, %s89
    %s91 = sphi 0, %s89
    %s92 = sphi 0, %s91
    %s106 = sphi 0, %s92
    %s110 = sphi 0, %s110
    %s112 = sphi 0, %s110
    %s113 = sphi 0, %s112
    %s127 = sphi 0, %s113
    %s131 = sphi 0, %s131
    %s133 = sphi 0, %s131
    %s134 = sphi 0, %s133
    %s148 = sphi 0, %s134
    %s152 = sphi 0, %s152
    %s154 = sphi 0, %s152
    %s155 = sphi 0, %s154
    %s169 = sphi 0, %s155
    %s175 = sphi 0, %s177
    %s178 = sphi 0, %s175
    %s179 = sphi 0, %s178
    %s195 = sphi 0, %s179
  $region4: #{up_mix_ffn.1} parent=0 // loop_header_branch
    %16 = sbr.rel (%p14) target = $region8
  $region5: #{up_mix_ffn.1} parent=0 // loop_body
    %s18 = ssub.s32 %s13, 1
    %s19 = ssub.s32 %s13, 2
    %s20 = sadd.s32 %s13, 1
    %s21 = ssub.s32 %s13, %s20
    %p22 = scmp.eq.s32.totalorder %s21, 0
    %s24 = sadd.s32 %s23, 1
    %s25 = scalar_select %p22, %s23, %s24
    %p28 = pneg %p22
    %p29 = scmp.eq.s32.totalorder %s13, 1
    %p30 = por %p28, %p29
    %p31 = scmp.ne.s32.totalorder %s23, %s26
    %p32 = scmp.eq.s32.totalorder %s13, 0
    %p33 = por %p31, %p32
    %p34 = scmp.ne.s32.totalorder %s23, %s26
    %p35 = scmp.eq.s32.totalorder %s18, 1
    %p36 = por %p34, %p35
    %p37 = scmp.ne.s32.totalorder %s26, %s27
    %p38 = scmp.eq.s32.totalorder %s18, 0
    %p39 = por %p37, %p38
    %p40 = scmp.ne.s32.totalorder %s26, %s27
    %p41 = scmp.eq.s32.totalorder %s19, 1
    %p42 = por %p40, %p41
    %p44 = scmp.ne.s32.totalorder %s27, %s43
    %p45 = scmp.eq.s32.totalorder %s19, 0
    %p46 = por %p44, %p45
    %s48 = sadd.s32 %s47, 1
    %p51 = scmp.eq.s32.totalorder %s13, 1
    %p52 = scmp.ne.s32.totalorder %s47, %s49
    %p53 = scmp.eq.s32.totalorder %s13, 0
    %p54 = por %p52, %p53
    %p55 = scmp.ne.s32.totalorder %s47, %s49
    %p56 = scmp.eq.s32.totalorder %s18, 1
    %p57 = por %p55, %p56
    %p58 = scmp.ne.s32.totalorder %s49, %s50
    %p59 = scmp.eq.s32.totalorder %s18, 0
    %p60 = por %p58, %p59
    %p61 = scmp.ne.s32.totalorder %s49, %s50
    %p62 = scmp.eq.s32.totalorder %s19, 1
    %p63 = por %p61, %p62
    %p65 = scmp.ne.s32.totalorder %s50, %s64
    %p66 = scmp.eq.s32.totalorder %s19, 0
    %p67 = por %p65, %p66
    %s69 = sadd.s32 %s68, 1
    %p72 = scmp.eq.s32.totalorder %s13, 1
    %p73 = scmp.ne.s32.totalorder %s68, %s70
    %p74 = scmp.eq.s32.totalorder %s13, 0
    %p75 = por %p73, %p74
    %p76 = scmp.ne.s32.totalorder %s68, %s70
    %p77 = scmp.eq.s32.totalorder %s18, 1
    %p78 = por %p76, %p77
    %p79 = scmp.ne.s32.totalorder %s70, %s71
    %p80 = scmp.eq.s32.totalorder %s18, 0
    %p81 = por %p79, %p80
    %p82 = scmp.ne.s32.totalorder %s70, %s71
    %p83 = scmp.eq.s32.totalorder %s19, 1
    %p84 = por %p82, %p83
    %p86 = scmp.ne.s32.totalorder %s71, %s85
    %p87 = scmp.eq.s32.totalorder %s19, 0
    %p88 = por %p86, %p87
    %s90 = sadd.s32 %s89, 1
    %p93 = scmp.eq.s32.totalorder %s13, 1
    %p94 = scmp.ne.s32.totalorder %s89, %s91
    %p95 = scmp.eq.s32.totalorder %s13, 0
    %p96 = por %p94, %p95
    %p97 = scmp.ne.s32.totalorder %s89, %s91
    %p98 = scmp.eq.s32.totalorder %s18, 1
    %p99 = por %p97, %p98
    %p100 = scmp.ne.s32.totalorder %s91, %s92
    %p101 = scmp.eq.s32.totalorder %s18, 0
    %p102 = por %p100, %p101
    %p103 = scmp.ne.s32.totalorder %s91, %s92
    %p104 = scmp.eq.s32.totalorder %s19, 1
    %p105 = por %p103, %p104
    %p107 = scmp.ne.s32.totalorder %s92, %s106
    %p108 = scmp.eq.s32.totalorder %s19, 0
    %p109 = por %p107, %p108
    %s111 = sadd.s32 %s110, 1
    %p114 = scmp.eq.s32.totalorder %s13, 1
    %p115 = scmp.ne.s32.totalorder %s110, %s112
    %p116 = scmp.eq.s32.totalorder %s13, 0
    %p117 = por %p115, %p116
    %p118 = scmp.ne.s32.totalorder %s110, %s112
    %p119 = scmp.eq.s32.totalorder %s18, 1
    %p120 = por %p118, %p119
    %p121 = scmp.ne.s32.totalorder %s112, %s113
    %p122 = scmp.eq.s32.totalorder %s18, 0
    %p123 = por %p121, %p122
    %p124 = scmp.ne.s32.totalorder %s112, %s113
    %p125 = scmp.eq.s32.totalorder %s19, 1
    %p126 = por %p124, %p125
    %p128 = scmp.ne.s32.totalorder %s113, %s127
    %p129 = scmp.eq.s32.totalorder %s19, 0
    %p130 = por %p128, %p129
    %s132 = sadd.s32 %s131, 1
    %p135 = scmp.eq.s32.totalorder %s13, 1
    %p136 = scmp.ne.s32.totalorder %s131, %s133
    %p137 = scmp.eq.s32.totalorder %s13, 0
    %p138 = por %p136, %p137
    %p139 = scmp.ne.s32.totalorder %s131, %s133
    %p140 = scmp.eq.s32.totalorder %s18, 1
    %p141 = por %p139, %p140
    %p142 = scmp.ne.s32.totalorder %s133, %s134
    %p143 = scmp.eq.s32.totalorder %s18, 0
    %p144 = por %p142, %p143
    %p145 = scmp.ne.s32.totalorder %s133, %s134
    %p146 = scmp.eq.s32.totalorder %s19, 1
    %p147 = por %p145, %p146
    %p149 = scmp.ne.s32.totalorder %s134, %s148
    %p150 = scmp.eq.s32.totalorder %s19, 0
    %p151 = por %p149, %p150
    %s153 = sadd.s32 %s152, 1
    %p156 = scmp.eq.s32.totalorder %s13, 1
    %p157 = scmp.ne.s32.totalorder %s152, %s154
    %p158 = scmp.eq.s32.totalorder %s13, 0
    %p159 = por %p157, %p158
    %p160 = scmp.ne.s32.totalorder %s152, %s154
    %p161 = scmp.eq.s32.totalorder %s18, 1
    %p162 = por %p160, %p161
    %p163 = scmp.ne.s32.totalorder %s154, %s155
    %p164 = scmp.eq.s32.totalorder %s18, 0
    %p165 = por %p163, %p164
    %p166 = scmp.ne.s32.totalorder %s154, %s155
    %p167 = scmp.eq.s32.totalorder %s19, 1
    %p168 = por %p166, %p167
    %p170 = scmp.ne.s32.totalorder %s155, %s169
    %p171 = scmp.eq.s32.totalorder %s19, 0
    %p172 = por %p170, %p171
    %s173 = ssub.s32 %s13, %s20
    %p174 = scmp.eq.s32.totalorder %s173, 0
    %s176 = sadd.s32 %s175, 1
    %s177 = scalar_select %p174, %s175, %s176
    %p180 = pneg %p174
    %p181 = scmp.eq.s32.totalorder %s13, 1
    %p182 = por %p180, %p181
    %p183 = scmp.ne.s32.totalorder %s175, %s178
    %p184 = scmp.eq.s32.totalorder %s13, 0
    %p185 = por %p183, %p184
    %p186 = scmp.ne.s32.totalorder %s175, %s178
    %p187 = scmp.eq.s32.totalorder %s18, 1
    %p188 = por %p186, %p187
    %p189 = scmp.ne.s32.totalorder %s178, %s179
    %p190 = scmp.eq.s32.totalorder %s18, 0
    %p191 = por %p189, %p190
    %p192 = scmp.ne.s32.totalorder %s178, %s179
    %p193 = scmp.eq.s32.totalorder %s19, 1
    %p194 = por %p192, %p193
    %p196 = scmp.ne.s32.totalorder %s179, %s195
    %p197 = scmp.eq.s32.totalorder %s19, 0
    %p198 = por %p196, %p197
    %p199 = scmp.le.s32.totalorder 1, %s13
    %p200 = scmp.lt.s32.totalorder %s13, 3
    %p201 = pnand %p199, %p200
    %p202 = pneg %p201
    // Predicated region
    $region9: #{up_mix_ffn.1} parent=5 // pred_check
      _
    $region10: #{up_mix_ffn.1} parent=5 // pred_check_branch
      %204 = sbr.rel (%p201) target = $region12
    $region11: #{up_mix_ffn.1} parent=5 // pred_region
      %s205 = ssub.s32 %s13, 1
      // Predicated region
      $region13: #{up_mix_ffn.1} parent=11 // pred_check
        %p206 = pneg %p60
      $region14: #{up_mix_ffn.1} parent=11 // pred_check_branch
        %208 = sbr.rel (%p206) target = $region16
      $region15: #{up_mix_ffn.1} parent=11 // pred_region
        _
      $region16: #{up_mix_ffn.1} parent=11 // pred_fallthru
        _
      // Predicated region
      $region17: #{up_mix_ffn.1} parent=11 // pred_check
        %p209 = pneg %p81
      $region18: #{up_mix_ffn.1} parent=11 // pred_check_branch
        %211 = sbr.rel (%p209) target = $region20
      $region19: #{up_mix_ffn.1} parent=11 // pred_region
        _
      $region20: #{up_mix_ffn.1} parent=11 // pred_fallthru
        _
      // Predicated region
      $region21: #{up_mix_ffn.1} parent=11 // pred_check
        %p212 = pneg %p102
      $region22: #{up_mix_ffn.1} parent=11 // pred_check_branch
        %214 = sbr.rel (%p212) target = $region24
      $region23: #{up_mix_ffn.1} parent=11 // pred_region
        _
      $region24: #{up_mix_ffn.1} parent=11 // pred_fallthru
        _
      // Predicated region
      $region25: #{up_mix_ffn.1} parent=11 // pred_check
        %p215 = pneg %p123
      $region26: #{up_mix_ffn.1} parent=11 // pred_check_branch
        %217 = sbr.rel (%p215) target = $region28
      $region27: #{up_mix_ffn.1} parent=11 // pred_region
        _
      $region28: #{up_mix_ffn.1} parent=11 // pred_fallthru
        _
      // Predicated region
      $region29: #{up_mix_ffn.1} parent=11 // pred_check
        %p218 = pneg %p144
      $region30: #{up_mix_ffn.1} parent=11 // pred_check_branch
        %220 = sbr.rel (%p218) target = $region32
      $region31: #{up_mix_ffn.1} parent=11 // pred_region
        _
      $region32: #{up_mix_ffn.1} parent=11 // pred_fallthru
        _
      // Predicated region
      $region33: #{up_mix_ffn.1} parent=11 // pred_check
        %p221 = pneg %p165
      $region34: #{up_mix_ffn.1} parent=11 // pred_check_branch
        %223 = sbr.rel (%p221) target = $region36
      $region35: #{up_mix_ffn.1} parent=11 // pred_region
        _
      $region36: #{up_mix_ffn.1} parent=11 // pred_fallthru
        _
    $region12: #{up_mix_ffn.1} parent=5 // pred_fallthru
      _
    %p224 = scmp.lt.s32.totalorder %s13, 2
    // Predicated region
    $region37: #{up_mix_ffn.1} parent=5 // pred_check
      %p225 = pneg %p224
    $region38: #{up_mix_ffn.1} parent=5 // pred_check_branch
      %227 = sbr.rel (%p225) target = $region40
    $region39: #{up_mix_ffn.1} parent=5 // pred_region
      // Predicated region
      $region41: #{up_mix_ffn.1} parent=39 // pred_check
        %p228 = pneg %p33
      $region42: #{up_mix_ffn.1} parent=39 // pred_check_branch
        %230 = sbr.rel (%p228) target = $region44
      $region43: #{up_mix_ffn.1} parent=39 // pred_region
        %p231 = scmp.lt.s32.totalorder %s13, 1
        %s232 = scalar_select %p231, %s13, 1
        %s233 = smul.addr %s232, 8
        %s234 = smul.addr %s233, 8
        %s235 = scalar_lea.vmem %s0, %s234
      $region44: #{up_mix_ffn.1} parent=39 // pred_fallthru
        _
    $region40: #{up_mix_ffn.1} parent=5 // pred_fallthru
      _
    %p236 = scmp.le.s32.totalorder 1, %s13
    %p237 = scmp.lt.s32.totalorder %s13, 3
    %p238 = pnand %p236, %p237
    %p239 = pneg %p238
    // Predicated region
    $region45: #{up_mix_ffn.1} parent=5 // pred_check
      _
    $region46: #{up_mix_ffn.1} parent=5 // pred_check_branch
      %241 = sbr.rel (%p238) target = $region48
    $region47: #{up_mix_ffn.1} parent=5 // pred_region
      %s242 = ssub.s32 %s13, 1
      %p243 = scmp.lt.s32.totalorder %s18, 1
      %s244 = scalar_select %p243, %s18, 1
      %s245 = smul.addr %s244, 8
      %s246 = smul.addr %s245, 8
      %s247 = scalar_lea.vmem %s0, %s246
      %p248 = pneg %p39
      %p249 = pneg %p36
      %p250 = pneg %p60
      %p251 = pneg %p57
      %p252 = pneg %p81
      %p253 = pneg %p78
      %p254 = pneg %p102
      %p255 = pneg %p99
      %p256 = pneg %p123
      %p257 = pneg %p120
      %p258 = pneg %p144
      %p259 = pneg %p141
      %p260 = pneg %p165
      %p261 = pneg %p162
      %p262 = pneg %p191
      %p263 = pneg %p188
      %p264 = scmp.lt.s32.totalorder %s18, 1
      %s265 = scalar_select %p264, %s18, 1
      %s266 = smul.addr %s265, 32
      %s267 = smul.addr %s266, 8
      %s268 = scalar_lea.vmem %s7, %s267
      %p269 = scmp.lt.s32.totalorder %s18, 1
      %s270 = scalar_select %p269, %s18, 1
      %s271 = smul.addr %s270, 8
      %s272 = smul.addr %s271, 8
      %s273 = scalar_lea.vmem %s0, %s272
      %p274 = scmp.lt.s32.totalorder %s18, 1
      %s275 = scalar_select %p274, %s18, 1
      %s276 = smul.addr %s275, 32
      %s277 = smul.addr %s276, 8
      %s278 = scalar_lea.vmem %s7, %s277
      %v280 = vld [vmem:[%s273] sm:$0xff]
      %v281 = vld [vmem:[%s273 + $0x8] sm:$0xff]
      %v282 = vld [vmem:[%s273 + $0x10] sm:$0xff]
      %v283 = vld [vmem:[%s273 + $0x18] sm:$0xff]
      %v284 = vld [vmem:[%s273 + $0x20] sm:$0xff]
      %v285 = vld [vmem:[%s273 + $0x28] sm:$0xff]
      %v286 = vld [vmem:[%s273 + $0x30] sm:$0xff]
      %v287 = vld [vmem:[%s273 + $0x38] sm:$0xff]
      %v288 = vpack.c.bf16 %v281, %v280
      %v289 = vpack.c.bf16 %v283, %v282
      %v290 = vpack.c.bf16 %v285, %v284
      %v291 = vpack.c.bf16 %v287, %v286
      %v292 = vld [vmem:[%s1] sm:$0xf]
      %v293 = vld [vmem:[%s1 + $0x4] sm:$0xf]
      %v294 = vld [vmem:[%s1 + $0x8] sm:$0xf]
      %v295 = vld [vmem:[%s1 + $0xc] sm:$0xf]
      %v296 = vld [vmem:[%s2] sm:$0x1]
      %v298 = vlaneseq
      %v299 = vshrl.u32 %v298, 7
      %v300 = vsub.s32 0, %v299
      %v301 = vrot.slane %v296, %v300
      %v307 = vunpack.c.l.b16 %v292
      %v308 = vunpack.c.l.b16 %v293
      %v309 = vunpack.c.l.b16 %v294
      %v310 = vunpack.c.l.b16 %v295
      %v311 = vpack.c.b16 %v308, %v307
      %v312 = vpack.c.b16 %v310, %v309
      %vm315 = vcmask 261120
      %v317 = vsel %vm315, %v288, 0
      %v320 = vsel %vm315, %v289, 0
      %v323 = vsel %vm315, %v290, 0
      %v326 = vsel %vm315, %v291, 0
      %328 = vmatprep.subr.bf16.mxu0 0
      %329 = vmatpush1.bf16.msra.mxu0 %v311
      %330 = vmatprep.subr.bf16.mxu0 0
      %331 = vmatpush1.bf16.msra.mxu0 %v312
      %332 = vmatprep.subr.bf16.mxu0 0
      %333 = vmatpush1.bf16.msra.mxu0 0
      %334 = vmatprep.subr.bf16.mxu0 0
      %335 = vmatpush1.bf16.msra.mxu0 0
      %336 = vmatprep.subr.bf16.mxu0 0
      %337 = vmatpush1.bf16.msra.mxu0 0
      %338 = vmatprep.subr.bf16.mxu0 0
      %339 = vmatpush1.bf16.msra.mxu0 0
      %340 = vmatprep.subr.bf16.mxu0 0
      %341 = vmatpush1.bf16.msra.mxu0 0
      %342 = vmatprep.subr.bf16.mxu0 0
      %343 = vmatpush1.bf16.msra.mxu0 0
      %344 = vmatprep.subr.bf16.mxu0 0
      %345 = vmatpush1.bf16.msra.mxu0 0
      %346 = vmatprep.subr.bf16.mxu0 0
      %347 = vmatpush1.bf16.msra.mxu0 0
      %348 = vmatprep.subr.bf16.mxu0 0
      %349 = vmatpush1.bf16.msra.mxu0 0
      %350 = vmatprep.subr.bf16.mxu0 0
      %351 = vmatpush1.bf16.msra.mxu0 0
      %352 = vmatprep.subr.bf16.mxu0 0
      %353 = vmatpush1.bf16.msra.mxu0 0
      %354 = vmatprep.subr.bf16.mxu0 0
      %355 = vmatpush1.bf16.msra.mxu0 0
      %356 = vmatprep.subr.bf16.mxu0 0
      %357 = vmatpush1.bf16.msra.mxu0 0
      %358 = vmatprep.subr.bf16.mxu0 0
      %359 = vmatpush1.bf16.msra.mxu0 0
      %360 = vmatprep.mubr.bf16.mxu0 0
      %361 = vmatmul.mubr.bf16.gmra.mrb[0].mxu0 %v317
      %v362 = vpop.f32.mrb[0].mxu0
      %v363 = vadd.f32 %v301, %v362
      %v364 = vpop.f32.mrb[0].mxu0
      %v365 = vpop.f32.mrb[0].mxu0
      %v366 = vadd.f32 %v301, %v365
      %v367 = vpop.f32.mrb[0].mxu0
      %368 = vmatprep.mubr.bf16.mxu0 0
      %369 = vmatmul.mubr.bf16.gmra.mrb[0].mxu0 %v320
      %v370 = vpop.f32.mrb[0].mxu0
      %v371 = vadd.f32 %v301, %v370
      %v372 = vpop.f32.mrb[0].mxu0
      %v373 = vpop.f32.mrb[0].mxu0
      %v374 = vadd.f32 %v301, %v373
      %v375 = vpop.f32.mrb[0].mxu0
      %376 = vmatprep.mubr.bf16.mxu0 0
      %377 = vmatmul.mubr.bf16.gmra.mrb[0].mxu0 %v323
      %v378 = vpop.f32.mrb[0].mxu0
      %v379 = vadd.f32 %v301, %v378
      %v380 = vpop.f32.mrb[0].mxu0
      %v381 = vpop.f32.mrb[0].mxu0
      %v382 = vadd.f32 %v301, %v381
      %v383 = vpop.f32.mrb[0].mxu0
      %384 = vmatprep.mubr.bf16.mxu0 0
      %385 = vmatmul.mubr.bf16.gmra.mrb[0].mxu0 %v326
      %v386 = vpop.f32.mrb[0].mxu0
      %v387 = vadd.f32 %v301, %v386
      %v388 = vpop.f32.mrb[0].mxu0
      %v389 = vpop.f32.mrb[0].mxu0
      %v390 = vadd.f32 %v301, %v389
      %v391 = vpop.f32.mrb[0].mxu0
      %392 = vdwg.mxu0
      %s393 = scalar_lea.vmem [#allocation2], 16
      %394 = vst [vmem:[%s393 + $0x1] sm:$0xff] %v363
      %395 = vst [vmem:[%s393 + $0x11] sm:$0xff] %v366
      %396 = vst [vmem:[%s393 + $0x21] sm:$0xff] %v371
      %397 = vst [vmem:[%s393 + $0x31] sm:$0xff] %v374
      %398 = vst [vmem:[%s393 + $0x41] sm:$0xff] %v379
      %399 = vst [vmem:[%s393 + $0x51] sm:$0xff] %v382
      %400 = vst [vmem:[%s393 + $0x61] sm:$0xff] %v387
      %401 = vst [vmem:[%s393 + $0x71] sm:$0xff] %v390
      %402 = vst [vmem:[#allocation2] sm:$0xff] 0.0
      %403 = vst [vmem:[#allocation2 + $0x8] sm:$0x3] 0.0
      %s404 = scalar_lea.vmem [#allocation2], 144
      %405 = vst [vmem:[%s404] sm:$0xff] 0.0
      %406 = vst [vmem:[%s404 + $0x8] sm:$0x3] 0.0
      %407 = vst [vmem:[#allocation2] sm:$0x1] 0.0
      %408 = vst [vmem:[#allocation2 + $0x10] sm:$0x1] 0.0
      %409 = vst [vmem:[#allocation2 + $0x20] sm:$0x1] 0.0
      %410 = vst [vmem:[#allocation2 + $0x30] sm:$0x1] 0.0
      %411 = vst [vmem:[#allocation2 + $0x40] sm:$0x1] 0.0
      %412 = vst [vmem:[#allocation2 + $0x50] sm:$0x1] 0.0
      %413 = vst [vmem:[#allocation2 + $0x60] sm:$0x1] 0.0
      %414 = vst [vmem:[#allocation2 + $0x70] sm:$0x1] 0.0
      %415 = vst [vmem:[#allocation2 + $0x80] sm:$0x1] 0.0
      %416 = vst [vmem:[#allocation2 + $0x90] sm:$0x1] 0.0
      %417 = vst [vmem:[#allocation2 + $0x9] sm:$0x1] 0.0
      %418 = vst [vmem:[#allocation2 + $0x19] sm:$0x1] 0.0
      %419 = vst [vmem:[#allocation2 + $0x29] sm:$0x1] 0.0
      %420 = vst [vmem:[#allocation2 + $0x39] sm:$0x1] 0.0
      %421 = vst [vmem:[#allocation2 + $0x49] sm:$0x1] 0.0
      %422 = vst [vmem:[#allocation2 + $0x59] sm:$0x1] 0.0
      %423 = vst [vmem:[#allocation2 + $0x69] sm:$0x1] 0.0
      %424 = vst [vmem:[#allocation2 + $0x79] sm:$0x1] 0.0
      %425 = vst [vmem:[#allocation2 + $0x89] sm:$0x1] 0.0
      %426 = vst [vmem:[#allocation2 + $0x99] sm:$0x1] 0.0
      %v427 = vld [vmem:[%s3] sm:$0xff]
      %v428 = vld [vmem:[%s3 + $0x8] sm:$0xff]
      %v429 = vld [vmem:[%s4] sm:$0x1]
      %v430 = vlaneseq
      %v431 = vshrl.u32 %v430, 7
      %v432 = vadd.s32 %v431, 8
      %vm433 = vcmp.lt.s32.totalorder %v431, 0
      %v434 = vsub.s32 0, %v431
      %v435 = vsel %vm433, %v434, %v431
      %v436 = vshrl.u32 %v435, 1
      %v437 = vand.u32 %v435, 1
      %v438 = vsub.s32 0, %v437
      %v439 = vsel %vm433, %v438, %v437
      %vm440 = vcmp.lt.s32.totalorder %v432, 0
      %v441 = vsub.s32 0, %v432
      %v442 = vsel %vm440, %v441, %v432
      %v443 = vshrl.u32 %v442, 1
      %v444 = vand.u32 %v442, 1
      %v445 = vsub.s32 0, %v444
      %v446 = vsel %vm440, %v445, %v444
      %vm447 = vcmp.ne.s32.totalorder %v439, 0
      %vm448 = vcmp.ne.s32.totalorder %v446, 0
      %vm449 = vcmp.lt.s32.totalorder %v439, 0
      %vm450 = vcmp.lt.s32.totalorder %v446, 0
      %vm451 = vmand %vm449, %vm447
      %vm452 = vmand %vm450, %vm448
      %v453 = vadd.s32 %v439, 2
      %v454 = vadd.s32 %v446, 2
      %v455 = vsel %vm451, %v453, %v439
      %v456 = vsel %vm452, %v454, %v446
      %vm457 = vcmp.eq.s32.totalorder %v455, 0
      %vm458 = vcmp.eq.s32.totalorder %v456, 0
      %v459 = vld [vmem:[#allocation2] sm:$0xff]
      %v460 = vld [vmem:[#allocation2 + $0x10] sm:$0xff]
      %v461 = vld [vmem:[#allocation2 + $0x20] sm:$0xff]
      %v462 = vld [vmem:[#allocation2 + $0x30] sm:$0xff]
      %v463 = vld [vmem:[#allocation2 + $0x40] sm:$0xff]
      %v464 = vld [vmem:[#allocation2 + $0x50] sm:$0xff]
      %v465 = vld [vmem:[#allocation2 + $0x60] sm:$0xff]
      %v466 = vld [vmem:[#allocation2 + $0x70] sm:$0xff]
      %v467 = vlaneseq
      %v468 = vshrl.u32 %v467, 7
      %v469 = vsub.s32 0, %v468
      %v470 = vrot.slane %v427, %v469
      %v471 = vmul.f32 %v459, %v470
      %v472 = vmul.f32 %v460, %v470
      %v473 = vmul.f32 %v461, %v470
      %v474 = vmul.f32 %v462, %v470
      %v475 = vmul.f32 %v463, %v470
      %v476 = vmul.f32 %v464, %v470
      %v477 = vmul.f32 %v465, %v470
      %v478 = vmul.f32 %v466, %v470
      %v480 = vlaneseq
      %v481 = vshrl.u32 %v480, 7
      %v482 = vsub.s32 0, %v481
      %v483 = vrot.slane %v429, %v482
      %v485 = vadd.f32 %v471, %v483
      %v486 = vadd.f32 %v472, %v483
      %v487 = vadd.f32 %v473, %v483
      %v488 = vadd.f32 %v474, %v483
      %v489 = vadd.f32 %v475, %v483
      %v490 = vadd.f32 %v476, %v483
      %v491 = vadd.f32 %v477, %v483
      %v492 = vadd.f32 %v478, %v483
      %v493 = vld [vmem:[#allocation2 + $0x1] sm:$0xff]
      %v494 = vld [vmem:[#allocation2 + $0x11] sm:$0xff]
      %v495 = vld [vmem:[#allocation2 + $0x21] sm:$0xff]
      %v496 = vld [vmem:[#allocation2 + $0x31] sm:$0xff]
      %v497 = vld [vmem:[#allocation2 + $0x41] sm:$0xff]
      %v498 = vld [vmem:[#allocation2 + $0x51] sm:$0xff]
      %v499 = vld [vmem:[#allocation2 + $0x61] sm:$0xff]
      %v500 = vld [vmem:[#allocation2 + $0x71] sm:$0xff]
      %v501 = vlaneseq
      %v502 = vshrl.u32 %v501, 7
      %v503 = vsub.s32 1, %v502
      %v504 = vrot.slane %v427, %v503
      %v505 = vmul.f32 %v493, %v504
      %v506 = vmul.f32 %v494, %v504
      %v507 = vmul.f32 %v495, %v504
      %v508 = vmul.f32 %v496, %v504
      %v509 = vmul.f32 %v497, %v504
      %v510 = vmul.f32 %v498, %v504
      %v511 = vmul.f32 %v499, %v504
      %v512 = vmul.f32 %v500, %v504
      %v513 = vadd.f32 %v485, %v505
      %v514 = vadd.f32 %v486, %v506
      %v515 = vadd.f32 %v487, %v507
      %v516 = vadd.f32 %v488, %v508
      %v517 = vadd.f32 %v489, %v509
      %v518 = vadd.f32 %v490, %v510
      %v519 = vadd.f32 %v491, %v511
      %v520 = vadd.f32 %v492, %v512
      %v521 = vld [vmem:[%s393] sm:$0xff]
      %v522 = vld [vmem:[%s393 + $0x10] sm:$0xff]
      %v523 = vld [vmem:[%s393 + $0x20] sm:$0xff]
      %v524 = vld [vmem:[%s393 + $0x30] sm:$0xff]
      %v525 = vld [vmem:[%s393 + $0x40] sm:$0xff]
      %v526 = vld [vmem:[%s393 + $0x50] sm:$0xff]
      %v527 = vld [vmem:[%s393 + $0x60] sm:$0xff]
      %v528 = vld [vmem:[%s393 + $0x70] sm:$0xff]
      %v529 = vlaneseq
      %v530 = vshrl.u32 %v529, 7
      %v531 = vsub.s32 2, %v530
      %v532 = vrot.slane %v427, %v531
      %v533 = vmul.f32 %v521, %v532
      %v534 = vmul.f32 %v522, %v532
      %v535 = vmul.f32 %v523, %v532
      %v536 = vmul.f32 %v524, %v532
      %v537 = vmul.f32 %v525, %v532
      %v538 = vmul.f32 %v526, %v532
      %v539 = vmul.f32 %v527, %v532
      %v540 = vmul.f32 %v528, %v532
      %v541 = vadd.f32 %v513, %v533
      %v542 = vadd.f32 %v514, %v534
      %v543 = vadd.f32 %v515, %v535
      %v544 = vadd.f32 %v516, %v536
      %v545 = vadd.f32 %v517, %v537
      %v546 = vadd.f32 %v518, %v538
      %v547 = vadd.f32 %v519, %v539
      %v548 = vadd.f32 %v520, %v540
      %v549 = vld [vmem:[%s393 + $0x1] sm:$0xff]
      %v550 = vld [vmem:[%s393 + $0x11] sm:$0xff]
      %v551 = vld [vmem:[%s393 + $0x21] sm:$0xff]
      %v552 = vld [vmem:[%s393 + $0x31] sm:$0xff]
      %v553 = vld [vmem:[%s393 + $0x41] sm:$0xff]
      %v554 = vld [vmem:[%s393 + $0x51] sm:$0xff]
      %v555 = vld [vmem:[%s393 + $0x61] sm:$0xff]
      %v556 = vld [vmem:[%s393 + $0x71] sm:$0xff]
      %v557 = vlaneseq
      %v558 = vshrl.u32 %v557, 7
      %v559 = vsub.s32 3, %v558
      %v560 = vrot.slane %v427, %v559
      %v561 = vmul.f32 %v549, %v560
      %v562 = vmul.f32 %v550, %v560
      %v563 = vmul.f32 %v551, %v560
      %v564 = vmul.f32 %v552, %v560
      %v565 = vmul.f32 %v553, %v560
      %v566 = vmul.f32 %v554, %v560
      %v567 = vmul.f32 %v555, %v560
      %v568 = vmul.f32 %v556, %v560
      %v569 = vadd.f32 %v541, %v561
      %v570 = vadd.f32 %v542, %v562
      %v571 = vadd.f32 %v543, %v563
      %v572 = vadd.f32 %v544, %v564
      %v573 = vadd.f32 %v545, %v565
      %v574 = vadd.f32 %v546, %v566
      %v575 = vadd.f32 %v547, %v567
      %v576 = vadd.f32 %v548, %v568
      %v577 = vmax.f32 %v569, 0.0
      %v578 = vmax.f32 %v570, 0.0
      %v579 = vmax.f32 %v571, 0.0
      %v580 = vmax.f32 %v572, 0.0
      %v581 = vmax.f32 %v573, 0.0
      %v582 = vmax.f32 %v574, 0.0
      %v583 = vmax.f32 %v575, 0.0
      %v584 = vmax.f32 %v576, 0.0
      %593 = vrot.lane.b32.xlu0 %v577, 64
      %v594 = vpop.permute.xlu0 %593
      %595 = vrot.lane.b32.xlu0 %v578, 64
      %v596 = vpop.permute.xlu0 %595
      %597 = vrot.lane.b32.xlu0 %v579, 64
      %v598 = vpop.permute.xlu0 %597
      %599 = vrot.lane.b32.xlu0 %v580, 64
      %v600 = vpop.permute.xlu0 %599
      %601 = vrot.lane.b32.xlu0 %v581, 64
      %v602 = vpop.permute.xlu0 %601
      %603 = vrot.lane.b32.xlu0 %v582, 64
      %v604 = vpop.permute.xlu0 %603
      %605 = vrot.lane.b32.xlu0 %v583, 64
      %v606 = vpop.permute.xlu0 %605
      %607 = vrot.lane.b32.xlu0 %v584, 64
      %v608 = vpop.permute.xlu0 %607
      %v617 = vmul.f32 %v569, %v594
      %v618 = vmul.f32 %v570, %v596
      %v619 = vmul.f32 %v571, %v598
      %v620 = vmul.f32 %v572, %v600
      %v621 = vmul.f32 %v573, %v602
      %v622 = vmul.f32 %v574, %v604
      %v623 = vmul.f32 %v575, %v606
      %v624 = vmul.f32 %v576, %v608
      %v625 = vlaneseq
      %v626 = vshrl.u32 %v625, 7
      %v627 = vsub.s32 4, %v626
      %v628 = vrot.slane %v427, %v627
      %v629 = vmul.f32 %v493, %v628
      %v630 = vmul.f32 %v494, %v628
      %v631 = vmul.f32 %v495, %v628
      %v632 = vmul.f32 %v496, %v628
      %v633 = vmul.f32 %v497, %v628
      %v634 = vmul.f32 %v498, %v628
      %v635 = vmul.f32 %v499, %v628
      %v636 = vmul.f32 %v500, %v628
      %v637 = vadd.f32 %v629, %v483
      %v638 = vadd.f32 %v630, %v483
      %v639 = vadd.f32 %v631, %v483
      %v640 = vadd.f32 %v632, %v483
      %v641 = vadd.f32 %v633, %v483
      %v642 = vadd.f32 %v634, %v483
      %v643 = vadd.f32 %v635, %v483
      %v644 = vadd.f32 %v636, %v483
      %v645 = vld [vmem:[#allocation2 + $0x2] sm:$0xff]
      %v646 = vld [vmem:[#allocation2 + $0x12] sm:$0xff]
      %v647 = vld [vmem:[#allocation2 + $0x22] sm:$0xff]
      %v648 = vld [vmem:[#allocation2 + $0x32] sm:$0xff]
      %v649 = vld [vmem:[#allocation2 + $0x42] sm:$0xff]
      %v650 = vld [vmem:[#allocation2 + $0x52] sm:$0xff]
      %v651 = vld [vmem:[#allocation2 + $0x62] sm:$0xff]
      %v652 = vld [vmem:[#allocation2 + $0x72] sm:$0xff]
      %v653 = vlaneseq
      %v654 = vshrl.u32 %v653, 7
      %v655 = vsub.s32 5, %v654
      %v656 = vrot.slane %v427, %v655
      %v657 = vmul.f32 %v645, %v656
      %v658 = vmul.f32 %v646, %v656
      %v659 = vmul.f32 %v647, %v656
      %v660 = vmul.f32 %v648, %v656
      %v661 = vmul.f32 %v649, %v656
      %v662 = vmul.f32 %v650, %v656
      %v663 = vmul.f32 %v651, %v656
      %v664 = vmul.f32 %v652, %v656
      %v665 = vadd.f32 %v637, %v657
      %v666 = vadd.f32 %v638, %v658
      %v667 = vadd.f32 %v639, %v659
      %v668 = vadd.f32 %v640, %v660
      %v669 = vadd.f32 %v641, %v661
      %v670 = vadd.f32 %v642, %v662
      %v671 = vadd.f32 %v643, %v663
      %v672 = vadd.f32 %v644, %v664
      %v673 = vlaneseq
      %v674 = vshrl.u32 %v673, 7
      %v675 = vsub.s32 6, %v674
      %v676 = vrot.slane %v427, %v675
      %v677 = vmul.f32 %v549, %v676
      %v678 = vmul.f32 %v550, %v676
      %v679 = vmul.f32 %v551, %v676
      %v680 = vmul.f32 %v552, %v676
      %v681 = vmul.f32 %v553, %v676
      %v682 = vmul.f32 %v554, %v676
      %v683 = vmul.f32 %v555, %v676
      %v684 = vmul.f32 %v556, %v676
      %v685 = vadd.f32 %v665, %v677
      %v686 = vadd.f32 %v666, %v678
      %v687 = vadd.f32 %v667, %v679
      %v688 = vadd.f32 %v668, %v680
      %v689 = vadd.f32 %v669, %v681
      %v690 = vadd.f32 %v670, %v682
      %v691 = vadd.f32 %v671, %v683
      %v692 = vadd.f32 %v672, %v684
      %v693 = vld [vmem:[%s393 + $0x2] sm:$0xff]
      %v694 = vld [vmem:[%s393 + $0x12] sm:$0xff]
      %v695 = vld [vmem:[%s393 + $0x22] sm:$0xff]
      %v696 = vld [vmem:[%s393 + $0x32] sm:$0xff]
      %v697 = vld [vmem:[%s393 + $0x42] sm:$0xff]
      %v698 = vld [vmem:[%s393 + $0x52] sm:$0xff]
      %v699 = vld [vmem:[%s393 + $0x62] sm:$0xff]
      %v700 = vld [vmem:[%s393 + $0x72] sm:$0xff]
      %v701 = vlaneseq
      %v702 = vshrl.u32 %v701, 7
      %v703 = vsub.s32 7, %v702
      %v704 = vrot.slane %v427, %v703
      %v705 = vmul.f32 %v693, %v704
      %v706 = vmul.f32 %v694, %v704
      %v707 = vmul.f32 %v695, %v704
      %v708 = vmul.f32 %v696, %v704
      %v709 = vmul.f32 %v697, %v704
      %v710 = vmul.f32 %v698, %v704
      %v711 = vmul.f32 %v699, %v704
      %v712 = vmul.f32 %v700, %v704
      %v713 = vadd.f32 %v685, %v705
      %v714 = vadd.f32 %v686, %v706
      %v715 = vadd.f32 %v687, %v707
      %v716 = vadd.f32 %v688, %v708
      %v717 = vadd.f32 %v689, %v709
      %v718 = vadd.f32 %v690, %v710
      %v719 = vadd.f32 %v691, %v711
      %v720 = vadd.f32 %v692, %v712
      %v721 = vmax.f32 %v713, 0.0
      %v722 = vmax.f32 %v714, 0.0
      %v723 = vmax.f32 %v715, 0.0
      %v724 = vmax.f32 %v716, 0.0
      %v725 = vmax.f32 %v717, 0.0
      %v726 = vmax.f32 %v718, 0.0
      %v727 = vmax.f32 %v719, 0.0
      %v728 = vmax.f32 %v720, 0.0
      %737 = vrot.lane.b32.xlu0 %v721, 64
      %v738 = vpop.permute.xlu0 %737
      %739 = vrot.lane.b32.xlu0 %v722, 64
      %v740 = vpop.permute.xlu0 %739
      %741 = vrot.lane.b32.xlu0 %v723, 64
      %v742 = vpop.permute.xlu0 %741
      %743 = vrot.lane.b32.xlu0 %v724, 64
      %v744 = vpop.permute.xlu0 %743
      %745 = vrot.lane.b32.xlu0 %v725, 64
      %v746 = vpop.permute.xlu0 %745
      %747 = vrot.lane.b32.xlu0 %v726, 64
      %v748 = vpop.permute.xlu0 %747
      %749 = vrot.lane.b32.xlu0 %v727, 64
      %v750 = vpop.permute.xlu0 %749
      %751 = vrot.lane.b32.xlu0 %v728, 64
      %v752 = vpop.permute.xlu0 %751
      %v761 = vmul.f32 %v713, %v738
      %v762 = vmul.f32 %v714, %v740
      %v763 = vmul.f32 %v715, %v742
      %v764 = vmul.f32 %v716, %v744
      %v765 = vmul.f32 %v717, %v746
      %v766 = vmul.f32 %v718, %v748
      %v767 = vmul.f32 %v719, %v750
      %v768 = vmul.f32 %v720, %v752
      %v777 = vcombine.high %v617, %v617
      %v779 = vunpack.c.l.s4 1966171168
      %v780 = vunpack.c.0.s8 %v779
      %v781 = vlaneseq
      %v782 = vshrl.u32 %v781, 7
      %v783 = vsub.s32 %v780, %v782
      %v784 = vrot.slane %v617, %v783
      %v786 = vunpack.c.l.s4 1966171168
      %v787 = vunpack.c.0.s8 %v786
      %v788 = vlaneseq
      %v789 = vshrl.u32 %v788, 7
      %v790 = vsub.s32 %v787, %v789
      %v791 = vrot.slane %v777, %v790
      %v792 = vcombine.high %v784, %v784
      %v793 = vcombine.high %v791, %v791
      %v795 = vunpack.c.l.s4 1966171168
      %v796 = vunpack.c.0.s8 %v795
      %v797 = vlaneseq
      %v798 = vshrl.u32 %v797, 7
      %v799 = vsub.s32 %v796, %v798
      %v800 = vrot.slane %v784, %v799
      %v802 = vunpack.c.l.s4 1966171168
      %v803 = vunpack.c.0.s8 %v802
      %v804 = vlaneseq
      %v805 = vshrl.u32 %v804, 7
      %v806 = vsub.s32 %v803, %v805
      %v807 = vrot.slane %v791, %v806
      %v809 = vunpack.c.l.s4 1966171168
      %v810 = vunpack.c.0.s8 %v809
      %v811 = vlaneseq
      %v812 = vshrl.u32 %v811, 7
      %v813 = vsub.s32 %v810, %v812
      %v814 = vrot.slane %v792, %v813
      %v816 = vunpack.c.l.s4 1966171168
      %v817 = vunpack.c.0.s8 %v816
      %v818 = vlaneseq
      %v819 = vshrl.u32 %v818, 7
      %v820 = vsub.s32 %v817, %v819
      %v821 = vrot.slane %v793, %v820
      %v822 = vcombine.high %v800, %v800
      %v823 = vcombine.high %v807, %v807
      %v824 = vcombine.high %v814, %v814
      %v825 = vcombine.high %v821, %v821
      %v826 = vcombine.high %v618, %v618
      %v828 = vunpack.c.l.s4 1966171168
      %v829 = vunpack.c.0.s8 %v828
      %v830 = vlaneseq
      %v831 = vshrl.u32 %v830, 7
      %v832 = vsub.s32 %v829, %v831
      %v833 = vrot.slane %v618, %v832
      %v835 = vunpack.c.l.s4 1966171168
      %v836 = vunpack.c.0.s8 %v835
      %v837 = vlaneseq
      %v838 = vshrl.u32 %v837, 7
      %v839 = vsub.s32 %v836, %v838
      %v840 = vrot.slane %v826, %v839
      %v841 = vcombine.high %v833, %v833
      %v842 = vcombine.high %v840, %v840
      %v844 = vunpack.c.l.s4 1966171168
      %v845 = vunpack.c.0.s8 %v844
      %v846 = vlaneseq
      %v847 = vshrl.u32 %v846, 7
      %v848 = vsub.s32 %v845, %v847
      %v849 = vrot.slane %v833, %v848
      %v851 = vunpack.c.l.s4 1966171168
      %v852 = vunpack.c.0.s8 %v851
      %v853 = vlaneseq
      %v854 = vshrl.u32 %v853, 7
      %v855 = vsub.s32 %v852, %v854
      %v856 = vrot.slane %v840, %v855
      %v858 = vunpack.c.l.s4 1966171168
      %v859 = vunpack.c.0.s8 %v858
      %v860 = vlaneseq
      %v861 = vshrl.u32 %v860, 7
      %v862 = vsub.s32 %v859, %v861
      %v863 = vrot.slane %v841, %v862
      %v865 = vunpack.c.l.s4 1966171168
      %v866 = vunpack.c.0.s8 %v865
      %v867 = vlaneseq
      %v868 = vshrl.u32 %v867, 7
      %v869 = vsub.s32 %v866, %v868
      %v870 = vrot.slane %v842, %v869
      %v871 = vcombine.high %v849, %v849
      %v872 = vcombine.high %v856, %v856
      %v873 = vcombine.high %v863, %v863
      %v874 = vcombine.high %v870, %v870
      %v875 = vcombine.high %v619, %v619
      %v877 = vunpack.c.l.s4 1966171168
      %v878 = vunpack.c.0.s8 %v877
      %v879 = vlaneseq
      %v880 = vshrl.u32 %v879, 7
      %v881 = vsub.s32 %v878, %v880
      %v882 = vrot.slane %v619, %v881
      %v884 = vunpack.c.l.s4 1966171168
      %v885 = vunpack.c.0.s8 %v884
      %v886 = vlaneseq
      %v887 = vshrl.u32 %v886, 7
      %v888 = vsub.s32 %v885, %v887
      %v889 = vrot.slane %v875, %v888
      %v890 = vcombine.high %v882, %v882
      %v891 = vcombine.high %v889, %v889
      %v893 = vunpack.c.l.s4 1966171168
      %v894 = vunpack.c.0.s8 %v893
      %v895 = vlaneseq
      %v896 = vshrl.u32 %v895, 7
      %v897 = vsub.s32 %v894, %v896
      %v898 = vrot.slane %v882, %v897
      %v900 = vunpack.c.l.s4 1966171168
      %v901 = vunpack.c.0.s8 %v900
      %v902 = vlaneseq
      %v903 = vshrl.u32 %v902, 7
      %v904 = vsub.s32 %v901, %v903
      %v905 = vrot.slane %v889, %v904
      %v907 = vunpack.c.l.s4 1966171168
      %v908 = vunpack.c.0.s8 %v907
      %v909 = vlaneseq
      %v910 = vshrl.u32 %v909, 7
      %v911 = vsub.s32 %v908, %v910
      %v912 = vrot.slane %v890, %v911
      %v914 = vunpack.c.l.s4 1966171168
      %v915 = vunpack.c.0.s8 %v914
      %v916 = vlaneseq
      %v917 = vshrl.u32 %v916, 7
      %v918 = vsub.s32 %v915, %v917
      %v919 = vrot.slane %v891, %v918
      %v920 = vcombine.high %v898, %v898
      %v921 = vcombine.high %v905, %v905
      %v922 = vcombine.high %v912, %v912
      %v923 = vcombine.high %v919, %v919
      %v924 = vcombine.high %v620, %v620
      %v926 = vunpack.c.l.s4 1966171168
      %v927 = vunpack.c.0.s8 %v926
      %v928 = vlaneseq
      %v929 = vshrl.u32 %v928, 7
      %v930 = vsub.s32 %v927, %v929
      %v931 = vrot.slane %v620, %v930
      %v933 = vunpack.c.l.s4 1966171168
      %v934 = vunpack.c.0.s8 %v933
      %v935 = vlaneseq
      %v936 = vshrl.u32 %v935, 7
      %v937 = vsub.s32 %v934, %v936
      %v938 = vrot.slane %v924, %v937
      %v939 = vcombine.high %v931, %v931
      %v940 = vcombine.high %v938, %v938
      %v942 = vunpack.c.l.s4 1966171168
      %v943 = vunpack.c.0.s8 %v942
      %v944 = vlaneseq
      %v945 = vshrl.u32 %v944, 7
      %v946 = vsub.s32 %v943, %v945
      %v947 = vrot.slane %v931, %v946
      %v949 = vunpack.c.l.s4 1966171168
      %v950 = vunpack.c.0.s8 %v949
      %v951 = vlaneseq
      %v952 = vshrl.u32 %v951, 7
      %v953 = vsub.s32 %v950, %v952
      %v954 = vrot.slane %v938, %v953
      %v956 = vunpack.c.l.s4 1966171168
      %v957 = vunpack.c.0.s8 %v956
      %v958 = vlaneseq
      %v959 = vshrl.u32 %v958, 7
      %v960 = vsub.s32 %v957, %v959
      %v961 = vrot.slane %v939, %v960
      %v963 = vunpack.c.l.s4 1966171168
      %v964 = vunpack.c.0.s8 %v963
      %v965 = vlaneseq
      %v966 = vshrl.u32 %v965, 7
      %v967 = vsub.s32 %v964, %v966
      %v968 = vrot.slane %v940, %v967
      %v969 = vcombine.high %v947, %v947
      %v970 = vcombine.high %v954, %v954
      %v971 = vcombine.high %v961, %v961
      %v972 = vcombine.high %v968, %v968
      %v973 = vcombine.high %v621, %v621
      %v975 = vunpack.c.l.s4 1966171168
      %v976 = vunpack.c.0.s8 %v975
      %v977 = vlaneseq
      %v978 = vshrl.u32 %v977, 7
      %v979 = vsub.s32 %v976, %v978
      %v980 = vrot.slane %v621, %v979
      %v982 = vunpack.c.l.s4 1966171168
      %v983 = vunpack.c.0.s8 %v982
      %v984 = vlaneseq
      %v985 = vshrl.u32 %v984, 7
      %v986 = vsub.s32 %v983, %v985
      %v987 = vrot.slane %v973, %v986
      %v988 = vcombine.high %v980, %v980
      %v989 = vcombine.high %v987, %v987
      %v991 = vunpack.c.l.s4 1966171168
      %v992 = vunpack.c.0.s8 %v991
      %v993 = vlaneseq
      %v994 = vshrl.u32 %v993, 7
      %v995 = vsub.s32 %v992, %v994
      %v996 = vrot.slane %v980, %v995
      %v998 = vunpack.c.l.s4 1966171168
      %v999 = vunpack.c.0.s8 %v998
      %v1000 = vlaneseq
      %v1001 = vshrl.u32 %v1000, 7
      %v1002 = vsub.s32 %v999, %v1001
      %v1003 = vrot.slane %v987, %v1002
      %v1005 = vunpack.c.l.s4 1966171168
      %v1006 = vunpack.c.0.s8 %v1005
      %v1007 = vlaneseq
      %v1008 = vshrl.u32 %v1007, 7
      %v1009 = vsub.s32 %v1006, %v1008
      %v1010 = vrot.slane %v988, %v1009
      %v1012 = vunpack.c.l.s4 1966171168
      %v1013 = vunpack.c.0.s8 %v1012
      %v1014 = vlaneseq
      %v1015 = vshrl.u32 %v1014, 7
      %v1016 = vsub.s32 %v1013, %v1015
      %v1017 = vrot.slane %v989, %v1016
      %v1018 = vcombine.high %v996, %v996
      %v1019 = vcombine.high %v1003, %v1003
      %v1020 = vcombine.high %v1010, %v1010
      %v1021 = vcombine.high %v1017, %v1017
      %v1022 = vcombine.high %v622, %v622
      %v1024 = vunpack.c.l.s4 1966171168
      %v1025 = vunpack.c.0.s8 %v1024
      %v1026 = vlaneseq
      %v1027 = vshrl.u32 %v1026, 7
      %v1028 = vsub.s32 %v1025, %v1027
      %v1029 = vrot.slane %v622, %v1028
      %v1031 = vunpack.c.l.s4 1966171168
      %v1032 = vunpack.c.0.s8 %v1031
      %v1033 = vlaneseq
      %v1034 = vshrl.u32 %v1033, 7
      %v1035 = vsub.s32 %v1032, %v1034
      %v1036 = vrot.slane %v1022, %v1035
      %v1037 = vcombine.high %v1029, %v1029
      %v1038 = vcombine.high %v1036, %v1036
      %v1040 = vunpack.c.l.s4 1966171168
      %v1041 = vunpack.c.0.s8 %v1040
      %v1042 = vlaneseq
      %v1043 = vshrl.u32 %v1042, 7
      %v1044 = vsub.s32 %v1041, %v1043
      %v1045 = vrot.slane %v1029, %v1044
      %v1047 = vunpack.c.l.s4 1966171168
      %v1048 = vunpack.c.0.s8 %v1047
      %v1049 = vlaneseq
      %v1050 = vshrl.u32 %v1049, 7
      %v1051 = vsub.s32 %v1048, %v1050
      %v1052 = vrot.slane %v1036, %v1051
      %v1054 = vunpack.c.l.s4 1966171168
      %v1055 = vunpack.c.0.s8 %v1054
      %v1056 = vlaneseq
      %v1057 = vshrl.u32 %v1056, 7
      %v1058 = vsub.s32 %v1055, %v1057
      %v1059 = vrot.slane %v1037, %v1058
      %v1061 = vunpack.c.l.s4 1966171168
      %v1062 = vunpack.c.0.s8 %v1061
      %v1063 = vlaneseq
      %v1064 = vshrl.u32 %v1063, 7
      %v1065 = vsub.s32 %v1062, %v1064
      %v1066 = vrot.slane %v1038, %v1065
      %v1067 = vcombine.high %v1045, %v1045
      %v1068 = vcombine.high %v1052, %v1052
      %v1069 = vcombine.high %v1059, %v1059
      %v1070 = vcombine.high %v1066, %v1066
      %v1071 = vcombine.high %v623, %v623
      %v1073 = vunpack.c.l.s4 1966171168
      %v1074 = vunpack.c.0.s8 %v1073
      %v1075 = vlaneseq
      %v1076 = vshrl.u32 %v1075, 7
      %v1077 = vsub.s32 %v1074, %v1076
      %v1078 = vrot.slane %v623, %v1077
      %v1080 = vunpack.c.l.s4 1966171168
      %v1081 = vunpack.c.0.s8 %v1080
      %v1082 = vlaneseq
      %v1083 = vshrl.u32 %v1082, 7
      %v1084 = vsub.s32 %v1081, %v1083
      %v1085 = vrot.slane %v1071, %v1084
      %v1086 = vcombine.high %v1078, %v1078
      %v1087 = vcombine.high %v1085, %v1085
      %v1089 = vunpack.c.l.s4 1966171168
      %v1090 = vunpack.c.0.s8 %v1089
      %v1091 = vlaneseq
      %v1092 = vshrl.u32 %v1091, 7
      %v1093 = vsub.s32 %v1090, %v1092
      %v1094 = vrot.slane %v1078, %v1093
      %v1096 = vunpack.c.l.s4 1966171168
      %v1097 = vunpack.c.0.s8 %v1096
      %v1098 = vlaneseq
      %v1099 = vshrl.u32 %v1098, 7
      %v1100 = vsub.s32 %v1097, %v1099
      %v1101 = vrot.slane %v1085, %v1100
      %v1103 = vunpack.c.l.s4 1966171168
      %v1104 = vunpack.c.0.s8 %v1103
      %v1105 = vlaneseq
      %v1106 = vshrl.u32 %v1105, 7
      %v1107 = vsub.s32 %v1104, %v1106
      %v1108 = vrot.slane %v1086, %v1107
      %v1110 = vunpack.c.l.s4 1966171168
      %v1111 = vunpack.c.0.s8 %v1110
      %v1112 = vlaneseq
      %v1113 = vshrl.u32 %v1112, 7
      %v1114 = vsub.s32 %v1111, %v1113
      %v1115 = vrot.slane %v1087, %v1114
      %v1116 = vcombine.high %v1094, %v1094
      %v1117 = vcombine.high %v1101, %v1101
      %v1118 = vcombine.high %v1108, %v1108
      %v1119 = vcombine.high %v1115, %v1115
      %v1120 = vcombine.high %v624, %v624
      %v1122 = vunpack.c.l.s4 1966171168
      %v1123 = vunpack.c.0.s8 %v1122
      %v1124 = vlaneseq
      %v1125 = vshrl.u32 %v1124, 7
      %v1126 = vsub.s32 %v1123, %v1125
      %v1127 = vrot.slane %v624, %v1126
      %v1129 = vunpack.c.l.s4 1966171168
      %v1130 = vunpack.c.0.s8 %v1129
      %v1131 = vlaneseq
      %v1132 = vshrl.u32 %v1131, 7
      %v1133 = vsub.s32 %v1130, %v1132
      %v1134 = vrot.slane %v1120, %v1133
      %v1135 = vcombine.high %v1127, %v1127
      %v1136 = vcombine.high %v1134, %v1134
      %v1138 = vunpack.c.l.s4 1966171168
      %v1139 = vunpack.c.0.s8 %v1138
      %v1140 = vlaneseq
      %v1141 = vshrl.u32 %v1140, 7
      %v1142 = vsub.s32 %v1139, %v1141
      %v1143 = vrot.slane %v1127, %v1142
      %v1145 = vunpack.c.l.s4 1966171168
      %v1146 = vunpack.c.0.s8 %v1145
      %v1147 = vlaneseq
      %v1148 = vshrl.u32 %v1147, 7
      %v1149 = vsub.s32 %v1146, %v1148
      %v1150 = vrot.slane %v1134, %v1149
      %v1152 = vunpack.c.l.s4 1966171168
      %v1153 = vunpack.c.0.s8 %v1152
      %v1154 = vlaneseq
      %v1155 = vshrl.u32 %v1154, 7
      %v1156 = vsub.s32 %v1153, %v1155
      %v1157 = vrot.slane %v1135, %v1156
      %v1159 = vunpack.c.l.s4 1966171168
      %v1160 = vunpack.c.0.s8 %v1159
      %v1161 = vlaneseq
      %v1162 = vshrl.u32 %v1161, 7
      %v1163 = vsub.s32 %v1160, %v1162
      %v1164 = vrot.slane %v1136, %v1163
      %v1165 = vcombine.high %v1143, %v1143
      %v1166 = vcombine.high %v1150, %v1150
      %v1167 = vcombine.high %v1157, %v1157
      %v1168 = vcombine.high %v1164, %v1164
      %v1169 = vlaneseq
      %v1170 = vshrl.u32 %v1169, 7
      %v1171 = vsub.s32 0, %v1170
      %v1172 = vrot.slane %v800, %v1171
      %v1173 = vlaneseq
      %v1174 = vshrl.u32 %v1173, 7
      %v1175 = vsub.s32 0, %v1174
      %v1176 = vrot.slane %v814, %v1175
      %v1177 = vlaneseq
      %v1178 = vshrl.u32 %v1177, 7
      %v1179 = vsub.s32 0, %v1178
      %v1180 = vrot.slane %v822, %v1179
      %v1181 = vlaneseq
      %v1182 = vshrl.u32 %v1181, 7
      %v1183 = vsub.s32 0, %v1182
      %v1184 = vrot.slane %v824, %v1183
      %v1185 = vlaneseq
      %v1186 = vshrl.u32 %v1185, 7
      %v1187 = vsub.s32 0, %v1186
      %v1188 = vrot.slane %v807, %v1187
      %v1189 = vlaneseq
      %v1190 = vshrl.u32 %v1189, 7
      %v1191 = vsub.s32 0, %v1190
      %v1192 = vrot.slane %v821, %v1191
      %v1193 = vlaneseq
      %v1194 = vshrl.u32 %v1193, 7
      %v1195 = vsub.s32 0, %v1194
      %v1196 = vrot.slane %v823, %v1195
      %v1197 = vlaneseq
      %v1198 = vshrl.u32 %v1197, 7
      %v1199 = vsub.s32 0, %v1198
      %v1200 = vrot.slane %v825, %v1199
      %v1201 = vlaneseq
      %v1202 = vshrl.u32 %v1201, 7
      %v1203 = vsub.s32 0, %v1202
      %v1204 = vrot.slane %v849, %v1203
      %v1205 = vlaneseq
      %v1206 = vshrl.u32 %v1205, 7
      %v1207 = vsub.s32 0, %v1206
      %v1208 = vrot.slane %v863, %v1207
      %v1209 = vlaneseq
      %v1210 = vshrl.u32 %v1209, 7
      %v1211 = vsub.s32 0, %v1210
      %v1212 = vrot.slane %v871, %v1211
      %v1213 = vlaneseq
      %v1214 = vshrl.u32 %v1213, 7
      %v1215 = vsub.s32 0, %v1214
      %v1216 = vrot.slane %v873, %v1215
      %v1217 = vlaneseq
      %v1218 = vshrl.u32 %v1217, 7
      %v1219 = vsub.s32 0, %v1218
      %v1220 = vrot.slane %v856, %v1219
      %v1221 = vlaneseq
      %v1222 = vshrl.u32 %v1221, 7
      %v1223 = vsub.s32 0, %v1222
      %v1224 = vrot.slane %v870, %v1223
      %v1225 = vlaneseq
      %v1226 = vshrl.u32 %v1225, 7
      %v1227 = vsub.s32 0, %v1226
      %v1228 = vrot.slane %v872, %v1227
      %v1229 = vlaneseq
      %v1230 = vshrl.u32 %v1229, 7
      %v1231 = vsub.s32 0, %v1230
      %v1232 = vrot.slane %v874, %v1231
      %v1233 = vlaneseq
      %v1234 = vshrl.u32 %v1233, 7
      %v1235 = vsub.s32 0, %v1234
      %v1236 = vrot.slane %v898, %v1235
      %v1237 = vlaneseq
      %v1238 = vshrl.u32 %v1237, 7
      %v1239 = vsub.s32 0, %v1238
      %v1240 = vrot.slane %v912, %v1239
      %v1241 = vlaneseq
      %v1242 = vshrl.u32 %v1241, 7
      %v1243 = vsub.s32 0, %v1242
      %v1244 = vrot.slane %v920, %v1243
      %v1245 = vlaneseq
      %v1246 = vshrl.u32 %v1245, 7
      %v1247 = vsub.s32 0, %v1246
      %v1248 = vrot.slane %v922, %v1247
      %v1249 = vlaneseq
      %v1250 = vshrl.u32 %v1249, 7
      %v1251 = vsub.s32 0, %v1250
      %v1252 = vrot.slane %v905, %v1251
      %v1253 = vlaneseq
      %v1254 = vshrl.u32 %v1253, 7
      %v1255 = vsub.s32 0, %v1254
      %v1256 = vrot.slane %v919, %v1255
      %v1257 = vlaneseq
      %v1258 = vshrl.u32 %v1257, 7
      %v1259 = vsub.s32 0, %v1258
      %v1260 = vrot.slane %v921, %v1259
      %v1261 = vlaneseq
      %v1262 = vshrl.u32 %v1261, 7
      %v1263 = vsub.s32 0, %v1262
      %v1264 = vrot.slane %v923, %v1263
      %v1265 = vlaneseq
      %v1266 = vshrl.u32 %v1265, 7
      %v1267 = vsub.s32 0, %v1266
      %v1268 = vrot.slane %v947, %v1267
      %v1269 = vlaneseq
      %v1270 = vshrl.u32 %v1269, 7
      %v1271 = vsub.s32 0, %v1270
      %v1272 = vrot.slane %v961, %v1271
      %v1273 = vlaneseq
      %v1274 = vshrl.u32 %v1273, 7
      %v1275 = vsub.s32 0, %v1274
      %v1276 = vrot.slane %v969, %v1275
      %v1277 = vlaneseq
      %v1278 = vshrl.u32 %v1277, 7
      %v1279 = vsub.s32 0, %v1278
      %v1280 = vrot.slane %v971, %v1279
      %v1281 = vlaneseq
      %v1282 = vshrl.u32 %v1281, 7
      %v1283 = vsub.s32 0, %v1282
      %v1284 = vrot.slane %v954, %v1283
      %v1285 = vlaneseq
      %v1286 = vshrl.u32 %v1285, 7
      %v1287 = vsub.s32 0, %v1286
      %v1288 = vrot.slane %v968, %v1287
      %v1289 = vlaneseq
      %v1290 = vshrl.u32 %v1289, 7
      %v1291 = vsub.s32 0, %v1290
      %v1292 = vrot.slane %v970, %v1291
      %v1293 = vlaneseq
      %v1294 = vshrl.u32 %v1293, 7
      %v1295 = vsub.s32 0, %v1294
      %v1296 = vrot.slane %v972, %v1295
      %v1297 = vlaneseq
      %v1298 = vshrl.u32 %v1297, 7
      %v1299 = vsub.s32 0, %v1298
      %v1300 = vrot.slane %v996, %v1299
      %v1301 = vlaneseq
      %v1302 = vshrl.u32 %v1301, 7
      %v1303 = vsub.s32 0, %v1302
      %v1304 = vrot.slane %v1010, %v1303
      %v1305 = vlaneseq
      %v1306 = vshrl.u32 %v1305, 7
      %v1307 = vsub.s32 0, %v1306
      %v1308 = vrot.slane %v1018, %v1307
      %v1309 = vlaneseq
      %v1310 = vshrl.u32 %v1309, 7
      %v1311 = vsub.s32 0, %v1310
      %v1312 = vrot.slane %v1020, %v1311
      %v1313 = vlaneseq
      %v1314 = vshrl.u32 %v1313, 7
      %v1315 = vsub.s32 0, %v1314
      %v1316 = vrot.slane %v1003, %v1315
      %v1317 = vlaneseq
      %v1318 = vshrl.u32 %v1317, 7
      %v1319 = vsub.s32 0, %v1318
      %v1320 = vrot.slane %v1017, %v1319
      %v1321 = vlaneseq
      %v1322 = vshrl.u32 %v1321, 7
      %v1323 = vsub.s32 0, %v1322
      %v1324 = vrot.slane %v1019, %v1323
      %v1325 = vlaneseq
      %v1326 = vshrl.u32 %v1325, 7
      %v1327 = vsub.s32 0, %v1326
      %v1328 = vrot.slane %v1021, %v1327
      %v1329 = vlaneseq
      %v1330 = vshrl.u32 %v1329, 7
      %v1331 = vsub.s32 0, %v1330
      %v1332 = vrot.slane %v1045, %v1331
      %v1333 = vlaneseq
      %v1334 = vshrl.u32 %v1333, 7
      %v1335 = vsub.s32 0, %v1334
      %v1336 = vrot.slane %v1059, %v1335
      %v1337 = vlaneseq
      %v1338 = vshrl.u32 %v1337, 7
      %v1339 = vsub.s32 0, %v1338
      %v1340 = vrot.slane %v1067, %v1339
      %v1341 = vlaneseq
      %v1342 = vshrl.u32 %v1341, 7
      %v1343 = vsub.s32 0, %v1342
      %v1344 = vrot.slane %v1069, %v1343
      %v1345 = vlaneseq
      %v1346 = vshrl.u32 %v1345, 7
      %v1347 = vsub.s32 0, %v1346
      %v1348 = vrot.slane %v1052, %v1347
      %v1349 = vlaneseq
      %v1350 = vshrl.u32 %v1349, 7
      %v1351 = vsub.s32 0, %v1350
      %v1352 = vrot.slane %v1066, %v1351
      %v1353 = vlaneseq
      %v1354 = vshrl.u32 %v1353, 7
      %v1355 = vsub.s32 0, %v1354
      %v1356 = vrot.slane %v1068, %v1355
      %v1357 = vlaneseq
      %v1358 = vshrl.u32 %v1357, 7
      %v1359 = vsub.s32 0, %v1358
      %v1360 = vrot.slane %v1070, %v1359
      %v1361 = vlaneseq
      %v1362 = vshrl.u32 %v1361, 7
      %v1363 = vsub.s32 0, %v1362
      %v1364 = vrot.slane %v1094, %v1363
      %v1365 = vlaneseq
      %v1366 = vshrl.u32 %v1365, 7
      %v1367 = vsub.s32 0, %v1366
      %v1368 = vrot.slane %v1108, %v1367
      %v1369 = vlaneseq
      %v1370 = vshrl.u32 %v1369, 7
      %v1371 = vsub.s32 0, %v1370
      %v1372 = vrot.slane %v1116, %v1371
      %v1373 = vlaneseq
      %v1374 = vshrl.u32 %v1373, 7
      %v1375 = vsub.s32 0, %v1374
      %v1376 = vrot.slane %v1118, %v1375
      %v1377 = vlaneseq
      %v1378 = vshrl.u32 %v1377, 7
      %v1379 = vsub.s32 0, %v1378
      %v1380 = vrot.slane %v1101, %v1379
      %v1381 = vlaneseq
      %v1382 = vshrl.u32 %v1381, 7
      %v1383 = vsub.s32 0, %v1382
      %v1384 = vrot.slane %v1115, %v1383
      %v1385 = vlaneseq
      %v1386 = vshrl.u32 %v1385, 7
      %v1387 = vsub.s32 0, %v1386
      %v1388 = vrot.slane %v1117, %v1387
      %v1389 = vlaneseq
      %v1390 = vshrl.u32 %v1389, 7
      %v1391 = vsub.s32 0, %v1390
      %v1392 = vrot.slane %v1119, %v1391
      %v1393 = vlaneseq
      %v1394 = vshrl.u32 %v1393, 7
      %v1395 = vsub.s32 0, %v1394
      %v1396 = vrot.slane %v1143, %v1395
      %v1397 = vlaneseq
      %v1398 = vshrl.u32 %v1397, 7
      %v1399 = vsub.s32 0, %v1398
      %v1400 = vrot.slane %v1157, %v1399
      %v1401 = vlaneseq
      %v1402 = vshrl.u32 %v1401, 7
      %v1403 = vsub.s32 0, %v1402
      %v1404 = vrot.slane %v1165, %v1403
      %v1405 = vlaneseq
      %v1406 = vshrl.u32 %v1405, 7
      %v1407 = vsub.s32 0, %v1406
      %v1408 = vrot.slane %v1167, %v1407
      %v1409 = vlaneseq
      %v1410 = vshrl.u32 %v1409, 7
      %v1411 = vsub.s32 0, %v1410
      %v1412 = vrot.slane %v1150, %v1411
      %v1413 = vlaneseq
      %v1414 = vshrl.u32 %v1413, 7
      %v1415 = vsub.s32 0, %v1414
      %v1416 = vrot.slane %v1164, %v1415
      %v1417 = vlaneseq
      %v1418 = vshrl.u32 %v1417, 7
      %v1419 = vsub.s32 0, %v1418
      %v1420 = vrot.slane %v1166, %v1419
      %v1421 = vlaneseq
      %v1422 = vshrl.u32 %v1421, 7
      %v1423 = vsub.s32 0, %v1422
      %v1424 = vrot.slane %v1168, %v1423
      %v1433 = vcombine.high %v761, %v761
      %v1435 = vunpack.c.l.s4 1966171168
      %v1436 = vunpack.c.0.s8 %v1435
      %v1437 = vlaneseq
      %v1438 = vshrl.u32 %v1437, 7
      %v1439 = vsub.s32 %v1436, %v1438
      %v1440 = vrot.slane %v761, %v1439
      %v1442 = vunpack.c.l.s4 1966171168
      %v1443 = vunpack.c.0.s8 %v1442
      %v1444 = vlaneseq
      %v1445 = vshrl.u32 %v1444, 7
      %v1446 = vsub.s32 %v1443, %v1445
      %v1447 = vrot.slane %v1433, %v1446
      %v1448 = vcombine.high %v1440, %v1440
      %v1449 = vcombine.high %v1447, %v1447
      %v1451 = vunpack.c.l.s4 1966171168
      %v1452 = vunpack.c.0.s8 %v1451
      %v1453 = vlaneseq
      %v1454 = vshrl.u32 %v1453, 7
      %v1455 = vsub.s32 %v1452, %v1454
      %v1456 = vrot.slane %v1440, %v1455
      %v1458 = vunpack.c.l.s4 1966171168
      %v1459 = vunpack.c.0.s8 %v1458
      %v1460 = vlaneseq
      %v1461 = vshrl.u32 %v1460, 7
      %v1462 = vsub.s32 %v1459, %v1461
      %v1463 = vrot.slane %v1447, %v1462
      %v1465 = vunpack.c.l.s4 1966171168
      %v1466 = vunpack.c.0.s8 %v1465
      %v1467 = vlaneseq
      %v1468 = vshrl.u32 %v1467, 7
      %v1469 = vsub.s32 %v1466, %v1468
      %v1470 = vrot.slane %v1448, %v1469
      %v1472 = vunpack.c.l.s4 1966171168
      %v1473 = vunpack.c.0.s8 %v1472
      %v1474 = vlaneseq
      %v1475 = vshrl.u32 %v1474, 7
      %v1476 = vsub.s32 %v1473, %v1475
      %v1477 = vrot.slane %v1449, %v1476
      %v1478 = vcombine.high %v1456, %v1456
      %v1479 = vcombine.high %v1463, %v1463
      %v1480 = vcombine.high %v1470, %v1470
      %v1481 = vcombine.high %v1477, %v1477
      %v1482 = vcombine.high %v762, %v762
      %v1484 = vunpack.c.l.s4 1966171168
      %v1485 = vunpack.c.0.s8 %v1484
      %v1486 = vlaneseq
      %v1487 = vshrl.u32 %v1486, 7
      %v1488 = vsub.s32 %v1485, %v1487
      %v1489 = vrot.slane %v762, %v1488
      %v1491 = vunpack.c.l.s4 1966171168
      %v1492 = vunpack.c.0.s8 %v1491
      %v1493 = vlaneseq
      %v1494 = vshrl.u32 %v1493, 7
      %v1495 = vsub.s32 %v1492, %v1494
      %v1496 = vrot.slane %v1482, %v1495
      %v1497 = vcombine.high %v1489, %v1489
      %v1498 = vcombine.high %v1496, %v1496
      %v1500 = vunpack.c.l.s4 1966171168
      %v1501 = vunpack.c.0.s8 %v1500
      %v1502 = vlaneseq
      %v1503 = vshrl.u32 %v1502, 7
      %v1504 = vsub.s32 %v1501, %v1503
      %v1505 = vrot.slane %v1489, %v1504
      %v1507 = vunpack.c.l.s4 1966171168
      %v1508 = vunpack.c.0.s8 %v1507
      %v1509 = vlaneseq
      %v1510 = vshrl.u32 %v1509, 7
      %v1511 = vsub.s32 %v1508, %v1510
      %v1512 = vrot.slane %v1496, %v1511
      %v1514 = vunpack.c.l.s4 1966171168
      %v1515 = vunpack.c.0.s8 %v1514
      %v1516 = vlaneseq
      %v1517 = vshrl.u32 %v1516, 7
      %v1518 = vsub.s32 %v1515, %v1517
      %v1519 = vrot.slane %v1497, %v1518
      %v1521 = vunpack.c.l.s4 1966171168
      %v1522 = vunpack.c.0.s8 %v1521
      %v1523 = vlaneseq
      %v1524 = vshrl.u32 %v1523, 7
      %v1525 = vsub.s32 %v1522, %v1524
      %v1526 = vrot.slane %v1498, %v1525
      %v1527 = vcombine.high %v1505, %v1505
      %v1528 = vcombine.high %v1512, %v1512
      %v1529 = vcombine.high %v1519, %v1519
      %v1530 = vcombine.high %v1526, %v1526
      %v1531 = vcombine.high %v763, %v763
      %v1533 = vunpack.c.l.s4 1966171168
      %v1534 = vunpack.c.0.s8 %v1533
      %v1535 = vlaneseq
      %v1536 = vshrl.u32 %v1535, 7
      %v1537 = vsub.s32 %v1534, %v1536
      %v1538 = vrot.slane %v763, %v1537
      %v1540 = vunpack.c.l.s4 1966171168
      %v1541 = vunpack.c.0.s8 %v1540
      %v1542 = vlaneseq
      %v1543 = vshrl.u32 %v1542, 7
      %v1544 = vsub.s32 %v1541, %v1543
      %v1545 = vrot.slane %v1531, %v1544
      %v1546 = vcombine.high %v1538, %v1538
      %v1547 = vcombine.high %v1545, %v1545
      %v1549 = vunpack.c.l.s4 1966171168
      %v1550 = vunpack.c.0.s8 %v1549
      %v1551 = vlaneseq
      %v1552 = vshrl.u32 %v1551, 7
      %v1553 = vsub.s32 %v1550, %v1552
      %v1554 = vrot.slane %v1538, %v1553
      %v1556 = vunpack.c.l.s4 1966171168
      %v1557 = vunpack.c.0.s8 %v1556
      %v1558 = vlaneseq
      %v1559 = vshrl.u32 %v1558, 7
      %v1560 = vsub.s32 %v1557, %v1559
      %v1561 = vrot.slane %v1545, %v1560
      %v1563 = vunpack.c.l.s4 1966171168
      %v1564 = vunpack.c.0.s8 %v1563
      %v1565 = vlaneseq
      %v1566 = vshrl.u32 %v1565, 7
      %v1567 = vsub.s32 %v1564, %v1566
      %v1568 = vrot.slane %v1546, %v1567
      %v1570 = vunpack.c.l.s4 1966171168
      %v1571 = vunpack.c.0.s8 %v1570
      %v1572 = vlaneseq
      %v1573 = vshrl.u32 %v1572, 7
      %v1574 = vsub.s32 %v1571, %v1573
      %v1575 = vrot.slane %v1547, %v1574
      %v1576 = vcombine.high %v1554, %v1554
      %v1577 = vcombine.high %v1561, %v1561
      %v1578 = vcombine.high %v1568, %v1568
      %v1579 = vcombine.high %v1575, %v1575
      %v1580 = vcombine.high %v764, %v764
      %v1582 = vunpack.c.l.s4 1966171168
      %v1583 = vunpack.c.0.s8 %v1582
      %v1584 = vlaneseq
      %v1585 = vshrl.u32 %v1584, 7
      %v1586 = vsub.s32 %v1583, %v1585
      %v1587 = vrot.slane %v764, %v1586
      %v1589 = vunpack.c.l.s4 1966171168
      %v1590 = vunpack.c.0.s8 %v1589
      %v1591 = vlaneseq
      %v1592 = vshrl.u32 %v1591, 7
      %v1593 = vsub.s32 %v1590, %v1592
      %v1594 = vrot.slane %v1580, %v1593
      %v1595 = vcombine.high %v1587, %v1587
      %v1596 = vcombine.high %v1594, %v1594
      %v1598 = vunpack.c.l.s4 1966171168
      %v1599 = vunpack.c.0.s8 %v1598
      %v1600 = vlaneseq
      %v1601 = vshrl.u32 %v1600, 7
      %v1602 = vsub.s32 %v1599, %v1601
      %v1603 = vrot.slane %v1587, %v1602
      %v1605 = vunpack.c.l.s4 1966171168
      %v1606 = vunpack.c.0.s8 %v1605
      %v1607 = vlaneseq
      %v1608 = vshrl.u32 %v1607, 7
      %v1609 = vsub.s32 %v1606, %v1608
      %v1610 = vrot.slane %v1594, %v1609
      %v1612 = vunpack.c.l.s4 1966171168
      %v1613 = vunpack.c.0.s8 %v1612
      %v1614 = vlaneseq
      %v1615 = vshrl.u32 %v1614, 7
      %v1616 = vsub.s32 %v1613, %v1615
      %v1617 = vrot.slane %v1595, %v1616
      %v1619 = vunpack.c.l.s4 1966171168
      %v1620 = vunpack.c.0.s8 %v1619
      %v1621 = vlaneseq
      %v1622 = vshrl.u32 %v1621, 7
      %v1623 = vsub.s32 %v1620, %v1622
      %v1624 = vrot.slane %v1596, %v1623
      %v1625 = vcombine.high %v1603, %v1603
      %v1626 = vcombine.high %v1610, %v1610
      %v1627 = vcombine.high %v1617, %v1617
      %v1628 = vcombine.high %v1624, %v1624
      %v1629 = vcombine.high %v765, %v765
      %v1631 = vunpack.c.l.s4 1966171168
      %v1632 = vunpack.c.0.s8 %v1631
      %v1633 = vlaneseq
      %v1634 = vshrl.u32 %v1633, 7
      %v1635 = vsub.s32 %v1632, %v1634
      %v1636 = vrot.slane %v765, %v1635
      %v1638 = vunpack.c.l.s4 1966171168
      %v1639 = vunpack.c.0.s8 %v1638
      %v1640 = vlaneseq
      %v1641 = vshrl.u32 %v1640, 7
      %v1642 = vsub.s32 %v1639, %v1641
      %v1643 = vrot.slane %v1629, %v1642
      %v1644 = vcombine.high %v1636, %v1636
      %v1645 = vcombine.high %v1643, %v1643
      %v1647 = vunpack.c.l.s4 1966171168
      %v1648 = vunpack.c.0.s8 %v1647
      %v1649 = vlaneseq
      %v1650 = vshrl.u32 %v1649, 7
      %v1651 = vsub.s32 %v1648, %v1650
      %v1652 = vrot.slane %v1636, %v1651
      %v1654 = vunpack.c.l.s4 1966171168
      %v1655 = vunpack.c.0.s8 %v1654
      %v1656 = vlaneseq
      %v1657 = vshrl.u32 %v1656, 7
      %v1658 = vsub.s32 %v1655, %v1657
      %v1659 = vrot.slane %v1643, %v1658
      %v1661 = vunpack.c.l.s4 1966171168
      %v1662 = vunpack.c.0.s8 %v1661
      %v1663 = vlaneseq
      %v1664 = vshrl.u32 %v1663, 7
      %v1665 = vsub.s32 %v1662, %v1664
      %v1666 = vrot.slane %v1644, %v1665
      %v1668 = vunpack.c.l.s4 1966171168
      %v1669 = vunpack.c.0.s8 %v1668
      %v1670 = vlaneseq
      %v1671 = vshrl.u32 %v1670, 7
      %v1672 = vsub.s32 %v1669, %v1671
      %v1673 = vrot.slane %v1645, %v1672
      %v1674 = vcombine.high %v1652, %v1652
      %v1675 = vcombine.high %v1659, %v1659
      %v1676 = vcombine.high %v1666, %v1666
      %v1677 = vcombine.high %v1673, %v1673
      %v1678 = vcombine.high %v766, %v766
      %v1680 = vunpack.c.l.s4 1966171168
      %v1681 = vunpack.c.0.s8 %v1680
      %v1682 = vlaneseq
      %v1683 = vshrl.u32 %v1682, 7
      %v1684 = vsub.s32 %v1681, %v1683
      %v1685 = vrot.slane %v766, %v1684
      %v1687 = vunpack.c.l.s4 1966171168
      %v1688 = vunpack.c.0.s8 %v1687
      %v1689 = vlaneseq
      %v1690 = vshrl.u32 %v1689, 7
      %v1691 = vsub.s32 %v1688, %v1690
      %v1692 = vrot.slane %v1678, %v1691
      %v1693 = vcombine.high %v1685, %v1685
      %v1694 = vcombine.high %v1692, %v1692
      %v1696 = vunpack.c.l.s4 1966171168
      %v1697 = vunpack.c.0.s8 %v1696
      %v1698 = vlaneseq
      %v1699 = vshrl.u32 %v1698, 7
      %v1700 = vsub.s32 %v1697, %v1699
      %v1701 = vrot.slane %v1685, %v1700
      %v1703 = vunpack.c.l.s4 1966171168
      %v1704 = vunpack.c.0.s8 %v1703
      %v1705 = vlaneseq
      %v1706 = vshrl.u32 %v1705, 7
      %v1707 = vsub.s32 %v1704, %v1706
      %v1708 = vrot.slane %v1692, %v1707
      %v1710 = vunpack.c.l.s4 1966171168
      %v1711 = vunpack.c.0.s8 %v1710
      %v1712 = vlaneseq
      %v1713 = vshrl.u32 %v1712, 7
      %v1714 = vsub.s32 %v1711, %v1713
      %v1715 = vrot.slane %v1693, %v1714
      %v1717 = vunpack.c.l.s4 1966171168
      %v1718 = vunpack.c.0.s8 %v1717
      %v1719 = vlaneseq
      %v1720 = vshrl.u32 %v1719, 7
      %v1721 = vsub.s32 %v1718, %v1720
      %v1722 = vrot.slane %v1694, %v1721
      %v1723 = vcombine.high %v1701, %v1701
      %v1724 = vcombine.high %v1708, %v1708
      %v1725 = vcombine.high %v1715, %v1715
      %v1726 = vcombine.high %v1722, %v1722
      %v1727 = vcombine.high %v767, %v767
      %v1729 = vunpack.c.l.s4 1966171168
      %v1730 = vunpack.c.0.s8 %v1729
      %v1731 = vlaneseq
      %v1732 = vshrl.u32 %v1731, 7
      %v1733 = vsub.s32 %v1730, %v1732
      %v1734 = vrot.slane %v767, %v1733
      %v1736 = vunpack.c.l.s4 1966171168
      %v1737 = vunpack.c.0.s8 %v1736
      %v1738 = vlaneseq
      %v1739 = vshrl.u32 %v1738, 7
      %v1740 = vsub.s32 %v1737, %v1739
      %v1741 = vrot.slane %v1727, %v1740
      %v1742 = vcombine.high %v1734, %v1734
      %v1743 = vcombine.high %v1741, %v1741
      %v1745 = vunpack.c.l.s4 1966171168
      %v1746 = vunpack.c.0.s8 %v1745
      %v1747 = vlaneseq
      %v1748 = vshrl.u32 %v1747, 7
      %v1749 = vsub.s32 %v1746, %v1748
      %v1750 = vrot.slane %v1734, %v1749
      %v1752 = vunpack.c.l.s4 1966171168
      %v1753 = vunpack.c.0.s8 %v1752
      %v1754 = vlaneseq
      %v1755 = vshrl.u32 %v1754, 7
      %v1756 = vsub.s32 %v1753, %v1755
      %v1757 = vrot.slane %v1741, %v1756
      %v1759 = vunpack.c.l.s4 1966171168
      %v1760 = vunpack.c.0.s8 %v1759
      %v1761 = vlaneseq
      %v1762 = vshrl.u32 %v1761, 7
      %v1763 = vsub.s32 %v1760, %v1762
      %v1764 = vrot.slane %v1742, %v1763
      %v1766 = vunpack.c.l.s4 1966171168
      %v1767 = vunpack.c.0.s8 %v1766
      %v1768 = vlaneseq
      %v1769 = vshrl.u32 %v1768, 7
      %v1770 = vsub.s32 %v1767, %v1769
      %v1771 = vrot.slane %v1743, %v1770
      %v1772 = vcombine.high %v1750, %v1750
      %v1773 = vcombine.high %v1757, %v1757
      %v1774 = vcombine.high %v1764, %v1764
      %v1775 = vcombine.high %v1771, %v1771
      %v1776 = vcombine.high %v768, %v768
      %v1778 = vunpack.c.l.s4 1966171168
      %v1779 = vunpack.c.0.s8 %v1778
      %v1780 = vlaneseq
      %v1781 = vshrl.u32 %v1780, 7
      %v1782 = vsub.s32 %v1779, %v1781
      %v1783 = vrot.slane %v768, %v1782
      %v1785 = vunpack.c.l.s4 1966171168
      %v1786 = vunpack.c.0.s8 %v1785
      %v1787 = vlaneseq
      %v1788 = vshrl.u32 %v1787, 7
      %v1789 = vsub.s32 %v1786, %v1788
      %v1790 = vrot.slane %v1776, %v1789
      %v1791 = vcombine.high %v1783, %v1783
      %v1792 = vcombine.high %v1790, %v1790
      %v1794 = vunpack.c.l.s4 1966171168
      %v1795 = vunpack.c.0.s8 %v1794
      %v1796 = vlaneseq
      %v1797 = vshrl.u32 %v1796, 7
      %v1798 = vsub.s32 %v1795, %v1797
      %v1799 = vrot.slane %v1783, %v1798
      %v1801 = vunpack.c.l.s4 1966171168
      %v1802 = vunpack.c.0.s8 %v1801
      %v1803 = vlaneseq
      %v1804 = vshrl.u32 %v1803, 7
      %v1805 = vsub.s32 %v1802, %v1804
      %v1806 = vrot.slane %v1790, %v1805
      %v1808 = vunpack.c.l.s4 1966171168
      %v1809 = vunpack.c.0.s8 %v1808
      %v1810 = vlaneseq
      %v1811 = vshrl.u32 %v1810, 7
      %v1812 = vsub.s32 %v1809, %v1811
      %v1813 = vrot.slane %v1791, %v1812
      %v1815 = vunpack.c.l.s4 1966171168
      %v1816 = vunpack.c.0.s8 %v1815
      %v1817 = vlaneseq
      %v1818 = vshrl.u32 %v1817, 7
      %v1819 = vsub.s32 %v1816, %v1818
      %v1820 = vrot.slane %v1792, %v1819
      %v1821 = vcombine.high %v1799, %v1799
      %v1822 = vcombine.high %v1806, %v1806
      %v1823 = vcombine.high %v1813, %v1813
      %v1824 = vcombine.high %v1820, %v1820
      %v1825 = vlaneseq
      %v1826 = vshrl.u32 %v1825, 7
      %v1827 = vsub.s32 0, %v1826
      %v1828 = vrot.slane %v1456, %v1827
      %v1829 = vlaneseq
      %v1830 = vshrl.u32 %v1829, 7
      %v1831 = vsub.s32 0, %v1830
      %v1832 = vrot.slane %v1470, %v1831
      %v1833 = vlaneseq
      %v1834 = vshrl.u32 %v1833, 7
      %v1835 = vsub.s32 0, %v1834
      %v1836 = vrot.slane %v1478, %v1835
      %v1837 = vlaneseq
      %v1838 = vshrl.u32 %v1837, 7
      %v1839 = vsub.s32 0, %v1838
      %v1840 = vrot.slane %v1480, %v1839
      %v1841 = vlaneseq
      %v1842 = vshrl.u32 %v1841, 7
      %v1843 = vsub.s32 0, %v1842
      %v1844 = vrot.slane %v1463, %v1843
      %v1845 = vlaneseq
      %v1846 = vshrl.u32 %v1845, 7
      %v1847 = vsub.s32 0, %v1846
      %v1848 = vrot.slane %v1477, %v1847
      %v1849 = vlaneseq
      %v1850 = vshrl.u32 %v1849, 7
      %v1851 = vsub.s32 0, %v1850
      %v1852 = vrot.slane %v1479, %v1851
      %v1853 = vlaneseq
      %v1854 = vshrl.u32 %v1853, 7
      %v1855 = vsub.s32 0, %v1854
      %v1856 = vrot.slane %v1481, %v1855
      %v1857 = vlaneseq
      %v1858 = vshrl.u32 %v1857, 7
      %v1859 = vsub.s32 0, %v1858
      %v1860 = vrot.slane %v1505, %v1859
      %v1861 = vlaneseq
      %v1862 = vshrl.u32 %v1861, 7
      %v1863 = vsub.s32 0, %v1862
      %v1864 = vrot.slane %v1519, %v1863
      %v1865 = vlaneseq
      %v1866 = vshrl.u32 %v1865, 7
      %v1867 = vsub.s32 0, %v1866
      %v1868 = vrot.slane %v1527, %v1867
      %v1869 = vlaneseq
      %v1870 = vshrl.u32 %v1869, 7
      %v1871 = vsub.s32 0, %v1870
      %v1872 = vrot.slane %v1529, %v1871
      %v1873 = vlaneseq
      %v1874 = vshrl.u32 %v1873, 7
      %v1875 = vsub.s32 0, %v1874
      %v1876 = vrot.slane %v1512, %v1875
      %v1877 = vlaneseq
      %v1878 = vshrl.u32 %v1877, 7
      %v1879 = vsub.s32 0, %v1878
      %v1880 = vrot.slane %v1526, %v1879
      %v1881 = vlaneseq
      %v1882 = vshrl.u32 %v1881, 7
      %v1883 = vsub.s32 0, %v1882
      %v1884 = vrot.slane %v1528, %v1883
      %v1885 = vlaneseq
      %v1886 = vshrl.u32 %v1885, 7
      %v1887 = vsub.s32 0, %v1886
      %v1888 = vrot.slane %v1530, %v1887
      %v1889 = vlaneseq
      %v1890 = vshrl.u32 %v1889, 7
      %v1891 = vsub.s32 0, %v1890
      %v1892 = vrot.slane %v1554, %v1891
      %v1893 = vlaneseq
      %v1894 = vshrl.u32 %v1893, 7
      %v1895 = vsub.s32 0, %v1894
      %v1896 = vrot.slane %v1568, %v1895
      %v1897 = vlaneseq
      %v1898 = vshrl.u32 %v1897, 7
      %v1899 = vsub.s32 0, %v1898
      %v1900 = vrot.slane %v1576, %v1899
      %v1901 = vlaneseq
      %v1902 = vshrl.u32 %v1901, 7
      %v1903 = vsub.s32 0, %v1902
      %v1904 = vrot.slane %v1578, %v1903
      %v1905 = vlaneseq
      %v1906 = vshrl.u32 %v1905, 7
      %v1907 = vsub.s32 0, %v1906
      %v1908 = vrot.slane %v1561, %v1907
      %v1909 = vlaneseq
      %v1910 = vshrl.u32 %v1909, 7
      %v1911 = vsub.s32 0, %v1910
      %v1912 = vrot.slane %v1575, %v1911
      %v1913 = vlaneseq
      %v1914 = vshrl.u32 %v1913, 7
      %v1915 = vsub.s32 0, %v1914
      %v1916 = vrot.slane %v1577, %v1915
      %v1917 = vlaneseq
      %v1918 = vshrl.u32 %v1917, 7
      %v1919 = vsub.s32 0, %v1918
      %v1920 = vrot.slane %v1579, %v1919
      %v1921 = vlaneseq
      %v1922 = vshrl.u32 %v1921, 7
      %v1923 = vsub.s32 0, %v1922
      %v1924 = vrot.slane %v1603, %v1923
      %v1925 = vlaneseq
      %v1926 = vshrl.u32 %v1925, 7
      %v1927 = vsub.s32 0, %v1926
      %v1928 = vrot.slane %v1617, %v1927
      %v1929 = vlaneseq
      %v1930 = vshrl.u32 %v1929, 7
      %v1931 = vsub.s32 0, %v1930
      %v1932 = vrot.slane %v1625, %v1931
      %v1933 = vlaneseq
      %v1934 = vshrl.u32 %v1933, 7
      %v1935 = vsub.s32 0, %v1934
      %v1936 = vrot.slane %v1627, %v1935
      %v1937 = vlaneseq
      %v1938 = vshrl.u32 %v1937, 7
      %v1939 = vsub.s32 0, %v1938
      %v1940 = vrot.slane %v1610, %v1939
      %v1941 = vlaneseq
      %v1942 = vshrl.u32 %v1941, 7
      %v1943 = vsub.s32 0, %v1942
      %v1944 = vrot.slane %v1624, %v1943
      %v1945 = vlaneseq
      %v1946 = vshrl.u32 %v1945, 7
      %v1947 = vsub.s32 0, %v1946
      %v1948 = vrot.slane %v1626, %v1947
      %v1949 = vlaneseq
      %v1950 = vshrl.u32 %v1949, 7
      %v1951 = vsub.s32 0, %v1950
      %v1952 = vrot.slane %v1628, %v1951
      %v1953 = vlaneseq
      %v1954 = vshrl.u32 %v1953, 7
      %v1955 = vsub.s32 0, %v1954
      %v1956 = vrot.slane %v1652, %v1955
      %v1957 = vlaneseq
      %v1958 = vshrl.u32 %v1957, 7
      %v1959 = vsub.s32 0, %v1958
      %v1960 = vrot.slane %v1666, %v1959
      %v1961 = vlaneseq
      %v1962 = vshrl.u32 %v1961, 7
      %v1963 = vsub.s32 0, %v1962
      %v1964 = vrot.slane %v1674, %v1963
      %v1965 = vlaneseq
      %v1966 = vshrl.u32 %v1965, 7
      %v1967 = vsub.s32 0, %v1966
      %v1968 = vrot.slane %v1676, %v1967
      %v1969 = vlaneseq
      %v1970 = vshrl.u32 %v1969, 7
      %v1971 = vsub.s32 0, %v1970
      %v1972 = vrot.slane %v1659, %v1971
      %v1973 = vlaneseq
      %v1974 = vshrl.u32 %v1973, 7
      %v1975 = vsub.s32 0, %v1974
      %v1976 = vrot.slane %v1673, %v1975
      %v1977 = vlaneseq
      %v1978 = vshrl.u32 %v1977, 7
      %v1979 = vsub.s32 0, %v1978
      %v1980 = vrot.slane %v1675, %v1979
      %v1981 = vlaneseq
      %v1982 = vshrl.u32 %v1981, 7
      %v1983 = vsub.s32 0, %v1982
      %v1984 = vrot.slane %v1677, %v1983
      %v1985 = vlaneseq
      %v1986 = vshrl.u32 %v1985, 7
      %v1987 = vsub.s32 0, %v1986
      %v1988 = vrot.slane %v1701, %v1987
      %v1989 = vlaneseq
      %v1990 = vshrl.u32 %v1989, 7
      %v1991 = vsub.s32 0, %v1990
      %v1992 = vrot.slane %v1715, %v1991
      %v1993 = vlaneseq
      %v1994 = vshrl.u32 %v1993, 7
      %v1995 = vsub.s32 0, %v1994
      %v1996 = vrot.slane %v1723, %v1995
      %v1997 = vlaneseq
      %v1998 = vshrl.u32 %v1997, 7
      %v1999 = vsub.s32 0, %v1998
      %v2000 = vrot.slane %v1725, %v1999
      %v2001 = vlaneseq
      %v2002 = vshrl.u32 %v2001, 7
      %v2003 = vsub.s32 0, %v2002
      %v2004 = vrot.slane %v1708, %v2003
      %v2005 = vlaneseq
      %v2006 = vshrl.u32 %v2005, 7
      %v2007 = vsub.s32 0, %v2006
      %v2008 = vrot.slane %v1722, %v2007
      %v2009 = vlaneseq
      %v2010 = vshrl.u32 %v2009, 7
      %v2011 = vsub.s32 0, %v2010
      %v2012 = vrot.slane %v1724, %v2011
      %v2013 = vlaneseq
      %v2014 = vshrl.u32 %v2013, 7
      %v2015 = vsub.s32 0, %v2014
      %v2016 = vrot.slane %v1726, %v2015
      %v2017 = vlaneseq
      %v2018 = vshrl.u32 %v2017, 7
      %v2019 = vsub.s32 0, %v2018
      %v2020 = vrot.slane %v1750, %v2019
      %v2021 = vlaneseq
      %v2022 = vshrl.u32 %v2021, 7
      %v2023 = vsub.s32 0, %v2022
      %v2024 = vrot.slane %v1764, %v2023
      %v2025 = vlaneseq
      %v2026 = vshrl.u32 %v2025, 7
      %v2027 = vsub.s32 0, %v2026
      %v2028 = vrot.slane %v1772, %v2027
      %v2029 = vlaneseq
      %v2030 = vshrl.u32 %v2029, 7
      %v2031 = vsub.s32 0, %v2030
      %v2032 = vrot.slane %v1774, %v2031
      %v2033 = vlaneseq
      %v2034 = vshrl.u32 %v2033, 7
      %v2035 = vsub.s32 0, %v2034
      %v2036 = vrot.slane %v1757, %v2035
      %v2037 = vlaneseq
      %v2038 = vshrl.u32 %v2037, 7
      %v2039 = vsub.s32 0, %v2038
      %v2040 = vrot.slane %v1771, %v2039
      %v2041 = vlaneseq
      %v2042 = vshrl.u32 %v2041, 7
      %v2043 = vsub.s32 0, %v2042
      %v2044 = vrot.slane %v1773, %v2043
      %v2045 = vlaneseq
      %v2046 = vshrl.u32 %v2045, 7
      %v2047 = vsub.s32 0, %v2046
      %v2048 = vrot.slane %v1775, %v2047
      %v2049 = vlaneseq
      %v2050 = vshrl.u32 %v2049, 7
      %v2051 = vsub.s32 0, %v2050
      %v2052 = vrot.slane %v1799, %v2051
      %v2053 = vlaneseq
      %v2054 = vshrl.u32 %v2053, 7
      %v2055 = vsub.s32 0, %v2054
      %v2056 = vrot.slane %v1813, %v2055
      %v2057 = vlaneseq
      %v2058 = vshrl.u32 %v2057, 7
      %v2059 = vsub.s32 0, %v2058
      %v2060 = vrot.slane %v1821, %v2059
      %v2061 = vlaneseq
      %v2062 = vshrl.u32 %v2061, 7
      %v2063 = vsub.s32 0, %v2062
      %v2064 = vrot.slane %v1823, %v2063
      %v2065 = vlaneseq
      %v2066 = vshrl.u32 %v2065, 7
      %v2067 = vsub.s32 0, %v2066
      %v2068 = vrot.slane %v1806, %v2067
      %v2069 = vlaneseq
      %v2070 = vshrl.u32 %v2069, 7
      %v2071 = vsub.s32 0, %v2070
      %v2072 = vrot.slane %v1820, %v2071
      %v2073 = vlaneseq
      %v2074 = vshrl.u32 %v2073, 7
      %v2075 = vsub.s32 0, %v2074
      %v2076 = vrot.slane %v1822, %v2075
      %v2077 = vlaneseq
      %v2078 = vshrl.u32 %v2077, 7
      %v2079 = vsub.s32 0, %v2078
      %v2080 = vrot.slane %v1824, %v2079
      %v2081 = vsel %vm457, 1, 0
      %v2082 = vsel %vm458, 1, 0
      %vm2083 = vcmp.eq.s32.totalorder %v2081, 1
      %vm2084 = vcmp.eq.s32.totalorder %v2082, 1
      %v2085 = vcombine.low %v1172, %v1176
      %v2086 = vcombine.low %v1180, %v1184
      %v2088 = vunpack.c.l.s4 1983009808
      %v2089 = vunpack.c.0.s8 %v2088
      %v2090 = vlaneseq
      %v2091 = vshrl.u32 %v2090, 7
      %v2092 = vsub.s32 %v2089, %v2091
      %v2093 = vrot.slane %v2085, %v2092
      %v2095 = vunpack.c.l.s4 1983009808
      %v2096 = vunpack.c.0.s8 %v2095
      %v2097 = vlaneseq
      %v2098 = vshrl.u32 %v2097, 7
      %v2099 = vsub.s32 %v2096, %v2098
      %v2100 = vrot.slane %v2086, %v2099
      %v2101 = vcombine.low %v2093, %v2100
      %v2102 = vcombine.low %v1188, %v1192
      %v2103 = vcombine.low %v1196, %v1200
      %v2105 = vunpack.c.l.s4 1983009808
      %v2106 = vunpack.c.0.s8 %v2105
      %v2107 = vlaneseq
      %v2108 = vshrl.u32 %v2107, 7
      %v2109 = vsub.s32 %v2106, %v2108
      %v2110 = vrot.slane %v2102, %v2109
      %v2112 = vunpack.c.l.s4 1983009808
      %v2113 = vunpack.c.0.s8 %v2112
      %v2114 = vlaneseq
      %v2115 = vshrl.u32 %v2114, 7
      %v2116 = vsub.s32 %v2113, %v2115
      %v2117 = vrot.slane %v2103, %v2116
      %v2118 = vcombine.low %v2110, %v2117
      %v2119 = vcombine.low %v1204, %v1208
      %v2120 = vcombine.low %v1212, %v1216
      %v2122 = vunpack.c.l.s4 1983009808
      %v2123 = vunpack.c.0.s8 %v2122
      %v2124 = vlaneseq
      %v2125 = vshrl.u32 %v2124, 7
      %v2126 = vsub.s32 %v2123, %v2125
      %v2127 = vrot.slane %v2119, %v2126
      %v2129 = vunpack.c.l.s4 1983009808
      %v2130 = vunpack.c.0.s8 %v2129
      %v2131 = vlaneseq
      %v2132 = vshrl.u32 %v2131, 7
      %v2133 = vsub.s32 %v2130, %v2132
      %v2134 = vrot.slane %v2120, %v2133
      %v2135 = vcombine.low %v2127, %v2134
      %v2136 = vcombine.low %v1220, %v1224
      %v2137 = vcombine.low %v1228, %v1232
      %v2139 = vunpack.c.l.s4 1983009808
      %v2140 = vunpack.c.0.s8 %v2139
      %v2141 = vlaneseq
      %v2142 = vshrl.u32 %v2141, 7
      %v2143 = vsub.s32 %v2140, %v2142
      %v2144 = vrot.slane %v2136, %v2143
      %v2146 = vunpack.c.l.s4 1983009808
      %v2147 = vunpack.c.0.s8 %v2146
      %v2148 = vlaneseq
      %v2149 = vshrl.u32 %v2148, 7
      %v2150 = vsub.s32 %v2147, %v2149
      %v2151 = vrot.slane %v2137, %v2150
      %v2152 = vcombine.low %v2144, %v2151
      %v2153 = vcombine.low %v1236, %v1240
      %v2154 = vcombine.low %v1244, %v1248
      %v2156 = vunpack.c.l.s4 1983009808
      %v2157 = vunpack.c.0.s8 %v2156
      %v2158 = vlaneseq
      %v2159 = vshrl.u32 %v2158, 7
      %v2160 = vsub.s32 %v2157, %v2159
      %v2161 = vrot.slane %v2153, %v2160
      %v2163 = vunpack.c.l.s4 1983009808
      %v2164 = vunpack.c.0.s8 %v2163
      %v2165 = vlaneseq
      %v2166 = vshrl.u32 %v2165, 7
      %v2167 = vsub.s32 %v2164, %v2166
      %v2168 = vrot.slane %v2154, %v2167
      %v2169 = vcombine.low %v2161, %v2168
      %v2170 = vcombine.low %v1252, %v1256
      %v2171 = vcombine.low %v1260, %v1264
      %v2173 = vunpack.c.l.s4 1983009808
      %v2174 = vunpack.c.0.s8 %v2173
      %v2175 = vlaneseq
      %v2176 = vshrl.u32 %v2175, 7
      %v2177 = vsub.s32 %v2174, %v2176
      %v2178 = vrot.slane %v2170, %v2177
      %v2180 = vunpack.c.l.s4 1983009808
      %v2181 = vunpack.c.0.s8 %v2180
      %v2182 = vlaneseq
      %v2183 = vshrl.u32 %v2182, 7
      %v2184 = vsub.s32 %v2181, %v2183
      %v2185 = vrot.slane %v2171, %v2184
      %v2186 = vcombine.low %v2178, %v2185
      %v2187 = vcombine.low %v1268, %v1272
      %v2188 = vcombine.low %v1276, %v1280
      %v2190 = vunpack.c.l.s4 1983009808
      %v2191 = vunpack.c.0.s8 %v2190
      %v2192 = vlaneseq
      %v2193 = vshrl.u32 %v2192, 7
      %v2194 = vsub.s32 %v2191, %v2193
      %v2195 = vrot.slane %v2187, %v2194
      %v2197 = vunpack.c.l.s4 1983009808
      %v2198 = vunpack.c.0.s8 %v2197
      %v2199 = vlaneseq
      %v2200 = vshrl.u32 %v2199, 7
      %v2201 = vsub.s32 %v2198, %v2200
      %v2202 = vrot.slane %v2188, %v2201
      %v2203 = vcombine.low %v2195, %v2202
      %v2204 = vcombine.low %v1284, %v1288
      %v2205 = vcombine.low %v1292, %v1296
      %v2207 = vunpack.c.l.s4 1983009808
      %v2208 = vunpack.c.0.s8 %v2207
      %v2209 = vlaneseq
      %v2210 = vshrl.u32 %v2209, 7
      %v2211 = vsub.s32 %v2208, %v2210
      %v2212 = vrot.slane %v2204, %v2211
      %v2214 = vunpack.c.l.s4 1983009808
      %v2215 = vunpack.c.0.s8 %v2214
      %v2216 = vlaneseq
      %v2217 = vshrl.u32 %v2216, 7
      %v2218 = vsub.s32 %v2215, %v2217
      %v2219 = vrot.slane %v2205, %v2218
      %v2220 = vcombine.low %v2212, %v2219
      %v2221 = vcombine.low %v1300, %v1304
      %v2222 = vcombine.low %v1308, %v1312
      %v2224 = vunpack.c.l.s4 1983009808
      %v2225 = vunpack.c.0.s8 %v2224
      %v2226 = vlaneseq
      %v2227 = vshrl.u32 %v2226, 7
      %v2228 = vsub.s32 %v2225, %v2227
      %v2229 = vrot.slane %v2221, %v2228
      %v2231 = vunpack.c.l.s4 1983009808
      %v2232 = vunpack.c.0.s8 %v2231
      %v2233 = vlaneseq
      %v2234 = vshrl.u32 %v2233, 7
      %v2235 = vsub.s32 %v2232, %v2234
      %v2236 = vrot.slane %v2222, %v2235
      %v2237 = vcombine.low %v2229, %v2236
      %v2238 = vcombine.low %v1316, %v1320
      %v2239 = vcombine.low %v1324, %v1328
      %v2241 = vunpack.c.l.s4 1983009808
      %v2242 = vunpack.c.0.s8 %v2241
      %v2243 = vlaneseq
      %v2244 = vshrl.u32 %v2243, 7
      %v2245 = vsub.s32 %v2242, %v2244
      %v2246 = vrot.slane %v2238, %v2245
      %v2248 = vunpack.c.l.s4 1983009808
      %v2249 = vunpack.c.0.s8 %v2248
      %v2250 = vlaneseq
      %v2251 = vshrl.u32 %v2250, 7
      %v2252 = vsub.s32 %v2249, %v2251
      %v2253 = vrot.slane %v2239, %v2252
      %v2254 = vcombine.low %v2246, %v2253
      %v2255 = vcombine.low %v1332, %v1336
      %v2256 = vcombine.low %v1340, %v1344
      %v2258 = vunpack.c.l.s4 1983009808
      %v2259 = vunpack.c.0.s8 %v2258
      %v2260 = vlaneseq
      %v2261 = vshrl.u32 %v2260, 7
      %v2262 = vsub.s32 %v2259, %v2261
      %v2263 = vrot.slane %v2255, %v2262
      %v2265 = vunpack.c.l.s4 1983009808
      %v2266 = vunpack.c.0.s8 %v2265
      %v2267 = vlaneseq
      %v2268 = vshrl.u32 %v2267, 7
      %v2269 = vsub.s32 %v2266, %v2268
      %v2270 = vrot.slane %v2256, %v2269
      %v2271 = vcombine.low %v2263, %v2270
      %v2272 = vcombine.low %v1348, %v1352
      %v2273 = vcombine.low %v1356, %v1360
      %v2275 = vunpack.c.l.s4 1983009808
      %v2276 = vunpack.c.0.s8 %v2275
      %v2277 = vlaneseq
      %v2278 = vshrl.u32 %v2277, 7
      %v2279 = vsub.s32 %v2276, %v2278
      %v2280 = vrot.slane %v2272, %v2279
      %v2282 = vunpack.c.l.s4 1983009808
      %v2283 = vunpack.c.0.s8 %v2282
      %v2284 = vlaneseq
      %v2285 = vshrl.u32 %v2284, 7
      %v2286 = vsub.s32 %v2283, %v2285
      %v2287 = vrot.slane %v2273, %v2286
      %v2288 = vcombine.low %v2280, %v2287
      %v2289 = vcombine.low %v1364, %v1368
      %v2290 = vcombine.low %v1372, %v1376
      %v2292 = vunpack.c.l.s4 1983009808
      %v2293 = vunpack.c.0.s8 %v2292
      %v2294 = vlaneseq
      %v2295 = vshrl.u32 %v2294, 7
      %v2296 = vsub.s32 %v2293, %v2295
      %v2297 = vrot.slane %v2289, %v2296
      %v2299 = vunpack.c.l.s4 1983009808
      %v2300 = vunpack.c.0.s8 %v2299
      %v2301 = vlaneseq
      %v2302 = vshrl.u32 %v2301, 7
      %v2303 = vsub.s32 %v2300, %v2302
      %v2304 = vrot.slane %v2290, %v2303
      %v2305 = vcombine.low %v2297, %v2304
      %v2306 = vcombine.low %v1380, %v1384
      %v2307 = vcombine.low %v1388, %v1392
      %v2309 = vunpack.c.l.s4 1983009808
      %v2310 = vunpack.c.0.s8 %v2309
      %v2311 = vlaneseq
      %v2312 = vshrl.u32 %v2311, 7
      %v2313 = vsub.s32 %v2310, %v2312
      %v2314 = vrot.slane %v2306, %v2313
      %v2316 = vunpack.c.l.s4 1983009808
      %v2317 = vunpack.c.0.s8 %v2316
      %v2318 = vlaneseq
      %v2319 = vshrl.u32 %v2318, 7
      %v2320 = vsub.s32 %v2317, %v2319
      %v2321 = vrot.slane %v2307, %v2320
      %v2322 = vcombine.low %v2314, %v2321
      %v2323 = vcombine.low %v1396, %v1400
      %v2324 = vcombine.low %v1404, %v1408
      %v2326 = vunpack.c.l.s4 1983009808
      %v2327 = vunpack.c.0.s8 %v2326
      %v2328 = vlaneseq
      %v2329 = vshrl.u32 %v2328, 7
      %v2330 = vsub.s32 %v2327, %v2329
      %v2331 = vrot.slane %v2323, %v2330
      %v2333 = vunpack.c.l.s4 1983009808
      %v2334 = vunpack.c.0.s8 %v2333
      %v2335 = vlaneseq
      %v2336 = vshrl.u32 %v2335, 7
      %v2337 = vsub.s32 %v2334, %v2336
      %v2338 = vrot.slane %v2324, %v2337
      %v2339 = vcombine.low %v2331, %v2338
      %v2340 = vcombine.low %v1412, %v1416
      %v2341 = vcombine.low %v1420, %v1424
      %v2343 = vunpack.c.l.s4 1983009808
      %v2344 = vunpack.c.0.s8 %v2343
      %v2345 = vlaneseq
      %v2346 = vshrl.u32 %v2345, 7
      %v2347 = vsub.s32 %v2344, %v2346
      %v2348 = vrot.slane %v2340, %v2347
      %v2350 = vunpack.c.l.s4 1983009808
      %v2351 = vunpack.c.0.s8 %v2350
      %v2352 = vlaneseq
      %v2353 = vshrl.u32 %v2352, 7
      %v2354 = vsub.s32 %v2351, %v2353
      %v2355 = vrot.slane %v2341, %v2354
      %v2356 = vcombine.low %v2348, %v2355
      %2357 = vrot.lane.b32.xlu0 %v2101, 64
      %v2358 = vpop.permute.xlu0 %2357
      %2359 = vrot.lane.b32.xlu0 %v2118, 64
      %v2360 = vpop.permute.xlu0 %2359
      %2361 = vrot.lane.b32.xlu0 %v2135, 64
      %v2362 = vpop.permute.xlu0 %2361
      %2363 = vrot.lane.b32.xlu0 %v2152, 64
      %v2364 = vpop.permute.xlu0 %2363
      %2365 = vrot.lane.b32.xlu0 %v2169, 64
      %v2366 = vpop.permute.xlu0 %2365
      %2367 = vrot.lane.b32.xlu0 %v2186, 64
      %v2368 = vpop.permute.xlu0 %2367
      %2369 = vrot.lane.b32.xlu0 %v2203, 64
      %v2370 = vpop.permute.xlu0 %2369
      %2371 = vrot.lane.b32.xlu0 %v2220, 64
      %v2372 = vpop.permute.xlu0 %2371
      %2373 = vrot.lane.b32.xlu0 %v2237, 64
      %v2374 = vpop.permute.xlu0 %2373
      %2375 = vrot.lane.b32.xlu0 %v2254, 64
      %v2376 = vpop.permute.xlu0 %2375
      %2377 = vrot.lane.b32.xlu0 %v2271, 64
      %v2378 = vpop.permute.xlu0 %2377
      %2379 = vrot.lane.b32.xlu0 %v2288, 64
      %v2380 = vpop.permute.xlu0 %2379
      %2381 = vrot.lane.b32.xlu0 %v2305, 64
      %v2382 = vpop.permute.xlu0 %2381
      %2383 = vrot.lane.b32.xlu0 %v2322, 64
      %v2384 = vpop.permute.xlu0 %2383
      %2385 = vrot.lane.b32.xlu0 %v2339, 64
      %v2386 = vpop.permute.xlu0 %2385
      %2387 = vrot.lane.b32.xlu0 %v2356, 64
      %v2388 = vpop.permute.xlu0 %2387
      %v2405 = vcombine.low %v1828, %v1832
      %v2406 = vcombine.low %v1836, %v1840
      %v2408 = vunpack.c.l.s4 1983009808
      %v2409 = vunpack.c.0.s8 %v2408
      %v2410 = vlaneseq
      %v2411 = vshrl.u32 %v2410, 7
      %v2412 = vsub.s32 %v2409, %v2411
      %v2413 = vrot.slane %v2405, %v2412
      %v2415 = vunpack.c.l.s4 1983009808
      %v2416 = vunpack.c.0.s8 %v2415
      %v2417 = vlaneseq
      %v2418 = vshrl.u32 %v2417, 7
      %v2419 = vsub.s32 %v2416, %v2418
      %v2420 = vrot.slane %v2406, %v2419
      %v2421 = vcombine.low %v2413, %v2420
      %v2422 = vcombine.low %v1844, %v1848
      %v2423 = vcombine.low %v1852, %v1856
      %v2425 = vunpack.c.l.s4 1983009808
      %v2426 = vunpack.c.0.s8 %v2425
      %v2427 = vlaneseq
      %v2428 = vshrl.u32 %v2427, 7
      %v2429 = vsub.s32 %v2426, %v2428
      %v2430 = vrot.slane %v2422, %v2429
      %v2432 = vunpack.c.l.s4 1983009808
      %v2433 = vunpack.c.0.s8 %v2432
      %v2434 = vlaneseq
      %v2435 = vshrl.u32 %v2434, 7
      %v2436 = vsub.s32 %v2433, %v2435
      %v2437 = vrot.slane %v2423, %v2436
      %v2438 = vcombine.low %v2430, %v2437
      %v2439 = vcombine.low %v1860, %v1864
      %v2440 = vcombine.low %v1868, %v1872
      %v2442 = vunpack.c.l.s4 1983009808
      %v2443 = vunpack.c.0.s8 %v2442
      %v2444 = vlaneseq
      %v2445 = vshrl.u32 %v2444, 7
      %v2446 = vsub.s32 %v2443, %v2445
      %v2447 = vrot.slane %v2439, %v2446
      %v2449 = vunpack.c.l.s4 1983009808
      %v2450 = vunpack.c.0.s8 %v2449
      %v2451 = vlaneseq
      %v2452 = vshrl.u32 %v2451, 7
      %v2453 = vsub.s32 %v2450, %v2452
      %v2454 = vrot.slane %v2440, %v2453
      %v2455 = vcombine.low %v2447, %v2454
      %v2456 = vcombine.low %v1876, %v1880
      %v2457 = vcombine.low %v1884, %v1888
      %v2459 = vunpack.c.l.s4 1983009808
      %v2460 = vunpack.c.0.s8 %v2459
      %v2461 = vlaneseq
      %v2462 = vshrl.u32 %v2461, 7
      %v2463 = vsub.s32 %v2460, %v2462
      %v2464 = vrot.slane %v2456, %v2463
      %v2466 = vunpack.c.l.s4 1983009808
      %v2467 = vunpack.c.0.s8 %v2466
      %v2468 = vlaneseq
      %v2469 = vshrl.u32 %v2468, 7
      %v2470 = vsub.s32 %v2467, %v2469
      %v2471 = vrot.slane %v2457, %v2470
      %v2472 = vcombine.low %v2464, %v2471
      %v2473 = vcombine.low %v1892, %v1896
      %v2474 = vcombine.low %v1900, %v1904
      %v2476 = vunpack.c.l.s4 1983009808
      %v2477 = vunpack.c.0.s8 %v2476
      %v2478 = vlaneseq
      %v2479 = vshrl.u32 %v2478, 7
      %v2480 = vsub.s32 %v2477, %v2479
      %v2481 = vrot.slane %v2473, %v2480
      %v2483 = vunpack.c.l.s4 1983009808
      %v2484 = vunpack.c.0.s8 %v2483
      %v2485 = vlaneseq
      %v2486 = vshrl.u32 %v2485, 7
      %v2487 = vsub.s32 %v2484, %v2486
      %v2488 = vrot.slane %v2474, %v2487
      %v2489 = vcombine.low %v2481, %v2488
      %v2490 = vcombine.low %v1908, %v1912
      %v2491 = vcombine.low %v1916, %v1920
      %v2493 = vunpack.c.l.s4 1983009808
      %v2494 = vunpack.c.0.s8 %v2493
      %v2495 = vlaneseq
      %v2496 = vshrl.u32 %v2495, 7
      %v2497 = vsub.s32 %v2494, %v2496
      %v2498 = vrot.slane %v2490, %v2497
      %v2500 = vunpack.c.l.s4 1983009808
      %v2501 = vunpack.c.0.s8 %v2500
      %v2502 = vlaneseq
      %v2503 = vshrl.u32 %v2502, 7
      %v2504 = vsub.s32 %v2501, %v2503
      %v2505 = vrot.slane %v2491, %v2504
      %v2506 = vcombine.low %v2498, %v2505
      %v2507 = vcombine.low %v1924, %v1928
      %v2508 = vcombine.low %v1932, %v1936
      %v2510 = vunpack.c.l.s4 1983009808
      %v2511 = vunpack.c.0.s8 %v2510
      %v2512 = vlaneseq
      %v2513 = vshrl.u32 %v2512, 7
      %v2514 = vsub.s32 %v2511, %v2513
      %v2515 = vrot.slane %v2507, %v2514
      %v2517 = vunpack.c.l.s4 1983009808
      %v2518 = vunpack.c.0.s8 %v2517
      %v2519 = vlaneseq
      %v2520 = vshrl.u32 %v2519, 7
      %v2521 = vsub.s32 %v2518, %v2520
      %v2522 = vrot.slane %v2508, %v2521
      %v2523 = vcombine.low %v2515, %v2522
      %v2524 = vcombine.low %v1940, %v1944
      %v2525 = vcombine.low %v1948, %v1952
      %v2527 = vunpack.c.l.s4 1983009808
      %v2528 = vunpack.c.0.s8 %v2527
      %v2529 = vlaneseq
      %v2530 = vshrl.u32 %v2529, 7
      %v2531 = vsub.s32 %v2528, %v2530
      %v2532 = vrot.slane %v2524, %v2531
      %v2534 = vunpack.c.l.s4 1983009808
      %v2535 = vunpack.c.0.s8 %v2534
      %v2536 = vlaneseq
      %v2537 = vshrl.u32 %v2536, 7
      %v2538 = vsub.s32 %v2535, %v2537
      %v2539 = vrot.slane %v2525, %v2538
      %v2540 = vcombine.low %v2532, %v2539
      %v2541 = vcombine.low %v1956, %v1960
      %v2542 = vcombine.low %v1964, %v1968
      %v2544 = vunpack.c.l.s4 1983009808
      %v2545 = vunpack.c.0.s8 %v2544
      %v2546 = vlaneseq
      %v2547 = vshrl.u32 %v2546, 7
      %v2548 = vsub.s32 %v2545, %v2547
      %v2549 = vrot.slane %v2541, %v2548
      %v2551 = vunpack.c.l.s4 1983009808
      %v2552 = vunpack.c.0.s8 %v2551
      %v2553 = vlaneseq
      %v2554 = vshrl.u32 %v2553, 7
      %v2555 = vsub.s32 %v2552, %v2554
      %v2556 = vrot.slane %v2542, %v2555
      %v2557 = vcombine.low %v2549, %v2556
      %v2558 = vcombine.low %v1972, %v1976
      %v2559 = vcombine.low %v1980, %v1984
      %v2561 = vunpack.c.l.s4 1983009808
      %v2562 = vunpack.c.0.s8 %v2561
      %v2563 = vlaneseq
      %v2564 = vshrl.u32 %v2563, 7
      %v2565 = vsub.s32 %v2562, %v2564
      %v2566 = vrot.slane %v2558, %v2565
      %v2568 = vunpack.c.l.s4 1983009808
      %v2569 = vunpack.c.0.s8 %v2568
      %v2570 = vlaneseq
      %v2571 = vshrl.u32 %v2570, 7
      %v2572 = vsub.s32 %v2569, %v2571
      %v2573 = vrot.slane %v2559, %v2572
      %v2574 = vcombine.low %v2566, %v2573
      %v2575 = vcombine.low %v1988, %v1992
      %v2576 = vcombine.low %v1996, %v2000
      %v2578 = vunpack.c.l.s4 1983009808
      %v2579 = vunpack.c.0.s8 %v2578
      %v2580 = vlaneseq
      %v2581 = vshrl.u32 %v2580, 7
      %v2582 = vsub.s32 %v2579, %v2581
      %v2583 = vrot.slane %v2575, %v2582
      %v2585 = vunpack.c.l.s4 1983009808
      %v2586 = vunpack.c.0.s8 %v2585
      %v2587 = vlaneseq
      %v2588 = vshrl.u32 %v2587, 7
      %v2589 = vsub.s32 %v2586, %v2588
      %v2590 = vrot.slane %v2576, %v2589
      %v2591 = vcombine.low %v2583, %v2590
      %v2592 = vcombine.low %v2004, %v2008
      %v2593 = vcombine.low %v2012, %v2016
      %v2595 = vunpack.c.l.s4 1983009808
      %v2596 = vunpack.c.0.s8 %v2595
      %v2597 = vlaneseq
      %v2598 = vshrl.u32 %v2597, 7
      %v2599 = vsub.s32 %v2596, %v2598
      %v2600 = vrot.slane %v2592, %v2599
      %v2602 = vunpack.c.l.s4 1983009808
      %v2603 = vunpack.c.0.s8 %v2602
      %v2604 = vlaneseq
      %v2605 = vshrl.u32 %v2604, 7
      %v2606 = vsub.s32 %v2603, %v2605
      %v2607 = vrot.slane %v2593, %v2606
      %v2608 = vcombine.low %v2600, %v2607
      %v2609 = vcombine.low %v2020, %v2024
      %v2610 = vcombine.low %v2028, %v2032
      %v2612 = vunpack.c.l.s4 1983009808
      %v2613 = vunpack.c.0.s8 %v2612
      %v2614 = vlaneseq
      %v2615 = vshrl.u32 %v2614, 7
      %v2616 = vsub.s32 %v2613, %v2615
      %v2617 = vrot.slane %v2609, %v2616
      %v2619 = vunpack.c.l.s4 1983009808
      %v2620 = vunpack.c.0.s8 %v2619
      %v2621 = vlaneseq
      %v2622 = vshrl.u32 %v2621, 7
      %v2623 = vsub.s32 %v2620, %v2622
      %v2624 = vrot.slane %v2610, %v2623
      %v2625 = vcombine.low %v2617, %v2624
      %v2626 = vcombine.low %v2036, %v2040
      %v2627 = vcombine.low %v2044, %v2048
      %v2629 = vunpack.c.l.s4 1983009808
      %v2630 = vunpack.c.0.s8 %v2629
      %v2631 = vlaneseq
      %v2632 = vshrl.u32 %v2631, 7
      %v2633 = vsub.s32 %v2630, %v2632
      %v2634 = vrot.slane %v2626, %v2633
      %v2636 = vunpack.c.l.s4 1983009808
      %v2637 = vunpack.c.0.s8 %v2636
      %v2638 = vlaneseq
      %v2639 = vshrl.u32 %v2638, 7
      %v2640 = vsub.s32 %v2637, %v2639
      %v2641 = vrot.slane %v2627, %v2640
      %v2642 = vcombine.low %v2634, %v2641
      %v2643 = vcombine.low %v2052, %v2056
      %v2644 = vcombine.low %v2060, %v2064
      %v2646 = vunpack.c.l.s4 1983009808
      %v2647 = vunpack.c.0.s8 %v2646
      %v2648 = vlaneseq
      %v2649 = vshrl.u32 %v2648, 7
      %v2650 = vsub.s32 %v2647, %v2649
      %v2651 = vrot.slane %v2643, %v2650
      %v2653 = vunpack.c.l.s4 1983009808
      %v2654 = vunpack.c.0.s8 %v2653
      %v2655 = vlaneseq
      %v2656 = vshrl.u32 %v2655, 7
      %v2657 = vsub.s32 %v2654, %v2656
      %v2658 = vrot.slane %v2644, %v2657
      %v2659 = vcombine.low %v2651, %v2658
      %v2660 = vcombine.low %v2068, %v2072
      %v2661 = vcombine.low %v2076, %v2080
      %v2663 = vunpack.c.l.s4 1983009808
      %v2664 = vunpack.c.0.s8 %v2663
      %v2665 = vlaneseq
      %v2666 = vshrl.u32 %v2665, 7
      %v2667 = vsub.s32 %v2664, %v2666
      %v2668 = vrot.slane %v2660, %v2667
      %v2670 = vunpack.c.l.s4 1983009808
      %v2671 = vunpack.c.0.s8 %v2670
      %v2672 = vlaneseq
      %v2673 = vshrl.u32 %v2672, 7
      %v2674 = vsub.s32 %v2671, %v2673
      %v2675 = vrot.slane %v2661, %v2674
      %v2676 = vcombine.low %v2668, %v2675
      %2677 = vrot.lane.b32.xlu0 %v2421, 64
      %v2678 = vpop.permute.xlu0 %2677
      %2679 = vrot.lane.b32.xlu0 %v2438, 64
      %v2680 = vpop.permute.xlu0 %2679
      %2681 = vrot.lane.b32.xlu0 %v2455, 64
      %v2682 = vpop.permute.xlu0 %2681
      %2683 = vrot.lane.b32.xlu0 %v2472, 64
      %v2684 = vpop.permute.xlu0 %2683
      %2685 = vrot.lane.b32.xlu0 %v2489, 64
      %v2686 = vpop.permute.xlu0 %2685
      %2687 = vrot.lane.b32.xlu0 %v2506, 64
      %v2688 = vpop.permute.xlu0 %2687
      %2689 = vrot.lane.b32.xlu0 %v2523, 64
      %v2690 = vpop.permute.xlu0 %2689
      %2691 = vrot.lane.b32.xlu0 %v2540, 64
      %v2692 = vpop.permute.xlu0 %2691
      %2693 = vrot.lane.b32.xlu0 %v2557, 64
      %v2694 = vpop.permute.xlu0 %2693
      %2695 = vrot.lane.b32.xlu0 %v2574, 64
      %v2696 = vpop.permute.xlu0 %2695
      %2697 = vrot.lane.b32.xlu0 %v2591, 64
      %v2698 = vpop.permute.xlu0 %2697
      %2699 = vrot.lane.b32.xlu0 %v2608, 64
      %v2700 = vpop.permute.xlu0 %2699
      %2701 = vrot.lane.b32.xlu0 %v2625, 64
      %v2702 = vpop.permute.xlu0 %2701
      %2703 = vrot.lane.b32.xlu0 %v2642, 64
      %v2704 = vpop.permute.xlu0 %2703
      %2705 = vrot.lane.b32.xlu0 %v2659, 64
      %v2706 = vpop.permute.xlu0 %2705
      %2707 = vrot.lane.b32.xlu0 %v2676, 64
      %v2708 = vpop.permute.xlu0 %2707
      %v2725 = vsel %vm2083, %v2358, %v2678
      %v2726 = vsel %vm2084, %v2360, %v2680
      %v2727 = vsel %vm2083, %v2362, %v2682
      %v2728 = vsel %vm2084, %v2364, %v2684
      %v2729 = vsel %vm2083, %v2366, %v2686
      %v2730 = vsel %vm2084, %v2368, %v2688
      %v2731 = vsel %vm2083, %v2370, %v2690
      %v2732 = vsel %vm2084, %v2372, %v2692
      %v2733 = vsel %vm2083, %v2374, %v2694
      %v2734 = vsel %vm2084, %v2376, %v2696
      %v2735 = vsel %vm2083, %v2378, %v2698
      %v2736 = vsel %vm2084, %v2380, %v2700
      %v2737 = vsel %vm2083, %v2382, %v2702
      %v2738 = vsel %vm2084, %v2384, %v2704
      %v2739 = vsel %vm2083, %v2386, %v2706
      %v2740 = vsel %vm2084, %v2388, %v2708
      %v2741 = vlaneseq
      %v2742 = vshrl.u32 %v2741, 7
      %v2743 = vsub.s32 0, %v2742
      %v2744 = vrot.slane %v428, %v2743
      %v2745 = vmul.f32 %v521, %v2744
      %v2746 = vmul.f32 %v522, %v2744
      %v2747 = vmul.f32 %v523, %v2744
      %v2748 = vmul.f32 %v524, %v2744
      %v2749 = vmul.f32 %v525, %v2744
      %v2750 = vmul.f32 %v526, %v2744
      %v2751 = vmul.f32 %v527, %v2744
      %v2752 = vmul.f32 %v528, %v2744
      %v2753 = vadd.f32 %v2745, %v483
      %v2754 = vadd.f32 %v2746, %v483
      %v2755 = vadd.f32 %v2747, %v483
      %v2756 = vadd.f32 %v2748, %v483
      %v2757 = vadd.f32 %v2749, %v483
      %v2758 = vadd.f32 %v2750, %v483
      %v2759 = vadd.f32 %v2751, %v483
      %v2760 = vadd.f32 %v2752, %v483
      %v2761 = vlaneseq
      %v2762 = vshrl.u32 %v2761, 7
      %v2763 = vsub.s32 1, %v2762
      %v2764 = vrot.slane %v428, %v2763
      %v2765 = vmul.f32 %v549, %v2764
      %v2766 = vmul.f32 %v550, %v2764
      %v2767 = vmul.f32 %v551, %v2764
      %v2768 = vmul.f32 %v552, %v2764
      %v2769 = vmul.f32 %v553, %v2764
      %v2770 = vmul.f32 %v554, %v2764
      %v2771 = vmul.f32 %v555, %v2764
      %v2772 = vmul.f32 %v556, %v2764
      %v2773 = vadd.f32 %v2753, %v2765
      %v2774 = vadd.f32 %v2754, %v2766
      %v2775 = vadd.f32 %v2755, %v2767
      %v2776 = vadd.f32 %v2756, %v2768
      %v2777 = vadd.f32 %v2757, %v2769
      %v2778 = vadd.f32 %v2758, %v2770
      %v2779 = vadd.f32 %v2759, %v2771
      %v2780 = vadd.f32 %v2760, %v2772
      %s2781 = scalar_lea.vmem [#allocation2], 32
      %v2782 = vld [vmem:[%s2781] sm:$0xff]
      %v2783 = vld [vmem:[%s2781 + $0x10] sm:$0xff]
      %v2784 = vld [vmem:[%s2781 + $0x20] sm:$0xff]
      %v2785 = vld [vmem:[%s2781 + $0x30] sm:$0xff]
      %v2786 = vld [vmem:[%s2781 + $0x40] sm:$0xff]
      %v2787 = vld [vmem:[%s2781 + $0x50] sm:$0xff]
      %v2788 = vld [vmem:[%s2781 + $0x60] sm:$0xff]
      %v2789 = vld [vmem:[%s2781 + $0x70] sm:$0xff]
      %v2790 = vlaneseq
      %v2791 = vshrl.u32 %v2790, 7
      %v2792 = vsub.s32 2, %v2791
      %v2793 = vrot.slane %v428, %v2792
      %v2794 = vmul.f32 %v2782, %v2793
      %v2795 = vmul.f32 %v2783, %v2793
      %v2796 = vmul.f32 %v2784, %v2793
      %v2797 = vmul.f32 %v2785, %v2793
      %v2798 = vmul.f32 %v2786, %v2793
      %v2799 = vmul.f32 %v2787, %v2793
      %v2800 = vmul.f32 %v2788, %v2793
      %v2801 = vmul.f32 %v2789, %v2793
      %v2802 = vadd.f32 %v2773, %v2794
      %v2803 = vadd.f32 %v2774, %v2795
      %v2804 = vadd.f32 %v2775, %v2796
      %v2805 = vadd.f32 %v2776, %v2797
      %v2806 = vadd.f32 %v2777, %v2798
      %v2807 = vadd.f32 %v2778, %v2799
      %v2808 = vadd.f32 %v2779, %v2800
      %v2809 = vadd.f32 %v2780, %v2801
      %v2810 = vld [vmem:[%s2781 + $0x1] sm:$0xff]
      %v2811 = vld [vmem:[%s2781 + $0x11] sm:$0xff]
      %v2812 = vld [vmem:[%s2781 + $0x21] sm:$0xff]
      %v2813 = vld [vmem:[%s2781 + $0x31] sm:$0xff]
      %v2814 = vld [vmem:[%s2781 + $0x41] sm:$0xff]
      %v2815 = vld [vmem:[%s2781 + $0x51] sm:$0xff]
      %v2816 = vld [vmem:[%s2781 + $0x61] sm:$0xff]
      %v2817 = vld [vmem:[%s2781 + $0x71] sm:$0xff]
      %v2818 = vlaneseq
      %v2819 = vshrl.u32 %v2818, 7
      %v2820 = vsub.s32 3, %v2819
      %v2821 = vrot.slane %v428, %v2820
      %v2822 = vmul.f32 %v2810, %v2821
      %v2823 = vmul.f32 %v2811, %v2821
      %v2824 = vmul.f32 %v2812, %v2821
      %v2825 = vmul.f32 %v2813, %v2821
      %v2826 = vmul.f32 %v2814, %v2821
      %v2827 = vmul.f32 %v2815, %v2821
      %v2828 = vmul.f32 %v2816, %v2821
      %v2829 = vmul.f32 %v2817, %v2821
      %v2830 = vadd.f32 %v2802, %v2822
      %v2831 = vadd.f32 %v2803, %v2823
      %v2832 = vadd.f32 %v2804, %v2824
      %v2833 = vadd.f32 %v2805, %v2825
      %v2834 = vadd.f32 %v2806, %v2826
      %v2835 = vadd.f32 %v2807, %v2827
      %v2836 = vadd.f32 %v2808, %v2828
      %v2837 = vadd.f32 %v2809, %v2829
      %v2838 = vmax.f32 %v2830, 0.0
      %v2839 = vmax.f32 %v2831, 0.0
      %v2840 = vmax.f32 %v2832, 0.0
      %v2841 = vmax.f32 %v2833, 0.0
      %v2842 = vmax.f32 %v2834, 0.0
      %v2843 = vmax.f32 %v2835, 0.0
      %v2844 = vmax.f32 %v2836, 0.0
      %v2845 = vmax.f32 %v2837, 0.0
      %2854 = vrot.lane.b32.xlu0 %v2838, 64
      %v2855 = vpop.permute.xlu0 %2854
      %2856 = vrot.lane.b32.xlu0 %v2839, 64
      %v2857 = vpop.permute.xlu0 %2856
      %2858 = vrot.lane.b32.xlu0 %v2840, 64
      %v2859 = vpop.permute.xlu0 %2858
      %2860 = vrot.lane.b32.xlu0 %v2841, 64
      %v2861 = vpop.permute.xlu0 %2860
      %2862 = vrot.lane.b32.xlu0 %v2842, 64
      %v2863 = vpop.permute.xlu0 %2862
      %2864 = vrot.lane.b32.xlu0 %v2843, 64
      %v2865 = vpop.permute.xlu0 %2864
      %2866 = vrot.lane.b32.xlu0 %v2844, 64
      %v2867 = vpop.permute.xlu0 %2866
      %2868 = vrot.lane.b32.xlu0 %v2845, 64
      %v2869 = vpop.permute.xlu0 %2868
      %v2878 = vmul.f32 %v2830, %v2855
      %v2879 = vmul.f32 %v2831, %v2857
      %v2880 = vmul.f32 %v2832, %v2859
      %v2881 = vmul.f32 %v2833, %v2861
      %v2882 = vmul.f32 %v2834, %v2863
      %v2883 = vmul.f32 %v2835, %v2865
      %v2884 = vmul.f32 %v2836, %v2867
      %v2885 = vmul.f32 %v2837, %v2869
      %v2886 = vlaneseq
      %v2887 = vshrl.u32 %v2886, 7
      %v2888 = vsub.s32 4, %v2887
      %v2889 = vrot.slane %v428, %v2888
      %v2890 = vmul.f32 %v549, %v2889
      %v2891 = vmul.f32 %v550, %v2889
      %v2892 = vmul.f32 %v551, %v2889
      %v2893 = vmul.f32 %v552, %v2889
      %v2894 = vmul.f32 %v553, %v2889
      %v2895 = vmul.f32 %v554, %v2889
      %v2896 = vmul.f32 %v555, %v2889
      %v2897 = vmul.f32 %v556, %v2889
      %v2898 = vadd.f32 %v2890, %v483
      %v2899 = vadd.f32 %v2891, %v483
      %v2900 = vadd.f32 %v2892, %v483
      %v2901 = vadd.f32 %v2893, %v483
      %v2902 = vadd.f32 %v2894, %v483
      %v2903 = vadd.f32 %v2895, %v483
      %v2904 = vadd.f32 %v2896, %v483
      %v2905 = vadd.f32 %v2897, %v483
      %v2906 = vlaneseq
      %v2907 = vshrl.u32 %v2906, 7
      %v2908 = vsub.s32 5, %v2907
      %v2909 = vrot.slane %v428, %v2908
      %v2910 = vmul.f32 %v693, %v2909
      %v2911 = vmul.f32 %v694, %v2909
      %v2912 = vmul.f32 %v695, %v2909
      %v2913 = vmul.f32 %v696, %v2909
      %v2914 = vmul.f32 %v697, %v2909
      %v2915 = vmul.f32 %v698, %v2909
      %v2916 = vmul.f32 %v699, %v2909
      %v2917 = vmul.f32 %v700, %v2909
      %v2918 = vadd.f32 %v2898, %v2910
      %v2919 = vadd.f32 %v2899, %v2911
      %v2920 = vadd.f32 %v2900, %v2912
      %v2921 = vadd.f32 %v2901, %v2913
      %v2922 = vadd.f32 %v2902, %v2914
      %v2923 = vadd.f32 %v2903, %v2915
      %v2924 = vadd.f32 %v2904, %v2916
      %v2925 = vadd.f32 %v2905, %v2917
      %v2926 = vlaneseq
      %v2927 = vshrl.u32 %v2926, 7
      %v2928 = vsub.s32 6, %v2927
      %v2929 = vrot.slane %v428, %v2928
      %v2930 = vmul.f32 %v2810, %v2929
      %v2931 = vmul.f32 %v2811, %v2929
      %v2932 = vmul.f32 %v2812, %v2929
      %v2933 = vmul.f32 %v2813, %v2929
      %v2934 = vmul.f32 %v2814, %v2929
      %v2935 = vmul.f32 %v2815, %v2929
      %v2936 = vmul.f32 %v2816, %v2929
      %v2937 = vmul.f32 %v2817, %v2929
      %v2938 = vadd.f32 %v2918, %v2930
      %v2939 = vadd.f32 %v2919, %v2931
      %v2940 = vadd.f32 %v2920, %v2932
      %v2941 = vadd.f32 %v2921, %v2933
      %v2942 = vadd.f32 %v2922, %v2934
      %v2943 = vadd.f32 %v2923, %v2935
      %v2944 = vadd.f32 %v2924, %v2936
      %v2945 = vadd.f32 %v2925, %v2937
      %v2946 = vld [vmem:[%s2781 + $0x2] sm:$0xff]
      %v2947 = vld [vmem:[%s2781 + $0x12] sm:$0xff]
      %v2948 = vld [vmem:[%s2781 + $0x22] sm:$0xff]
      %v2949 = vld [vmem:[%s2781 + $0x32] sm:$0xff]
      %v2950 = vld [vmem:[%s2781 + $0x42] sm:$0xff]
      %v2951 = vld [vmem:[%s2781 + $0x52] sm:$0xff]
      %v2952 = vld [vmem:[%s2781 + $0x62] sm:$0xff]
      %v2953 = vld [vmem:[%s2781 + $0x72] sm:$0xff]
      %v2954 = vlaneseq
      %v2955 = vshrl.u32 %v2954, 7
      %v2956 = vsub.s32 7, %v2955
      %v2957 = vrot.slane %v428, %v2956
      %v2958 = vmul.f32 %v2946, %v2957
      %v2959 = vmul.f32 %v2947, %v2957
      %v2960 = vmul.f32 %v2948, %v2957
      %v2961 = vmul.f32 %v2949, %v2957
      %v2962 = vmul.f32 %v2950, %v2957
      %v2963 = vmul.f32 %v2951, %v2957
      %v2964 = vmul.f32 %v2952, %v2957
      %v2965 = vmul.f32 %v2953, %v2957
      %v2966 = vadd.f32 %v2938, %v2958
      %v2967 = vadd.f32 %v2939, %v2959
      %v2968 = vadd.f32 %v2940, %v2960
      %v2969 = vadd.f32 %v2941, %v2961
      %v2970 = vadd.f32 %v2942, %v2962
      %v2971 = vadd.f32 %v2943, %v2963
      %v2972 = vadd.f32 %v2944, %v2964
      %v2973 = vadd.f32 %v2945, %v2965
      %v2974 = vmax.f32 %v2966, 0.0
      %v2975 = vmax.f32 %v2967, 0.0
      %v2976 = vmax.f32 %v2968, 0.0
      %v2977 = vmax.f32 %v2969, 0.0
      %v2978 = vmax.f32 %v2970, 0.0
      %v2979 = vmax.f32 %v2971, 0.0
      %v2980 = vmax.f32 %v2972, 0.0
      %v2981 = vmax.f32 %v2973, 0.0
      %2990 = vrot.lane.b32.xlu0 %v2974, 64
      %v2991 = vpop.permute.xlu0 %2990
      %2992 = vrot.lane.b32.xlu0 %v2975, 64
      %v2993 = vpop.permute.xlu0 %2992
      %2994 = vrot.lane.b32.xlu0 %v2976, 64
      %v2995 = vpop.permute.xlu0 %2994
      %2996 = vrot.lane.b32.xlu0 %v2977, 64
      %v2997 = vpop.permute.xlu0 %2996
      %2998 = vrot.lane.b32.xlu0 %v2978, 64
      %v2999 = vpop.permute.xlu0 %2998
      %3000 = vrot.lane.b32.xlu0 %v2979, 64
      %v3001 = vpop.permute.xlu0 %3000
      %3002 = vrot.lane.b32.xlu0 %v2980, 64
      %v3003 = vpop.permute.xlu0 %3002
      %3004 = vrot.lane.b32.xlu0 %v2981, 64
      %v3005 = vpop.permute.xlu0 %3004
      %v3014 = vmul.f32 %v2966, %v2991
      %v3015 = vmul.f32 %v2967, %v2993
      %v3016 = vmul.f32 %v2968, %v2995
      %v3017 = vmul.f32 %v2969, %v2997
      %v3018 = vmul.f32 %v2970, %v2999
      %v3019 = vmul.f32 %v2971, %v3001
      %v3020 = vmul.f32 %v2972, %v3003
      %v3021 = vmul.f32 %v2973, %v3005
      %v3030 = vcombine.high %v2878, %v2878
      %v3032 = vunpack.c.l.s4 1966171168
      %v3033 = vunpack.c.0.s8 %v3032
      %v3034 = vlaneseq
      %v3035 = vshrl.u32 %v3034, 7
      %v3036 = vsub.s32 %v3033, %v3035
      %v3037 = vrot.slane %v2878, %v3036
      %v3039 = vunpack.c.l.s4 1966171168
      %v3040 = vunpack.c.0.s8 %v3039
      %v3041 = vlaneseq
      %v3042 = vshrl.u32 %v3041, 7
      %v3043 = vsub.s32 %v3040, %v3042
      %v3044 = vrot.slane %v3030, %v3043
      %v3045 = vcombine.high %v3037, %v3037
      %v3046 = vcombine.high %v3044, %v3044
      %v3048 = vunpack.c.l.s4 1966171168
      %v3049 = vunpack.c.0.s8 %v3048
      %v3050 = vlaneseq
      %v3051 = vshrl.u32 %v3050, 7
      %v3052 = vsub.s32 %v3049, %v3051
      %v3053 = vrot.slane %v3037, %v3052
      %v3055 = vunpack.c.l.s4 1966171168
      %v3056 = vunpack.c.0.s8 %v3055
      %v3057 = vlaneseq
      %v3058 = vshrl.u32 %v3057, 7
      %v3059 = vsub.s32 %v3056, %v3058
      %v3060 = vrot.slane %v3044, %v3059
      %v3062 = vunpack.c.l.s4 1966171168
      %v3063 = vunpack.c.0.s8 %v3062
      %v3064 = vlaneseq
      %v3065 = vshrl.u32 %v3064, 7
      %v3066 = vsub.s32 %v3063, %v3065
      %v3067 = vrot.slane %v3045, %v3066
      %v3069 = vunpack.c.l.s4 1966171168
      %v3070 = vunpack.c.0.s8 %v3069
      %v3071 = vlaneseq
      %v3072 = vshrl.u32 %v3071, 7
      %v3073 = vsub.s32 %v3070, %v3072
      %v3074 = vrot.slane %v3046, %v3073
      %v3075 = vcombine.high %v3053, %v3053
      %v3076 = vcombine.high %v3060, %v3060
      %v3077 = vcombine.high %v3067, %v3067
      %v3078 = vcombine.high %v3074, %v3074
      %v3079 = vcombine.high %v2879, %v2879
      %v3081 = vunpack.c.l.s4 1966171168
      %v3082 = vunpack.c.0.s8 %v3081
      %v3083 = vlaneseq
      %v3084 = vshrl.u32 %v3083, 7
      %v3085 = vsub.s32 %v3082, %v3084
      %v3086 = vrot.slane %v2879, %v3085
      %v3088 = vunpack.c.l.s4 1966171168
      %v3089 = vunpack.c.0.s8 %v3088
      %v3090 = vlaneseq
      %v3091 = vshrl.u32 %v3090, 7
      %v3092 = vsub.s32 %v3089, %v3091
      %v3093 = vrot.slane %v3079, %v3092
      %v3094 = vcombine.high %v3086, %v3086
      %v3095 = vcombine.high %v3093, %v3093
      %v3097 = vunpack.c.l.s4 1966171168
      %v3098 = vunpack.c.0.s8 %v3097
      %v3099 = vlaneseq
      %v3100 = vshrl.u32 %v3099, 7
      %v3101 = vsub.s32 %v3098, %v3100
      %v3102 = vrot.slane %v3086, %v3101
      %v3104 = vunpack.c.l.s4 1966171168
      %v3105 = vunpack.c.0.s8 %v3104
      %v3106 = vlaneseq
      %v3107 = vshrl.u32 %v3106, 7
      %v3108 = vsub.s32 %v3105, %v3107
      %v3109 = vrot.slane %v3093, %v3108
      %v3111 = vunpack.c.l.s4 1966171168
      %v3112 = vunpack.c.0.s8 %v3111
      %v3113 = vlaneseq
      %v3114 = vshrl.u32 %v3113, 7
      %v3115 = vsub.s32 %v3112, %v3114
      %v3116 = vrot.slane %v3094, %v3115
      %v3118 = vunpack.c.l.s4 1966171168
      %v3119 = vunpack.c.0.s8 %v3118
      %v3120 = vlaneseq
      %v3121 = vshrl.u32 %v3120, 7
      %v3122 = vsub.s32 %v3119, %v3121
      %v3123 = vrot.slane %v3095, %v3122
      %v3124 = vcombine.high %v3102, %v3102
      %v3125 = vcombine.high %v3109, %v3109
      %v3126 = vcombine.high %v3116, %v3116
      %v3127 = vcombine.high %v3123, %v3123
      %v3128 = vcombine.high %v2880, %v2880
      %v3130 = vunpack.c.l.s4 1966171168
      %v3131 = vunpack.c.0.s8 %v3130
      %v3132 = vlaneseq
      %v3133 = vshrl.u32 %v3132, 7
      %v3134 = vsub.s32 %v3131, %v3133
      %v3135 = vrot.slane %v2880, %v3134
      %v3137 = vunpack.c.l.s4 1966171168
      %v3138 = vunpack.c.0.s8 %v3137
      %v3139 = vlaneseq
      %v3140 = vshrl.u32 %v3139, 7
      %v3141 = vsub.s32 %v3138, %v3140
      %v3142 = vrot.slane %v3128, %v3141
      %v3143 = vcombine.high %v3135, %v3135
      %v3144 = vcombine.high %v3142, %v3142
      %v3146 = vunpack.c.l.s4 1966171168
      %v3147 = vunpack.c.0.s8 %v3146
      %v3148 = vlaneseq
      %v3149 = vshrl.u32 %v3148, 7
      %v3150 = vsub.s32 %v3147, %v3149
      %v3151 = vrot.slane %v3135, %v3150
      %v3153 = vunpack.c.l.s4 1966171168
      %v3154 = vunpack.c.0.s8 %v3153
      %v3155 = vlaneseq
      %v3156 = vshrl.u32 %v3155, 7
      %v3157 = vsub.s32 %v3154, %v3156
      %v3158 = vrot.slane %v3142, %v3157
      %v3160 = vunpack.c.l.s4 1966171168
      %v3161 = vunpack.c.0.s8 %v3160
      %v3162 = vlaneseq
      %v3163 = vshrl.u32 %v3162, 7
      %v3164 = vsub.s32 %v3161, %v3163
      %v3165 = vrot.slane %v3143, %v3164
      %v3167 = vunpack.c.l.s4 1966171168
      %v3168 = vunpack.c.0.s8 %v3167
      %v3169 = vlaneseq
      %v3170 = vshrl.u32 %v3169, 7
      %v3171 = vsub.s32 %v3168, %v3170
      %v3172 = vrot.slane %v3144, %v3171
      %v3173 = vcombine.high %v3151, %v3151
      %v3174 = vcombine.high %v3158, %v3158
      %v3175 = vcombine.high %v3165, %v3165
      %v3176 = vcombine.high %v3172, %v3172
      %v3177 = vcombine.high %v2881, %v2881
      %v3179 = vunpack.c.l.s4 1966171168
      %v3180 = vunpack.c.0.s8 %v3179
      %v3181 = vlaneseq
      %v3182 = vshrl.u32 %v3181, 7
      %v3183 = vsub.s32 %v3180, %v3182
      %v3184 = vrot.slane %v2881, %v3183
      %v3186 = vunpack.c.l.s4 1966171168
      %v3187 = vunpack.c.0.s8 %v3186
      %v3188 = vlaneseq
      %v3189 = vshrl.u32 %v3188, 7
      %v3190 = vsub.s32 %v3187, %v3189
      %v3191 = vrot.slane %v3177, %v3190
      %v3192 = vcombine.high %v3184, %v3184
      %v3193 = vcombine.high %v3191, %v3191
      %v3195 = vunpack.c.l.s4 1966171168
      %v3196 = vunpack.c.0.s8 %v3195
      %v3197 = vlaneseq
      %v3198 = vshrl.u32 %v3197, 7
      %v3199 = vsub.s32 %v3196, %v3198
      %v3200 = vrot.slane %v3184, %v3199
      %v3202 = vunpack.c.l.s4 1966171168
      %v3203 = vunpack.c.0.s8 %v3202
      %v3204 = vlaneseq
      %v3205 = vshrl.u32 %v3204, 7
      %v3206 = vsub.s32 %v3203, %v3205
      %v3207 = vrot.slane %v3191, %v3206
      %v3209 = vunpack.c.l.s4 1966171168
      %v3210 = vunpack.c.0.s8 %v3209
      %v3211 = vlaneseq
      %v3212 = vshrl.u32 %v3211, 7
      %v3213 = vsub.s32 %v3210, %v3212
      %v3214 = vrot.slane %v3192, %v3213
      %v3216 = vunpack.c.l.s4 1966171168
      %v3217 = vunpack.c.0.s8 %v3216
      %v3218 = vlaneseq
      %v3219 = vshrl.u32 %v3218, 7
      %v3220 = vsub.s32 %v3217, %v3219
      %v3221 = vrot.slane %v3193, %v3220
      %v3222 = vcombine.high %v3200, %v3200
      %v3223 = vcombine.high %v3207, %v3207
      %v3224 = vcombine.high %v3214, %v3214
      %v3225 = vcombine.high %v3221, %v3221
      %v3226 = vcombine.high %v2882, %v2882
      %v3228 = vunpack.c.l.s4 1966171168
      %v3229 = vunpack.c.0.s8 %v3228
      %v3230 = vlaneseq
      %v3231 = vshrl.u32 %v3230, 7
      %v3232 = vsub.s32 %v3229, %v3231
      %v3233 = vrot.slane %v2882, %v3232
      %v3235 = vunpack.c.l.s4 1966171168
      %v3236 = vunpack.c.0.s8 %v3235
      %v3237 = vlaneseq
      %v3238 = vshrl.u32 %v3237, 7
      %v3239 = vsub.s32 %v3236, %v3238
      %v3240 = vrot.slane %v3226, %v3239
      %v3241 = vcombine.high %v3233, %v3233
      %v3242 = vcombine.high %v3240, %v3240
      %v3244 = vunpack.c.l.s4 1966171168
      %v3245 = vunpack.c.0.s8 %v3244
      %v3246 = vlaneseq
      %v3247 = vshrl.u32 %v3246, 7
      %v3248 = vsub.s32 %v3245, %v3247
      %v3249 = vrot.slane %v3233, %v3248
      %v3251 = vunpack.c.l.s4 1966171168
      %v3252 = vunpack.c.0.s8 %v3251
      %v3253 = vlaneseq
      %v3254 = vshrl.u32 %v3253, 7
      %v3255 = vsub.s32 %v3252, %v3254
      %v3256 = vrot.slane %v3240, %v3255
      %v3258 = vunpack.c.l.s4 1966171168
      %v3259 = vunpack.c.0.s8 %v3258
      %v3260 = vlaneseq
      %v3261 = vshrl.u32 %v3260, 7
      %v3262 = vsub.s32 %v3259, %v3261
      %v3263 = vrot.slane %v3241, %v3262
      %v3265 = vunpack.c.l.s4 1966171168
      %v3266 = vunpack.c.0.s8 %v3265
      %v3267 = vlaneseq
      %v3268 = vshrl.u32 %v3267, 7
      %v3269 = vsub.s32 %v3266, %v3268
      %v3270 = vrot.slane %v3242, %v3269
      %v3271 = vcombine.high %v3249, %v3249
      %v3272 = vcombine.high %v3256, %v3256
      %v3273 = vcombine.high %v3263, %v3263
      %v3274 = vcombine.high %v3270, %v3270
      %v3275 = vcombine.high %v2883, %v2883
      %v3277 = vunpack.c.l.s4 1966171168
      %v3278 = vunpack.c.0.s8 %v3277
      %v3279 = vlaneseq
      %v3280 = vshrl.u32 %v3279, 7
      %v3281 = vsub.s32 %v3278, %v3280
      %v3282 = vrot.slane %v2883, %v3281
      %v3284 = vunpack.c.l.s4 1966171168
      %v3285 = vunpack.c.0.s8 %v3284
      %v3286 = vlaneseq
      %v3287 = vshrl.u32 %v3286, 7
      %v3288 = vsub.s32 %v3285, %v3287
      %v3289 = vrot.slane %v3275, %v3288
      %v3290 = vcombine.high %v3282, %v3282
      %v3291 = vcombine.high %v3289, %v3289
      %v3293 = vunpack.c.l.s4 1966171168
      %v3294 = vunpack.c.0.s8 %v3293
      %v3295 = vlaneseq
      %v3296 = vshrl.u32 %v3295, 7
      %v3297 = vsub.s32 %v3294, %v3296
      %v3298 = vrot.slane %v3282, %v3297
      %v3300 = vunpack.c.l.s4 1966171168
      %v3301 = vunpack.c.0.s8 %v3300
      %v3302 = vlaneseq
      %v3303 = vshrl.u32 %v3302, 7
      %v3304 = vsub.s32 %v3301, %v3303
      %v3305 = vrot.slane %v3289, %v3304
      %v3307 = vunpack.c.l.s4 1966171168
      %v3308 = vunpack.c.0.s8 %v3307
      %v3309 = vlaneseq
      %v3310 = vshrl.u32 %v3309, 7
      %v3311 = vsub.s32 %v3308, %v3310
      %v3312 = vrot.slane %v3290, %v3311
      %v3314 = vunpack.c.l.s4 1966171168
      %v3315 = vunpack.c.0.s8 %v3314
      %v3316 = vlaneseq
      %v3317 = vshrl.u32 %v3316, 7
      %v3318 = vsub.s32 %v3315, %v3317
      %v3319 = vrot.slane %v3291, %v3318
      %v3320 = vcombine.high %v3298, %v3298
      %v3321 = vcombine.high %v3305, %v3305
      %v3322 = vcombine.high %v3312, %v3312
      %v3323 = vcombine.high %v3319, %v3319
      %v3324 = vcombine.high %v2884, %v2884
      %v3326 = vunpack.c.l.s4 1966171168
      %v3327 = vunpack.c.0.s8 %v3326
      %v3328 = vlaneseq
      %v3329 = vshrl.u32 %v3328, 7
      %v3330 = vsub.s32 %v3327, %v3329
      %v3331 = vrot.slane %v2884, %v3330
      %v3333 = vunpack.c.l.s4 1966171168
      %v3334 = vunpack.c.0.s8 %v3333
      %v3335 = vlaneseq
      %v3336 = vshrl.u32 %v3335, 7
      %v3337 = vsub.s32 %v3334, %v3336
      %v3338 = vrot.slane %v3324, %v3337
      %v3339 = vcombine.high %v3331, %v3331
      %v3340 = vcombine.high %v3338, %v3338
      %v3342 = vunpack.c.l.s4 1966171168
      %v3343 = vunpack.c.0.s8 %v3342
      %v3344 = vlaneseq
      %v3345 = vshrl.u32 %v3344, 7
      %v3346 = vsub.s32 %v3343, %v3345
      %v3347 = vrot.slane %v3331, %v3346
      %v3349 = vunpack.c.l.s4 1966171168
      %v3350 = vunpack.c.0.s8 %v3349
      %v3351 = vlaneseq
      %v3352 = vshrl.u32 %v3351, 7
      %v3353 = vsub.s32 %v3350, %v3352
      %v3354 = vrot.slane %v3338, %v3353
      %v3356 = vunpack.c.l.s4 1966171168
      %v3357 = vunpack.c.0.s8 %v3356
      %v3358 = vlaneseq
      %v3359 = vshrl.u32 %v3358, 7
      %v3360 = vsub.s32 %v3357, %v3359
      %v3361 = vrot.slane %v3339, %v3360
      %v3363 = vunpack.c.l.s4 1966171168
      %v3364 = vunpack.c.0.s8 %v3363
      %v3365 = vlaneseq
      %v3366 = vshrl.u32 %v3365, 7
      %v3367 = vsub.s32 %v3364, %v3366
      %v3368 = vrot.slane %v3340, %v3367
      %v3369 = vcombine.high %v3347, %v3347
      %v3370 = vcombine.high %v3354, %v3354
      %v3371 = vcombine.high %v3361, %v3361
      %v3372 = vcombine.high %v3368, %v3368
      %v3373 = vcombine.high %v2885, %v2885
      %v3375 = vunpack.c.l.s4 1966171168
      %v3376 = vunpack.c.0.s8 %v3375
      %v3377 = vlaneseq
      %v3378 = vshrl.u32 %v3377, 7
      %v3379 = vsub.s32 %v3376, %v3378
      %v3380 = vrot.slane %v2885, %v3379
      %v3382 = vunpack.c.l.s4 1966171168
      %v3383 = vunpack.c.0.s8 %v3382
      %v3384 = vlaneseq
      %v3385 = vshrl.u32 %v3384, 7
      %v3386 = vsub.s32 %v3383, %v3385
      %v3387 = vrot.slane %v3373, %v3386
      %v3388 = vcombine.high %v3380, %v3380
      %v3389 = vcombine.high %v3387, %v3387
      %v3391 = vunpack.c.l.s4 1966171168
      %v3392 = vunpack.c.0.s8 %v3391
      %v3393 = vlaneseq
      %v3394 = vshrl.u32 %v3393, 7
      %v3395 = vsub.s32 %v3392, %v3394
      %v3396 = vrot.slane %v3380, %v3395
      %v3398 = vunpack.c.l.s4 1966171168
      %v3399 = vunpack.c.0.s8 %v3398
      %v3400 = vlaneseq
      %v3401 = vshrl.u32 %v3400, 7
      %v3402 = vsub.s32 %v3399, %v3401
      %v3403 = vrot.slane %v3387, %v3402
      %v3405 = vunpack.c.l.s4 1966171168
      %v3406 = vunpack.c.0.s8 %v3405
      %v3407 = vlaneseq
      %v3408 = vshrl.u32 %v3407, 7
      %v3409 = vsub.s32 %v3406, %v3408
      %v3410 = vrot.slane %v3388, %v3409
      %v3412 = vunpack.c.l.s4 1966171168
      %v3413 = vunpack.c.0.s8 %v3412
      %v3414 = vlaneseq
      %v3415 = vshrl.u32 %v3414, 7
      %v3416 = vsub.s32 %v3413, %v3415
      %v3417 = vrot.slane %v3389, %v3416
      %v3418 = vcombine.high %v3396, %v3396
      %v3419 = vcombine.high %v3403, %v3403
      %v3420 = vcombine.high %v3410, %v3410
      %v3421 = vcombine.high %v3417, %v3417
      %v3422 = vlaneseq
      %v3423 = vshrl.u32 %v3422, 7
      %v3424 = vsub.s32 0, %v3423
      %v3425 = vrot.slane %v3053, %v3424
      %v3426 = vlaneseq
      %v3427 = vshrl.u32 %v3426, 7
      %v3428 = vsub.s32 0, %v3427
      %v3429 = vrot.slane %v3067, %v3428
      %v3430 = vlaneseq
      %v3431 = vshrl.u32 %v3430, 7
      %v3432 = vsub.s32 0, %v3431
      %v3433 = vrot.slane %v3075, %v3432
      %v3434 = vlaneseq
      %v3435 = vshrl.u32 %v3434, 7
      %v3436 = vsub.s32 0, %v3435
      %v3437 = vrot.slane %v3077, %v3436
      %v3438 = vlaneseq
      %v3439 = vshrl.u32 %v3438, 7
      %v3440 = vsub.s32 0, %v3439
      %v3441 = vrot.slane %v3060, %v3440
      %v3442 = vlaneseq
      %v3443 = vshrl.u32 %v3442, 7
      %v3444 = vsub.s32 0, %v3443
      %v3445 = vrot.slane %v3074, %v3444
      %v3446 = vlaneseq
      %v3447 = vshrl.u32 %v3446, 7
      %v3448 = vsub.s32 0, %v3447
      %v3449 = vrot.slane %v3076, %v3448
      %v3450 = vlaneseq
      %v3451 = vshrl.u32 %v3450, 7
      %v3452 = vsub.s32 0, %v3451
      %v3453 = vrot.slane %v3078, %v3452
      %v3454 = vlaneseq
      %v3455 = vshrl.u32 %v3454, 7
      %v3456 = vsub.s32 0, %v3455
      %v3457 = vrot.slane %v3102, %v3456
      %v3458 = vlaneseq
      %v3459 = vshrl.u32 %v3458, 7
      %v3460 = vsub.s32 0, %v3459
      %v3461 = vrot.slane %v3116, %v3460
      %v3462 = vlaneseq
      %v3463 = vshrl.u32 %v3462, 7
      %v3464 = vsub.s32 0, %v3463
      %v3465 = vrot.slane %v3124, %v3464
      %v3466 = vlaneseq
      %v3467 = vshrl.u32 %v3466, 7
      %v3468 = vsub.s32 0, %v3467
      %v3469 = vrot.slane %v3126, %v3468
      %v3470 = vlaneseq
      %v3471 = vshrl.u32 %v3470, 7
      %v3472 = vsub.s32 0, %v3471
      %v3473 = vrot.slane %v3109, %v3472
      %v3474 = vlaneseq
      %v3475 = vshrl.u32 %v3474, 7
      %v3476 = vsub.s32 0, %v3475
      %v3477 = vrot.slane %v3123, %v3476
      %v3478 = vlaneseq
      %v3479 = vshrl.u32 %v3478, 7
      %v3480 = vsub.s32 0, %v3479
      %v3481 = vrot.slane %v3125, %v3480
      %v3482 = vlaneseq
      %v3483 = vshrl.u32 %v3482, 7
      %v3484 = vsub.s32 0, %v3483
      %v3485 = vrot.slane %v3127, %v3484
      %v3486 = vlaneseq
      %v3487 = vshrl.u32 %v3486, 7
      %v3488 = vsub.s32 0, %v3487
      %v3489 = vrot.slane %v3151, %v3488
      %v3490 = vlaneseq
      %v3491 = vshrl.u32 %v3490, 7
      %v3492 = vsub.s32 0, %v3491
      %v3493 = vrot.slane %v3165, %v3492
      %v3494 = vlaneseq
      %v3495 = vshrl.u32 %v3494, 7
      %v3496 = vsub.s32 0, %v3495
      %v3497 = vrot.slane %v3173, %v3496
      %v3498 = vlaneseq
      %v3499 = vshrl.u32 %v3498, 7
      %v3500 = vsub.s32 0, %v3499
      %v3501 = vrot.slane %v3175, %v3500
      %v3502 = vlaneseq
      %v3503 = vshrl.u32 %v3502, 7
      %v3504 = vsub.s32 0, %v3503
      %v3505 = vrot.slane %v3158, %v3504
      %v3506 = vlaneseq
      %v3507 = vshrl.u32 %v3506, 7
      %v3508 = vsub.s32 0, %v3507
      %v3509 = vrot.slane %v3172, %v3508
      %v3510 = vlaneseq
      %v3511 = vshrl.u32 %v3510, 7
      %v3512 = vsub.s32 0, %v3511
      %v3513 = vrot.slane %v3174, %v3512
      %v3514 = vlaneseq
      %v3515 = vshrl.u32 %v3514, 7
      %v3516 = vsub.s32 0, %v3515
      %v3517 = vrot.slane %v3176, %v3516
      %v3518 = vlaneseq
      %v3519 = vshrl.u32 %v3518, 7
      %v3520 = vsub.s32 0, %v3519
      %v3521 = vrot.slane %v3200, %v3520
      %v3522 = vlaneseq
      %v3523 = vshrl.u32 %v3522, 7
      %v3524 = vsub.s32 0, %v3523
      %v3525 = vrot.slane %v3214, %v3524
      %v3526 = vlaneseq
      %v3527 = vshrl.u32 %v3526, 7
      %v3528 = vsub.s32 0, %v3527
      %v3529 = vrot.slane %v3222, %v3528
      %v3530 = vlaneseq
      %v3531 = vshrl.u32 %v3530, 7
      %v3532 = vsub.s32 0, %v3531
      %v3533 = vrot.slane %v3224, %v3532
      %v3534 = vlaneseq
      %v3535 = vshrl.u32 %v3534, 7
      %v3536 = vsub.s32 0, %v3535
      %v3537 = vrot.slane %v3207, %v3536
      %v3538 = vlaneseq
      %v3539 = vshrl.u32 %v3538, 7
      %v3540 = vsub.s32 0, %v3539
      %v3541 = vrot.slane %v3221, %v3540
      %v3542 = vlaneseq
      %v3543 = vshrl.u32 %v3542, 7
      %v3544 = vsub.s32 0, %v3543
      %v3545 = vrot.slane %v3223, %v3544
      %v3546 = vlaneseq
      %v3547 = vshrl.u32 %v3546, 7
      %v3548 = vsub.s32 0, %v3547
      %v3549 = vrot.slane %v3225, %v3548
      %v3550 = vlaneseq
      %v3551 = vshrl.u32 %v3550, 7
      %v3552 = vsub.s32 0, %v3551
      %v3553 = vrot.slane %v3249, %v3552
      %v3554 = vlaneseq
      %v3555 = vshrl.u32 %v3554, 7
      %v3556 = vsub.s32 0, %v3555
      %v3557 = vrot.slane %v3263, %v3556
      %v3558 = vlaneseq
      %v3559 = vshrl.u32 %v3558, 7
      %v3560 = vsub.s32 0, %v3559
      %v3561 = vrot.slane %v3271, %v3560
      %v3562 = vlaneseq
      %v3563 = vshrl.u32 %v3562, 7
      %v3564 = vsub.s32 0, %v3563
      %v3565 = vrot.slane %v3273, %v3564
      %v3566 = vlaneseq
      %v3567 = vshrl.u32 %v3566, 7
      %v3568 = vsub.s32 0, %v3567
      %v3569 = vrot.slane %v3256, %v3568
      %v3570 = vlaneseq
      %v3571 = vshrl.u32 %v3570, 7
      %v3572 = vsub.s32 0, %v3571
      %v3573 = vrot.slane %v3270, %v3572
      %v3574 = vlaneseq
      %v3575 = vshrl.u32 %v3574, 7
      %v3576 = vsub.s32 0, %v3575
      %v3577 = vrot.slane %v3272, %v3576
      %v3578 = vlaneseq
      %v3579 = vshrl.u32 %v3578, 7
      %v3580 = vsub.s32 0, %v3579
      %v3581 = vrot.slane %v3274, %v3580
      %v3582 = vlaneseq
      %v3583 = vshrl.u32 %v3582, 7
      %v3584 = vsub.s32 0, %v3583
      %v3585 = vrot.slane %v3298, %v3584
      %v3586 = vlaneseq
      %v3587 = vshrl.u32 %v3586, 7
      %v3588 = vsub.s32 0, %v3587
      %v3589 = vrot.slane %v3312, %v3588
      %v3590 = vlaneseq
      %v3591 = vshrl.u32 %v3590, 7
      %v3592 = vsub.s32 0, %v3591
      %v3593 = vrot.slane %v3320, %v3592
      %v3594 = vlaneseq
      %v3595 = vshrl.u32 %v3594, 7
      %v3596 = vsub.s32 0, %v3595
      %v3597 = vrot.slane %v3322, %v3596
      %v3598 = vlaneseq
      %v3599 = vshrl.u32 %v3598, 7
      %v3600 = vsub.s32 0, %v3599
      %v3601 = vrot.slane %v3305, %v3600
      %v3602 = vlaneseq
      %v3603 = vshrl.u32 %v3602, 7
      %v3604 = vsub.s32 0, %v3603
      %v3605 = vrot.slane %v3319, %v3604
      %v3606 = vlaneseq
      %v3607 = vshrl.u32 %v3606, 7
      %v3608 = vsub.s32 0, %v3607
      %v3609 = vrot.slane %v3321, %v3608
      %v3610 = vlaneseq
      %v3611 = vshrl.u32 %v3610, 7
      %v3612 = vsub.s32 0, %v3611
      %v3613 = vrot.slane %v3323, %v3612
      %v3614 = vlaneseq
      %v3615 = vshrl.u32 %v3614, 7
      %v3616 = vsub.s32 0, %v3615
      %v3617 = vrot.slane %v3347, %v3616
      %v3618 = vlaneseq
      %v3619 = vshrl.u32 %v3618, 7
      %v3620 = vsub.s32 0, %v3619
      %v3621 = vrot.slane %v3361, %v3620
      %v3622 = vlaneseq
      %v3623 = vshrl.u32 %v3622, 7
      %v3624 = vsub.s32 0, %v3623
      %v3625 = vrot.slane %v3369, %v3624
      %v3626 = vlaneseq
      %v3627 = vshrl.u32 %v3626, 7
      %v3628 = vsub.s32 0, %v3627
      %v3629 = vrot.slane %v3371, %v3628
      %v3630 = vlaneseq
      %v3631 = vshrl.u32 %v3630, 7
      %v3632 = vsub.s32 0, %v3631
      %v3633 = vrot.slane %v3354, %v3632
      %v3634 = vlaneseq
      %v3635 = vshrl.u32 %v3634, 7
      %v3636 = vsub.s32 0, %v3635
      %v3637 = vrot.slane %v3368, %v3636
      %v3638 = vlaneseq
      %v3639 = vshrl.u32 %v3638, 7
      %v3640 = vsub.s32 0, %v3639
      %v3641 = vrot.slane %v3370, %v3640
      %v3642 = vlaneseq
      %v3643 = vshrl.u32 %v3642, 7
      %v3644 = vsub.s32 0, %v3643
      %v3645 = vrot.slane %v3372, %v3644
      %v3646 = vlaneseq
      %v3647 = vshrl.u32 %v3646, 7
      %v3648 = vsub.s32 0, %v3647
      %v3649 = vrot.slane %v3396, %v3648
      %v3650 = vlaneseq
      %v3651 = vshrl.u32 %v3650, 7
      %v3652 = vsub.s32 0, %v3651
      %v3653 = vrot.slane %v3410, %v3652
      %v3654 = vlaneseq
      %v3655 = vshrl.u32 %v3654, 7
      %v3656 = vsub.s32 0, %v3655
      %v3657 = vrot.slane %v3418, %v3656
      %v3658 = vlaneseq
      %v3659 = vshrl.u32 %v3658, 7
      %v3660 = vsub.s32 0, %v3659
      %v3661 = vrot.slane %v3420, %v3660
      %v3662 = vlaneseq
      %v3663 = vshrl.u32 %v3662, 7
      %v3664 = vsub.s32 0, %v3663
      %v3665 = vrot.slane %v3403, %v3664
      %v3666 = vlaneseq
      %v3667 = vshrl.u32 %v3666, 7
      %v3668 = vsub.s32 0, %v3667
      %v3669 = vrot.slane %v3417, %v3668
      %v3670 = vlaneseq
      %v3671 = vshrl.u32 %v3670, 7
      %v3672 = vsub.s32 0, %v3671
      %v3673 = vrot.slane %v3419, %v3672
      %v3674 = vlaneseq
      %v3675 = vshrl.u32 %v3674, 7
      %v3676 = vsub.s32 0, %v3675
      %v3677 = vrot.slane %v3421, %v3676
      %v3686 = vcombine.high %v3014, %v3014
      %v3688 = vunpack.c.l.s4 1966171168
      %v3689 = vunpack.c.0.s8 %v3688
      %v3690 = vlaneseq
      %v3691 = vshrl.u32 %v3690, 7
      %v3692 = vsub.s32 %v3689, %v3691
      %v3693 = vrot.slane %v3014, %v3692
      %v3695 = vunpack.c.l.s4 1966171168
      %v3696 = vunpack.c.0.s8 %v3695
      %v3697 = vlaneseq
      %v3698 = vshrl.u32 %v3697, 7
      %v3699 = vsub.s32 %v3696, %v3698
      %v3700 = vrot.slane %v3686, %v3699
      %v3701 = vcombine.high %v3693, %v3693
      %v3702 = vcombine.high %v3700, %v3700
      %v3704 = vunpack.c.l.s4 1966171168
      %v3705 = vunpack.c.0.s8 %v3704
      %v3706 = vlaneseq
      %v3707 = vshrl.u32 %v3706, 7
      %v3708 = vsub.s32 %v3705, %v3707
      %v3709 = vrot.slane %v3693, %v3708
      %v3711 = vunpack.c.l.s4 1966171168
      %v3712 = vunpack.c.0.s8 %v3711
      %v3713 = vlaneseq
      %v3714 = vshrl.u32 %v3713, 7
      %v3715 = vsub.s32 %v3712, %v3714
      %v3716 = vrot.slane %v3700, %v3715
      %v3718 = vunpack.c.l.s4 1966171168
      %v3719 = vunpack.c.0.s8 %v3718
      %v3720 = vlaneseq
      %v3721 = vshrl.u32 %v3720, 7
      %v3722 = vsub.s32 %v3719, %v3721
      %v3723 = vrot.slane %v3701, %v3722
      %v3725 = vunpack.c.l.s4 1966171168
      %v3726 = vunpack.c.0.s8 %v3725
      %v3727 = vlaneseq
      %v3728 = vshrl.u32 %v3727, 7
      %v3729 = vsub.s32 %v3726, %v3728
      %v3730 = vrot.slane %v3702, %v3729
      %v3731 = vcombine.high %v3709, %v3709
      %v3732 = vcombine.high %v3716, %v3716
      %v3733 = vcombine.high %v3723, %v3723
      %v3734 = vcombine.high %v3730, %v3730
      %v3735 = vcombine.high %v3015, %v3015
      %v3737 = vunpack.c.l.s4 1966171168
      %v3738 = vunpack.c.0.s8 %v3737
      %v3739 = vlaneseq
      %v3740 = vshrl.u32 %v3739, 7
      %v3741 = vsub.s32 %v3738, %v3740
      %v3742 = vrot.slane %v3015, %v3741
      %v3744 = vunpack.c.l.s4 1966171168
      %v3745 = vunpack.c.0.s8 %v3744
      %v3746 = vlaneseq
      %v3747 = vshrl.u32 %v3746, 7
      %v3748 = vsub.s32 %v3745, %v3747
      %v3749 = vrot.slane %v3735, %v3748
      %v3750 = vcombine.high %v3742, %v3742
      %v3751 = vcombine.high %v3749, %v3749
      %v3753 = vunpack.c.l.s4 1966171168
      %v3754 = vunpack.c.0.s8 %v3753
      %v3755 = vlaneseq
      %v3756 = vshrl.u32 %v3755, 7
      %v3757 = vsub.s32 %v3754, %v3756
      %v3758 = vrot.slane %v3742, %v3757
      %v3760 = vunpack.c.l.s4 1966171168
      %v3761 = vunpack.c.0.s8 %v3760
      %v3762 = vlaneseq
      %v3763 = vshrl.u32 %v3762, 7
      %v3764 = vsub.s32 %v3761, %v3763
      %v3765 = vrot.slane %v3749, %v3764
      %v3767 = vunpack.c.l.s4 1966171168
      %v3768 = vunpack.c.0.s8 %v3767
      %v3769 = vlaneseq
      %v3770 = vshrl.u32 %v3769, 7
      %v3771 = vsub.s32 %v3768, %v3770
      %v3772 = vrot.slane %v3750, %v3771
      %v3774 = vunpack.c.l.s4 1966171168
      %v3775 = vunpack.c.0.s8 %v3774
      %v3776 = vlaneseq
      %v3777 = vshrl.u32 %v3776, 7
      %v3778 = vsub.s32 %v3775, %v3777
      %v3779 = vrot.slane %v3751, %v3778
      %v3780 = vcombine.high %v3758, %v3758
      %v3781 = vcombine.high %v3765, %v3765
      %v3782 = vcombine.high %v3772, %v3772
      %v3783 = vcombine.high %v3779, %v3779
      %v3784 = vcombine.high %v3016, %v3016
      %v3786 = vunpack.c.l.s4 1966171168
      %v3787 = vunpack.c.0.s8 %v3786
      %v3788 = vlaneseq
      %v3789 = vshrl.u32 %v3788, 7
      %v3790 = vsub.s32 %v3787, %v3789
      %v3791 = vrot.slane %v3016, %v3790
      %v3793 = vunpack.c.l.s4 1966171168
      %v3794 = vunpack.c.0.s8 %v3793
      %v3795 = vlaneseq
      %v3796 = vshrl.u32 %v3795, 7
      %v3797 = vsub.s32 %v3794, %v3796
      %v3798 = vrot.slane %v3784, %v3797
      %v3799 = vcombine.high %v3791, %v3791
      %v3800 = vcombine.high %v3798, %v3798
      %v3802 = vunpack.c.l.s4 1966171168
      %v3803 = vunpack.c.0.s8 %v3802
      %v3804 = vlaneseq
      %v3805 = vshrl.u32 %v3804, 7
      %v3806 = vsub.s32 %v3803, %v3805
      %v3807 = vrot.slane %v3791, %v3806
      %v3809 = vunpack.c.l.s4 1966171168
      %v3810 = vunpack.c.0.s8 %v3809
      %v3811 = vlaneseq
      %v3812 = vshrl.u32 %v3811, 7
      %v3813 = vsub.s32 %v3810, %v3812
      %v3814 = vrot.slane %v3798, %v3813
      %v3816 = vunpack.c.l.s4 1966171168
      %v3817 = vunpack.c.0.s8 %v3816
      %v3818 = vlaneseq
      %v3819 = vshrl.u32 %v3818, 7
      %v3820 = vsub.s32 %v3817, %v3819
      %v3821 = vrot.slane %v3799, %v3820
      %v3823 = vunpack.c.l.s4 1966171168
      %v3824 = vunpack.c.0.s8 %v3823
      %v3825 = vlaneseq
      %v3826 = vshrl.u32 %v3825, 7
      %v3827 = vsub.s32 %v3824, %v3826
      %v3828 = vrot.slane %v3800, %v3827
      %v3829 = vcombine.high %v3807, %v3807
      %v3830 = vcombine.high %v3814, %v3814
      %v3831 = vcombine.high %v3821, %v3821
      %v3832 = vcombine.high %v3828, %v3828
      %v3833 = vcombine.high %v3017, %v3017
      %v3835 = vunpack.c.l.s4 1966171168
      %v3836 = vunpack.c.0.s8 %v3835
      %v3837 = vlaneseq
      %v3838 = vshrl.u32 %v3837, 7
      %v3839 = vsub.s32 %v3836, %v3838
      %v3840 = vrot.slane %v3017, %v3839
      %v3842 = vunpack.c.l.s4 1966171168
      %v3843 = vunpack.c.0.s8 %v3842
      %v3844 = vlaneseq
      %v3845 = vshrl.u32 %v3844, 7
      %v3846 = vsub.s32 %v3843, %v3845
      %v3847 = vrot.slane %v3833, %v3846
      %v3848 = vcombine.high %v3840, %v3840
      %v3849 = vcombine.high %v3847, %v3847
      %v3851 = vunpack.c.l.s4 1966171168
      %v3852 = vunpack.c.0.s8 %v3851
      %v3853 = vlaneseq
      %v3854 = vshrl.u32 %v3853, 7
      %v3855 = vsub.s32 %v3852, %v3854
      %v3856 = vrot.slane %v3840, %v3855
      %v3858 = vunpack.c.l.s4 1966171168
      %v3859 = vunpack.c.0.s8 %v3858
      %v3860 = vlaneseq
      %v3861 = vshrl.u32 %v3860, 7
      %v3862 = vsub.s32 %v3859, %v3861
      %v3863 = vrot.slane %v3847, %v3862
      %v3865 = vunpack.c.l.s4 1966171168
      %v3866 = vunpack.c.0.s8 %v3865
      %v3867 = vlaneseq
      %v3868 = vshrl.u32 %v3867, 7
      %v3869 = vsub.s32 %v3866, %v3868
      %v3870 = vrot.slane %v3848, %v3869
      %v3872 = vunpack.c.l.s4 1966171168
      %v3873 = vunpack.c.0.s8 %v3872
      %v3874 = vlaneseq
      %v3875 = vshrl.u32 %v3874, 7
      %v3876 = vsub.s32 %v3873, %v3875
      %v3877 = vrot.slane %v3849, %v3876
      %v3878 = vcombine.high %v3856, %v3856
      %v3879 = vcombine.high %v3863, %v3863
      %v3880 = vcombine.high %v3870, %v3870
      %v3881 = vcombine.high %v3877, %v3877
      %v3882 = vcombine.high %v3018, %v3018
      %v3884 = vunpack.c.l.s4 1966171168
      %v3885 = vunpack.c.0.s8 %v3884
      %v3886 = vlaneseq
      %v3887 = vshrl.u32 %v3886, 7
      %v3888 = vsub.s32 %v3885, %v3887
      %v3889 = vrot.slane %v3018, %v3888
      %v3891 = vunpack.c.l.s4 1966171168
      %v3892 = vunpack.c.0.s8 %v3891
      %v3893 = vlaneseq
      %v3894 = vshrl.u32 %v3893, 7
      %v3895 = vsub.s32 %v3892, %v3894
      %v3896 = vrot.slane %v3882, %v3895
      %v3897 = vcombine.high %v3889, %v3889
      %v3898 = vcombine.high %v3896, %v3896
      %v3900 = vunpack.c.l.s4 1966171168
      %v3901 = vunpack.c.0.s8 %v3900
      %v3902 = vlaneseq
      %v3903 = vshrl.u32 %v3902, 7
      %v3904 = vsub.s32 %v3901, %v3903
      %v3905 = vrot.slane %v3889, %v3904
      %v3907 = vunpack.c.l.s4 1966171168
      %v3908 = vunpack.c.0.s8 %v3907
      %v3909 = vlaneseq
      %v3910 = vshrl.u32 %v3909, 7
      %v3911 = vsub.s32 %v3908, %v3910
      %v3912 = vrot.slane %v3896, %v3911
      %v3914 = vunpack.c.l.s4 1966171168
      %v3915 = vunpack.c.0.s8 %v3914
      %v3916 = vlaneseq
      %v3917 = vshrl.u32 %v3916, 7
      %v3918 = vsub.s32 %v3915, %v3917
      %v3919 = vrot.slane %v3897, %v3918
      %v3921 = vunpack.c.l.s4 1966171168
      %v3922 = vunpack.c.0.s8 %v3921
      %v3923 = vlaneseq
      %v3924 = vshrl.u32 %v3923, 7
      %v3925 = vsub.s32 %v3922, %v3924
      %v3926 = vrot.slane %v3898, %v3925
      %v3927 = vcombine.high %v3905, %v3905
      %v3928 = vcombine.high %v3912, %v3912
      %v3929 = vcombine.high %v3919, %v3919
      %v3930 = vcombine.high %v3926, %v3926
      %v3931 = vcombine.high %v3019, %v3019
      %v3933 = vunpack.c.l.s4 1966171168
      %v3934 = vunpack.c.0.s8 %v3933
      %v3935 = vlaneseq
      %v3936 = vshrl.u32 %v3935, 7
      %v3937 = vsub.s32 %v3934, %v3936
      %v3938 = vrot.slane %v3019, %v3937
      %v3940 = vunpack.c.l.s4 1966171168
      %v3941 = vunpack.c.0.s8 %v3940
      %v3942 = vlaneseq
      %v3943 = vshrl.u32 %v3942, 7
      %v3944 = vsub.s32 %v3941, %v3943
      %v3945 = vrot.slane %v3931, %v3944
      %v3946 = vcombine.high %v3938, %v3938
      %v3947 = vcombine.high %v3945, %v3945
      %v3949 = vunpack.c.l.s4 1966171168
      %v3950 = vunpack.c.0.s8 %v3949
      %v3951 = vlaneseq
      %v3952 = vshrl.u32 %v3951, 7
      %v3953 = vsub.s32 %v3950, %v3952
      %v3954 = vrot.slane %v3938, %v3953
      %v3956 = vunpack.c.l.s4 1966171168
      %v3957 = vunpack.c.0.s8 %v3956
      %v3958 = vlaneseq
      %v3959 = vshrl.u32 %v3958, 7
      %v3960 = vsub.s32 %v3957, %v3959
      %v3961 = vrot.slane %v3945, %v3960
      %v3963 = vunpack.c.l.s4 1966171168
      %v3964 = vunpack.c.0.s8 %v3963
      %v3965 = vlaneseq
      %v3966 = vshrl.u32 %v3965, 7
      %v3967 = vsub.s32 %v3964, %v3966
      %v3968 = vrot.slane %v3946, %v3967
      %v3970 = vunpack.c.l.s4 1966171168
      %v3971 = vunpack.c.0.s8 %v3970
      %v3972 = vlaneseq
      %v3973 = vshrl.u32 %v3972, 7
      %v3974 = vsub.s32 %v3971, %v3973
      %v3975 = vrot.slane %v3947, %v3974
      %v3976 = vcombine.high %v3954, %v3954
      %v3977 = vcombine.high %v3961, %v3961
      %v3978 = vcombine.high %v3968, %v3968
      %v3979 = vcombine.high %v3975, %v3975
      %v3980 = vcombine.high %v3020, %v3020
      %v3982 = vunpack.c.l.s4 1966171168
      %v3983 = vunpack.c.0.s8 %v3982
      %v3984 = vlaneseq
      %v3985 = vshrl.u32 %v3984, 7
      %v3986 = vsub.s32 %v3983, %v3985
      %v3987 = vrot.slane %v3020, %v3986
      %v3989 = vunpack.c.l.s4 1966171168
      %v3990 = vunpack.c.0.s8 %v3989
      %v3991 = vlaneseq
      %v3992 = vshrl.u32 %v3991, 7
      %v3993 = vsub.s32 %v3990, %v3992
      %v3994 = vrot.slane %v3980, %v3993
      %v3995 = vcombine.high %v3987, %v3987
      %v3996 = vcombine.high %v3994, %v3994
      %v3998 = vunpack.c.l.s4 1966171168
      %v3999 = vunpack.c.0.s8 %v3998
      %v4000 = vlaneseq
      %v4001 = vshrl.u32 %v4000, 7
      %v4002 = vsub.s32 %v3999, %v4001
      %v4003 = vrot.slane %v3987, %v4002
      %v4005 = vunpack.c.l.s4 1966171168
      %v4006 = vunpack.c.0.s8 %v4005
      %v4007 = vlaneseq
      %v4008 = vshrl.u32 %v4007, 7
      %v4009 = vsub.s32 %v4006, %v4008
      %v4010 = vrot.slane %v3994, %v4009
      %v4012 = vunpack.c.l.s4 1966171168
      %v4013 = vunpack.c.0.s8 %v4012
      %v4014 = vlaneseq
      %v4015 = vshrl.u32 %v4014, 7
      %v4016 = vsub.s32 %v4013, %v4015
      %v4017 = vrot.slane %v3995, %v4016
      %v4019 = vunpack.c.l.s4 1966171168
      %v4020 = vunpack.c.0.s8 %v4019
      %v4021 = vlaneseq
      %v4022 = vshrl.u32 %v4021, 7
      %v4023 = vsub.s32 %v4020, %v4022
      %v4024 = vrot.slane %v3996, %v4023
      %v4025 = vcombine.high %v4003, %v4003
      %v4026 = vcombine.high %v4010, %v4010
      %v4027 = vcombine.high %v4017, %v4017
      %v4028 = vcombine.high %v4024, %v4024
      %v4029 = vcombine.high %v3021, %v3021
      %v4031 = vunpack.c.l.s4 1966171168
      %v4032 = vunpack.c.0.s8 %v4031
      %v4033 = vlaneseq
      %v4034 = vshrl.u32 %v4033, 7
      %v4035 = vsub.s32 %v4032, %v4034
      %v4036 = vrot.slane %v3021, %v4035
      %v4038 = vunpack.c.l.s4 1966171168
      %v4039 = vunpack.c.0.s8 %v4038
      %v4040 = vlaneseq
      %v4041 = vshrl.u32 %v4040, 7
      %v4042 = vsub.s32 %v4039, %v4041
      %v4043 = vrot.slane %v4029, %v4042
      %v4044 = vcombine.high %v4036, %v4036
      %v4045 = vcombine.high %v4043, %v4043
      %v4047 = vunpack.c.l.s4 1966171168
      %v4048 = vunpack.c.0.s8 %v4047
      %v4049 = vlaneseq
      %v4050 = vshrl.u32 %v4049, 7
      %v4051 = vsub.s32 %v4048, %v4050
      %v4052 = vrot.slane %v4036, %v4051
      %v4054 = vunpack.c.l.s4 1966171168
      %v4055 = vunpack.c.0.s8 %v4054
      %v4056 = vlaneseq
      %v4057 = vshrl.u32 %v4056, 7
      %v4058 = vsub.s32 %v4055, %v4057
      %v4059 = vrot.slane %v4043, %v4058
      %v4061 = vunpack.c.l.s4 1966171168
      %v4062 = vunpack.c.0.s8 %v4061
      %v4063 = vlaneseq
      %v4064 = vshrl.u32 %v4063, 7
      %v4065 = vsub.s32 %v4062, %v4064
      %v4066 = vrot.slane %v4044, %v4065
      %v4068 = vunpack.c.l.s4 1966171168
      %v4069 = vunpack.c.0.s8 %v4068
      %v4070 = vlaneseq
      %v4071 = vshrl.u32 %v4070, 7
      %v4072 = vsub.s32 %v4069, %v4071
      %v4073 = vrot.slane %v4045, %v4072
      %v4074 = vcombine.high %v4052, %v4052
      %v4075 = vcombine.high %v4059, %v4059
      %v4076 = vcombine.high %v4066, %v4066
      %v4077 = vcombine.high %v4073, %v4073
      %v4078 = vlaneseq
      %v4079 = vshrl.u32 %v4078, 7
      %v4080 = vsub.s32 0, %v4079
      %v4081 = vrot.slane %v3709, %v4080
      %v4082 = vlaneseq
      %v4083 = vshrl.u32 %v4082, 7
      %v4084 = vsub.s32 0, %v4083
      %v4085 = vrot.slane %v3723, %v4084
      %v4086 = vlaneseq
      %v4087 = vshrl.u32 %v4086, 7
      %v4088 = vsub.s32 0, %v4087
      %v4089 = vrot.slane %v3731, %v4088
      %v4090 = vlaneseq
      %v4091 = vshrl.u32 %v4090, 7
      %v4092 = vsub.s32 0, %v4091
      %v4093 = vrot.slane %v3733, %v4092
      %v4094 = vlaneseq
      %v4095 = vshrl.u32 %v4094, 7
      %v4096 = vsub.s32 0, %v4095
      %v4097 = vrot.slane %v3716, %v4096
      %v4098 = vlaneseq
      %v4099 = vshrl.u32 %v4098, 7
      %v4100 = vsub.s32 0, %v4099
      %v4101 = vrot.slane %v3730, %v4100
      %v4102 = vlaneseq
      %v4103 = vshrl.u32 %v4102, 7
      %v4104 = vsub.s32 0, %v4103
      %v4105 = vrot.slane %v3732, %v4104
      %v4106 = vlaneseq
      %v4107 = vshrl.u32 %v4106, 7
      %v4108 = vsub.s32 0, %v4107
      %v4109 = vrot.slane %v3734, %v4108
      %v4110 = vlaneseq
      %v4111 = vshrl.u32 %v4110, 7
      %v4112 = vsub.s32 0, %v4111
      %v4113 = vrot.slane %v3758, %v4112
      %v4114 = vlaneseq
      %v4115 = vshrl.u32 %v4114, 7
      %v4116 = vsub.s32 0, %v4115
      %v4117 = vrot.slane %v3772, %v4116
      %v4118 = vlaneseq
      %v4119 = vshrl.u32 %v4118, 7
      %v4120 = vsub.s32 0, %v4119
      %v4121 = vrot.slane %v3780, %v4120
      %v4122 = vlaneseq
      %v4123 = vshrl.u32 %v4122, 7
      %v4124 = vsub.s32 0, %v4123
      %v4125 = vrot.slane %v3782, %v4124
      %v4126 = vlaneseq
      %v4127 = vshrl.u32 %v4126, 7
      %v4128 = vsub.s32 0, %v4127
      %v4129 = vrot.slane %v3765, %v4128
      %v4130 = vlaneseq
      %v4131 = vshrl.u32 %v4130, 7
      %v4132 = vsub.s32 0, %v4131
      %v4133 = vrot.slane %v3779, %v4132
      %v4134 = vlaneseq
      %v4135 = vshrl.u32 %v4134, 7
      %v4136 = vsub.s32 0, %v4135
      %v4137 = vrot.slane %v3781, %v4136
      %v4138 = vlaneseq
      %v4139 = vshrl.u32 %v4138, 7
      %v4140 = vsub.s32 0, %v4139
      %v4141 = vrot.slane %v3783, %v4140
      %v4142 = vlaneseq
      %v4143 = vshrl.u32 %v4142, 7
      %v4144 = vsub.s32 0, %v4143
      %v4145 = vrot.slane %v3807, %v4144
      %v4146 = vlaneseq
      %v4147 = vshrl.u32 %v4146, 7
      %v4148 = vsub.s32 0, %v4147
      %v4149 = vrot.slane %v3821, %v4148
      %v4150 = vlaneseq
      %v4151 = vshrl.u32 %v4150, 7
      %v4152 = vsub.s32 0, %v4151
      %v4153 = vrot.slane %v3829, %v4152
      %v4154 = vlaneseq
      %v4155 = vshrl.u32 %v4154, 7
      %v4156 = vsub.s32 0, %v4155
      %v4157 = vrot.slane %v3831, %v4156
      %v4158 = vlaneseq
      %v4159 = vshrl.u32 %v4158, 7
      %v4160 = vsub.s32 0, %v4159
      %v4161 = vrot.slane %v3814, %v4160
      %v4162 = vlaneseq
      %v4163 = vshrl.u32 %v4162, 7
      %v4164 = vsub.s32 0, %v4163
      %v4165 = vrot.slane %v3828, %v4164
      %v4166 = vlaneseq
      %v4167 = vshrl.u32 %v4166, 7
      %v4168 = vsub.s32 0, %v4167
      %v4169 = vrot.slane %v3830, %v4168
      %v4170 = vlaneseq
      %v4171 = vshrl.u32 %v4170, 7
      %v4172 = vsub.s32 0, %v4171
      %v4173 = vrot.slane %v3832, %v4172
      %v4174 = vlaneseq
      %v4175 = vshrl.u32 %v4174, 7
      %v4176 = vsub.s32 0, %v4175
      %v4177 = vrot.slane %v3856, %v4176
      %v4178 = vlaneseq
      %v4179 = vshrl.u32 %v4178, 7
      %v4180 = vsub.s32 0, %v4179
      %v4181 = vrot.slane %v3870, %v4180
      %v4182 = vlaneseq
      %v4183 = vshrl.u32 %v4182, 7
      %v4184 = vsub.s32 0, %v4183
      %v4185 = vrot.slane %v3878, %v4184
      %v4186 = vlaneseq
      %v4187 = vshrl.u32 %v4186, 7
      %v4188 = vsub.s32 0, %v4187
      %v4189 = vrot.slane %v3880, %v4188
      %v4190 = vlaneseq
      %v4191 = vshrl.u32 %v4190, 7
      %v4192 = vsub.s32 0, %v4191
      %v4193 = vrot.slane %v3863, %v4192
      %v4194 = vlaneseq
      %v4195 = vshrl.u32 %v4194, 7
      %v4196 = vsub.s32 0, %v4195
      %v4197 = vrot.slane %v3877, %v4196
      %v4198 = vlaneseq
      %v4199 = vshrl.u32 %v4198, 7
      %v4200 = vsub.s32 0, %v4199
      %v4201 = vrot.slane %v3879, %v4200
      %v4202 = vlaneseq
      %v4203 = vshrl.u32 %v4202, 7
      %v4204 = vsub.s32 0, %v4203
      %v4205 = vrot.slane %v3881, %v4204
      %v4206 = vlaneseq
      %v4207 = vshrl.u32 %v4206, 7
      %v4208 = vsub.s32 0, %v4207
      %v4209 = vrot.slane %v3905, %v4208
      %v4210 = vlaneseq
      %v4211 = vshrl.u32 %v4210, 7
      %v4212 = vsub.s32 0, %v4211
      %v4213 = vrot.slane %v3919, %v4212
      %v4214 = vlaneseq
      %v4215 = vshrl.u32 %v4214, 7
      %v4216 = vsub.s32 0, %v4215
      %v4217 = vrot.slane %v3927, %v4216
      %v4218 = vlaneseq
      %v4219 = vshrl.u32 %v4218, 7
      %v4220 = vsub.s32 0, %v4219
      %v4221 = vrot.slane %v3929, %v4220
      %v4222 = vlaneseq
      %v4223 = vshrl.u32 %v4222, 7
      %v4224 = vsub.s32 0, %v4223
      %v4225 = vrot.slane %v3912, %v4224
      %v4226 = vlaneseq
      %v4227 = vshrl.u32 %v4226, 7
      %v4228 = vsub.s32 0, %v4227
      %v4229 = vrot.slane %v3926, %v4228
      %v4230 = vlaneseq
      %v4231 = vshrl.u32 %v4230, 7
      %v4232 = vsub.s32 0, %v4231
      %v4233 = vrot.slane %v3928, %v4232
      %v4234 = vlaneseq
      %v4235 = vshrl.u32 %v4234, 7
      %v4236 = vsub.s32 0, %v4235
      %v4237 = vrot.slane %v3930, %v4236
      %v4238 = vlaneseq
      %v4239 = vshrl.u32 %v4238, 7
      %v4240 = vsub.s32 0, %v4239
      %v4241 = vrot.slane %v3954, %v4240
      %v4242 = vlaneseq
      %v4243 = vshrl.u32 %v4242, 7
      %v4244 = vsub.s32 0, %v4243
      %v4245 = vrot.slane %v3968, %v4244
      %v4246 = vlaneseq
      %v4247 = vshrl.u32 %v4246, 7
      %v4248 = vsub.s32 0, %v4247
      %v4249 = vrot.slane %v3976, %v4248
      %v4250 = vlaneseq
      %v4251 = vshrl.u32 %v4250, 7
      %v4252 = vsub.s32 0, %v4251
      %v4253 = vrot.slane %v3978, %v4252
      %v4254 = vlaneseq
      %v4255 = vshrl.u32 %v4254, 7
      %v4256 = vsub.s32 0, %v4255
      %v4257 = vrot.slane %v3961, %v4256
      %v4258 = vlaneseq
      %v4259 = vshrl.u32 %v4258, 7
      %v4260 = vsub.s32 0, %v4259
      %v4261 = vrot.slane %v3975, %v4260
      %v4262 = vlaneseq
      %v4263 = vshrl.u32 %v4262, 7
      %v4264 = vsub.s32 0, %v4263
      %v4265 = vrot.slane %v3977, %v4264
      %v4266 = vlaneseq
      %v4267 = vshrl.u32 %v4266, 7
      %v4268 = vsub.s32 0, %v4267
      %v4269 = vrot.slane %v3979, %v4268
      %v4270 = vlaneseq
      %v4271 = vshrl.u32 %v4270, 7
      %v4272 = vsub.s32 0, %v4271
      %v4273 = vrot.slane %v4003, %v4272
      %v4274 = vlaneseq
      %v4275 = vshrl.u32 %v4274, 7
      %v4276 = vsub.s32 0, %v4275
      %v4277 = vrot.slane %v4017, %v4276
      %v4278 = vlaneseq
      %v4279 = vshrl.u32 %v4278, 7
      %v4280 = vsub.s32 0, %v4279
      %v4281 = vrot.slane %v4025, %v4280
      %v4282 = vlaneseq
      %v4283 = vshrl.u32 %v4282, 7
      %v4284 = vsub.s32 0, %v4283
      %v4285 = vrot.slane %v4027, %v4284
      %v4286 = vlaneseq
      %v4287 = vshrl.u32 %v4286, 7
      %v4288 = vsub.s32 0, %v4287
      %v4289 = vrot.slane %v4010, %v4288
      %v4290 = vlaneseq
      %v4291 = vshrl.u32 %v4290, 7
      %v4292 = vsub.s32 0, %v4291
      %v4293 = vrot.slane %v4024, %v4292
      %v4294 = vlaneseq
      %v4295 = vshrl.u32 %v4294, 7
      %v4296 = vsub.s32 0, %v4295
      %v4297 = vrot.slane %v4026, %v4296
      %v4298 = vlaneseq
      %v4299 = vshrl.u32 %v4298, 7
      %v4300 = vsub.s32 0, %v4299
      %v4301 = vrot.slane %v4028, %v4300
      %v4302 = vlaneseq
      %v4303 = vshrl.u32 %v4302, 7
      %v4304 = vsub.s32 0, %v4303
      %v4305 = vrot.slane %v4052, %v4304
      %v4306 = vlaneseq
      %v4307 = vshrl.u32 %v4306, 7
      %v4308 = vsub.s32 0, %v4307
      %v4309 = vrot.slane %v4066, %v4308
      %v4310 = vlaneseq
      %v4311 = vshrl.u32 %v4310, 7
      %v4312 = vsub.s32 0, %v4311
      %v4313 = vrot.slane %v4074, %v4312
      %v4314 = vlaneseq
      %v4315 = vshrl.u32 %v4314, 7
      %v4316 = vsub.s32 0, %v4315
      %v4317 = vrot.slane %v4076, %v4316
      %v4318 = vlaneseq
      %v4319 = vshrl.u32 %v4318, 7
      %v4320 = vsub.s32 0, %v4319
      %v4321 = vrot.slane %v4059, %v4320
      %v4322 = vlaneseq
      %v4323 = vshrl.u32 %v4322, 7
      %v4324 = vsub.s32 0, %v4323
      %v4325 = vrot.slane %v4073, %v4324
      %v4326 = vlaneseq
      %v4327 = vshrl.u32 %v4326, 7
      %v4328 = vsub.s32 0, %v4327
      %v4329 = vrot.slane %v4075, %v4328
      %v4330 = vlaneseq
      %v4331 = vshrl.u32 %v4330, 7
      %v4332 = vsub.s32 0, %v4331
      %v4333 = vrot.slane %v4077, %v4332
      %v4334 = vcombine.low %v3425, %v3429
      %v4335 = vcombine.low %v3433, %v3437
      %v4337 = vunpack.c.l.s4 1983009808
      %v4338 = vunpack.c.0.s8 %v4337
      %v4339 = vlaneseq
      %v4340 = vshrl.u32 %v4339, 7
      %v4341 = vsub.s32 %v4338, %v4340
      %v4342 = vrot.slane %v4334, %v4341
      %v4344 = vunpack.c.l.s4 1983009808
      %v4345 = vunpack.c.0.s8 %v4344
      %v4346 = vlaneseq
      %v4347 = vshrl.u32 %v4346, 7
      %v4348 = vsub.s32 %v4345, %v4347
      %v4349 = vrot.slane %v4335, %v4348
      %v4350 = vcombine.low %v4342, %v4349
      %v4351 = vcombine.low %v3441, %v3445
      %v4352 = vcombine.low %v3449, %v3453
      %v4354 = vunpack.c.l.s4 1983009808
      %v4355 = vunpack.c.0.s8 %v4354
      %v4356 = vlaneseq
      %v4357 = vshrl.u32 %v4356, 7
      %v4358 = vsub.s32 %v4355, %v4357
      %v4359 = vrot.slane %v4351, %v4358
      %v4361 = vunpack.c.l.s4 1983009808
      %v4362 = vunpack.c.0.s8 %v4361
      %v4363 = vlaneseq
      %v4364 = vshrl.u32 %v4363, 7
      %v4365 = vsub.s32 %v4362, %v4364
      %v4366 = vrot.slane %v4352, %v4365
      %v4367 = vcombine.low %v4359, %v4366
      %v4368 = vcombine.low %v3457, %v3461
      %v4369 = vcombine.low %v3465, %v3469
      %v4371 = vunpack.c.l.s4 1983009808
      %v4372 = vunpack.c.0.s8 %v4371
      %v4373 = vlaneseq
      %v4374 = vshrl.u32 %v4373, 7
      %v4375 = vsub.s32 %v4372, %v4374
      %v4376 = vrot.slane %v4368, %v4375
      %v4378 = vunpack.c.l.s4 1983009808
      %v4379 = vunpack.c.0.s8 %v4378
      %v4380 = vlaneseq
      %v4381 = vshrl.u32 %v4380, 7
      %v4382 = vsub.s32 %v4379, %v4381
      %v4383 = vrot.slane %v4369, %v4382
      %v4384 = vcombine.low %v4376, %v4383
      %v4385 = vcombine.low %v3473, %v3477
      %v4386 = vcombine.low %v3481, %v3485
      %v4388 = vunpack.c.l.s4 1983009808
      %v4389 = vunpack.c.0.s8 %v4388
      %v4390 = vlaneseq
      %v4391 = vshrl.u32 %v4390, 7
      %v4392 = vsub.s32 %v4389, %v4391
      %v4393 = vrot.slane %v4385, %v4392
      %v4395 = vunpack.c.l.s4 1983009808
      %v4396 = vunpack.c.0.s8 %v4395
      %v4397 = vlaneseq
      %v4398 = vshrl.u32 %v4397, 7
      %v4399 = vsub.s32 %v4396, %v4398
      %v4400 = vrot.slane %v4386, %v4399
      %v4401 = vcombine.low %v4393, %v4400
      %v4402 = vcombine.low %v3489, %v3493
      %v4403 = vcombine.low %v3497, %v3501
      %v4405 = vunpack.c.l.s4 1983009808
      %v4406 = vunpack.c.0.s8 %v4405
      %v4407 = vlaneseq
      %v4408 = vshrl.u32 %v4407, 7
      %v4409 = vsub.s32 %v4406, %v4408
      %v4410 = vrot.slane %v4402, %v4409
      %v4412 = vunpack.c.l.s4 1983009808
      %v4413 = vunpack.c.0.s8 %v4412
      %v4414 = vlaneseq
      %v4415 = vshrl.u32 %v4414, 7
      %v4416 = vsub.s32 %v4413, %v4415
      %v4417 = vrot.slane %v4403, %v4416
      %v4418 = vcombine.low %v4410, %v4417
      %v4419 = vcombine.low %v3505, %v3509
      %v4420 = vcombine.low %v3513, %v3517
      %v4422 = vunpack.c.l.s4 1983009808
      %v4423 = vunpack.c.0.s8 %v4422
      %v4424 = vlaneseq
      %v4425 = vshrl.u32 %v4424, 7
      %v4426 = vsub.s32 %v4423, %v4425
      %v4427 = vrot.slane %v4419, %v4426
      %v4429 = vunpack.c.l.s4 1983009808
      %v4430 = vunpack.c.0.s8 %v4429
      %v4431 = vlaneseq
      %v4432 = vshrl.u32 %v4431, 7
      %v4433 = vsub.s32 %v4430, %v4432
      %v4434 = vrot.slane %v4420, %v4433
      %v4435 = vcombine.low %v4427, %v4434
      %v4436 = vcombine.low %v3521, %v3525
      %v4437 = vcombine.low %v3529, %v3533
      %v4439 = vunpack.c.l.s4 1983009808
      %v4440 = vunpack.c.0.s8 %v4439
      %v4441 = vlaneseq
      %v4442 = vshrl.u32 %v4441, 7
      %v4443 = vsub.s32 %v4440, %v4442
      %v4444 = vrot.slane %v4436, %v4443
      %v4446 = vunpack.c.l.s4 1983009808
      %v4447 = vunpack.c.0.s8 %v4446
      %v4448 = vlaneseq
      %v4449 = vshrl.u32 %v4448, 7
      %v4450 = vsub.s32 %v4447, %v4449
      %v4451 = vrot.slane %v4437, %v4450
      %v4452 = vcombine.low %v4444, %v4451
      %v4453 = vcombine.low %v3537, %v3541
      %v4454 = vcombine.low %v3545, %v3549
      %v4456 = vunpack.c.l.s4 1983009808
      %v4457 = vunpack.c.0.s8 %v4456
      %v4458 = vlaneseq
      %v4459 = vshrl.u32 %v4458, 7
      %v4460 = vsub.s32 %v4457, %v4459
      %v4461 = vrot.slane %v4453, %v4460
      %v4463 = vunpack.c.l.s4 1983009808
      %v4464 = vunpack.c.0.s8 %v4463
      %v4465 = vlaneseq
      %v4466 = vshrl.u32 %v4465, 7
      %v4467 = vsub.s32 %v4464, %v4466
      %v4468 = vrot.slane %v4454, %v4467
      %v4469 = vcombine.low %v4461, %v4468
      %v4470 = vcombine.low %v3553, %v3557
      %v4471 = vcombine.low %v3561, %v3565
      %v4473 = vunpack.c.l.s4 1983009808
      %v4474 = vunpack.c.0.s8 %v4473
      %v4475 = vlaneseq
      %v4476 = vshrl.u32 %v4475, 7
      %v4477 = vsub.s32 %v4474, %v4476
      %v4478 = vrot.slane %v4470, %v4477
      %v4480 = vunpack.c.l.s4 1983009808
      %v4481 = vunpack.c.0.s8 %v4480
      %v4482 = vlaneseq
      %v4483 = vshrl.u32 %v4482, 7
      %v4484 = vsub.s32 %v4481, %v4483
      %v4485 = vrot.slane %v4471, %v4484
      %v4486 = vcombine.low %v4478, %v4485
      %v4487 = vcombine.low %v3569, %v3573
      %v4488 = vcombine.low %v3577, %v3581
      %v4490 = vunpack.c.l.s4 1983009808
      %v4491 = vunpack.c.0.s8 %v4490
      %v4492 = vlaneseq
      %v4493 = vshrl.u32 %v4492, 7
      %v4494 = vsub.s32 %v4491, %v4493
      %v4495 = vrot.slane %v4487, %v4494
      %v4497 = vunpack.c.l.s4 1983009808
      %v4498 = vunpack.c.0.s8 %v4497
      %v4499 = vlaneseq
      %v4500 = vshrl.u32 %v4499, 7
      %v4501 = vsub.s32 %v4498, %v4500
      %v4502 = vrot.slane %v4488, %v4501
      %v4503 = vcombine.low %v4495, %v4502
      %v4504 = vcombine.low %v3585, %v3589
      %v4505 = vcombine.low %v3593, %v3597
      %v4507 = vunpack.c.l.s4 1983009808
      %v4508 = vunpack.c.0.s8 %v4507
      %v4509 = vlaneseq
      %v4510 = vshrl.u32 %v4509, 7
      %v4511 = vsub.s32 %v4508, %v4510
      %v4512 = vrot.slane %v4504, %v4511
      %v4514 = vunpack.c.l.s4 1983009808
      %v4515 = vunpack.c.0.s8 %v4514
      %v4516 = vlaneseq
      %v4517 = vshrl.u32 %v4516, 7
      %v4518 = vsub.s32 %v4515, %v4517
      %v4519 = vrot.slane %v4505, %v4518
      %v4520 = vcombine.low %v4512, %v4519
      %v4521 = vcombine.low %v3601, %v3605
      %v4522 = vcombine.low %v3609, %v3613
      %v4524 = vunpack.c.l.s4 1983009808
      %v4525 = vunpack.c.0.s8 %v4524
      %v4526 = vlaneseq
      %v4527 = vshrl.u32 %v4526, 7
      %v4528 = vsub.s32 %v4525, %v4527
      %v4529 = vrot.slane %v4521, %v4528
      %v4531 = vunpack.c.l.s4 1983009808
      %v4532 = vunpack.c.0.s8 %v4531
      %v4533 = vlaneseq
      %v4534 = vshrl.u32 %v4533, 7
      %v4535 = vsub.s32 %v4532, %v4534
      %v4536 = vrot.slane %v4522, %v4535
      %v4537 = vcombine.low %v4529, %v4536
      %v4538 = vcombine.low %v3617, %v3621
      %v4539 = vcombine.low %v3625, %v3629
      %v4541 = vunpack.c.l.s4 1983009808
      %v4542 = vunpack.c.0.s8 %v4541
      %v4543 = vlaneseq
      %v4544 = vshrl.u32 %v4543, 7
      %v4545 = vsub.s32 %v4542, %v4544
      %v4546 = vrot.slane %v4538, %v4545
      %v4548 = vunpack.c.l.s4 1983009808
      %v4549 = vunpack.c.0.s8 %v4548
      %v4550 = vlaneseq
      %v4551 = vshrl.u32 %v4550, 7
      %v4552 = vsub.s32 %v4549, %v4551
      %v4553 = vrot.slane %v4539, %v4552
      %v4554 = vcombine.low %v4546, %v4553
      %v4555 = vcombine.low %v3633, %v3637
      %v4556 = vcombine.low %v3641, %v3645
      %v4558 = vunpack.c.l.s4 1983009808
      %v4559 = vunpack.c.0.s8 %v4558
      %v4560 = vlaneseq
      %v4561 = vshrl.u32 %v4560, 7
      %v4562 = vsub.s32 %v4559, %v4561
      %v4563 = vrot.slane %v4555, %v4562
      %v4565 = vunpack.c.l.s4 1983009808
      %v4566 = vunpack.c.0.s8 %v4565
      %v4567 = vlaneseq
      %v4568 = vshrl.u32 %v4567, 7
      %v4569 = vsub.s32 %v4566, %v4568
      %v4570 = vrot.slane %v4556, %v4569
      %v4571 = vcombine.low %v4563, %v4570
      %v4572 = vcombine.low %v3649, %v3653
      %v4573 = vcombine.low %v3657, %v3661
      %v4575 = vunpack.c.l.s4 1983009808
      %v4576 = vunpack.c.0.s8 %v4575
      %v4577 = vlaneseq
      %v4578 = vshrl.u32 %v4577, 7
      %v4579 = vsub.s32 %v4576, %v4578
      %v4580 = vrot.slane %v4572, %v4579
      %v4582 = vunpack.c.l.s4 1983009808
      %v4583 = vunpack.c.0.s8 %v4582
      %v4584 = vlaneseq
      %v4585 = vshrl.u32 %v4584, 7
      %v4586 = vsub.s32 %v4583, %v4585
      %v4587 = vrot.slane %v4573, %v4586
      %v4588 = vcombine.low %v4580, %v4587
      %v4589 = vcombine.low %v3665, %v3669
      %v4590 = vcombine.low %v3673, %v3677
      %v4592 = vunpack.c.l.s4 1983009808
      %v4593 = vunpack.c.0.s8 %v4592
      %v4594 = vlaneseq
      %v4595 = vshrl.u32 %v4594, 7
      %v4596 = vsub.s32 %v4593, %v4595
      %v4597 = vrot.slane %v4589, %v4596
      %v4599 = vunpack.c.l.s4 1983009808
      %v4600 = vunpack.c.0.s8 %v4599
      %v4601 = vlaneseq
      %v4602 = vshrl.u32 %v4601, 7
      %v4603 = vsub.s32 %v4600, %v4602
      %v4604 = vrot.slane %v4590, %v4603
      %v4605 = vcombine.low %v4597, %v4604
      %4606 = vrot.lane.b32.xlu0 %v4350, 64
      %v4607 = vpop.permute.xlu0 %4606
      %4608 = vrot.lane.b32.xlu0 %v4367, 64
      %v4609 = vpop.permute.xlu0 %4608
      %4610 = vrot.lane.b32.xlu0 %v4384, 64
      %v4611 = vpop.permute.xlu0 %4610
      %4612 = vrot.lane.b32.xlu0 %v4401, 64
      %v4613 = vpop.permute.xlu0 %4612
      %4614 = vrot.lane.b32.xlu0 %v4418, 64
      %v4615 = vpop.permute.xlu0 %4614
      %4616 = vrot.lane.b32.xlu0 %v4435, 64
      %v4617 = vpop.permute.xlu0 %4616
      %4618 = vrot.lane.b32.xlu0 %v4452, 64
      %v4619 = vpop.permute.xlu0 %4618
      %4620 = vrot.lane.b32.xlu0 %v4469, 64
      %v4621 = vpop.permute.xlu0 %4620
      %4622 = vrot.lane.b32.xlu0 %v4486, 64
      %v4623 = vpop.permute.xlu0 %4622
      %4624 = vrot.lane.b32.xlu0 %v4503, 64
      %v4625 = vpop.permute.xlu0 %4624
      %4626 = vrot.lane.b32.xlu0 %v4520, 64
      %v4627 = vpop.permute.xlu0 %4626
      %4628 = vrot.lane.b32.xlu0 %v4537, 64
      %v4629 = vpop.permute.xlu0 %4628
      %4630 = vrot.lane.b32.xlu0 %v4554, 64
      %v4631 = vpop.permute.xlu0 %4630
      %4632 = vrot.lane.b32.xlu0 %v4571, 64
      %v4633 = vpop.permute.xlu0 %4632
      %4634 = vrot.lane.b32.xlu0 %v4588, 64
      %v4635 = vpop.permute.xlu0 %4634
      %4636 = vrot.lane.b32.xlu0 %v4605, 64
      %v4637 = vpop.permute.xlu0 %4636
      %v4654 = vcombine.low %v4081, %v4085
      %v4655 = vcombine.low %v4089, %v4093
      %v4657 = vunpack.c.l.s4 1983009808
      %v4658 = vunpack.c.0.s8 %v4657
      %v4659 = vlaneseq
      %v4660 = vshrl.u32 %v4659, 7
      %v4661 = vsub.s32 %v4658, %v4660
      %v4662 = vrot.slane %v4654, %v4661
      %v4664 = vunpack.c.l.s4 1983009808
      %v4665 = vunpack.c.0.s8 %v4664
      %v4666 = vlaneseq
      %v4667 = vshrl.u32 %v4666, 7
      %v4668 = vsub.s32 %v4665, %v4667
      %v4669 = vrot.slane %v4655, %v4668
      %v4670 = vcombine.low %v4662, %v4669
      %v4671 = vcombine.low %v4097, %v4101
      %v4672 = vcombine.low %v4105, %v4109
      %v4674 = vunpack.c.l.s4 1983009808
      %v4675 = vunpack.c.0.s8 %v4674
      %v4676 = vlaneseq
      %v4677 = vshrl.u32 %v4676, 7
      %v4678 = vsub.s32 %v4675, %v4677
      %v4679 = vrot.slane %v4671, %v4678
      %v4681 = vunpack.c.l.s4 1983009808
      %v4682 = vunpack.c.0.s8 %v4681
      %v4683 = vlaneseq
      %v4684 = vshrl.u32 %v4683, 7
      %v4685 = vsub.s32 %v4682, %v4684
      %v4686 = vrot.slane %v4672, %v4685
      %v4687 = vcombine.low %v4679, %v4686
      %v4688 = vcombine.low %v4113, %v4117
      %v4689 = vcombine.low %v4121, %v4125
      %v4691 = vunpack.c.l.s4 1983009808
      %v4692 = vunpack.c.0.s8 %v4691
      %v4693 = vlaneseq
      %v4694 = vshrl.u32 %v4693, 7
      %v4695 = vsub.s32 %v4692, %v4694
      %v4696 = vrot.slane %v4688, %v4695
      %v4698 = vunpack.c.l.s4 1983009808
      %v4699 = vunpack.c.0.s8 %v4698
      %v4700 = vlaneseq
      %v4701 = vshrl.u32 %v4700, 7
      %v4702 = vsub.s32 %v4699, %v4701
      %v4703 = vrot.slane %v4689, %v4702
      %v4704 = vcombine.low %v4696, %v4703
      %v4705 = vcombine.low %v4129, %v4133
      %v4706 = vcombine.low %v4137, %v4141
      %v4708 = vunpack.c.l.s4 1983009808
      %v4709 = vunpack.c.0.s8 %v4708
      %v4710 = vlaneseq
      %v4711 = vshrl.u32 %v4710, 7
      %v4712 = vsub.s32 %v4709, %v4711
      %v4713 = vrot.slane %v4705, %v4712
      %v4715 = vunpack.c.l.s4 1983009808
      %v4716 = vunpack.c.0.s8 %v4715
      %v4717 = vlaneseq
      %v4718 = vshrl.u32 %v4717, 7
      %v4719 = vsub.s32 %v4716, %v4718
      %v4720 = vrot.slane %v4706, %v4719
      %v4721 = vcombine.low %v4713, %v4720
      %v4722 = vcombine.low %v4145, %v4149
      %v4723 = vcombine.low %v4153, %v4157
      %v4725 = vunpack.c.l.s4 1983009808
      %v4726 = vunpack.c.0.s8 %v4725
      %v4727 = vlaneseq
      %v4728 = vshrl.u32 %v4727, 7
      %v4729 = vsub.s32 %v4726, %v4728
      %v4730 = vrot.slane %v4722, %v4729
      %v4732 = vunpack.c.l.s4 1983009808
      %v4733 = vunpack.c.0.s8 %v4732
      %v4734 = vlaneseq
      %v4735 = vshrl.u32 %v4734, 7
      %v4736 = vsub.s32 %v4733, %v4735
      %v4737 = vrot.slane %v4723, %v4736
      %v4738 = vcombine.low %v4730, %v4737
      %v4739 = vcombine.low %v4161, %v4165
      %v4740 = vcombine.low %v4169, %v4173
      %v4742 = vunpack.c.l.s4 1983009808
      %v4743 = vunpack.c.0.s8 %v4742
      %v4744 = vlaneseq
      %v4745 = vshrl.u32 %v4744, 7
      %v4746 = vsub.s32 %v4743, %v4745
      %v4747 = vrot.slane %v4739, %v4746
      %v4749 = vunpack.c.l.s4 1983009808
      %v4750 = vunpack.c.0.s8 %v4749
      %v4751 = vlaneseq
      %v4752 = vshrl.u32 %v4751, 7
      %v4753 = vsub.s32 %v4750, %v4752
      %v4754 = vrot.slane %v4740, %v4753
      %v4755 = vcombine.low %v4747, %v4754
      %v4756 = vcombine.low %v4177, %v4181
      %v4757 = vcombine.low %v4185, %v4189
      %v4759 = vunpack.c.l.s4 1983009808
      %v4760 = vunpack.c.0.s8 %v4759
      %v4761 = vlaneseq
      %v4762 = vshrl.u32 %v4761, 7
      %v4763 = vsub.s32 %v4760, %v4762
      %v4764 = vrot.slane %v4756, %v4763
      %v4766 = vunpack.c.l.s4 1983009808
      %v4767 = vunpack.c.0.s8 %v4766
      %v4768 = vlaneseq
      %v4769 = vshrl.u32 %v4768, 7
      %v4770 = vsub.s32 %v4767, %v4769
      %v4771 = vrot.slane %v4757, %v4770
      %v4772 = vcombine.low %v4764, %v4771
      %v4773 = vcombine.low %v4193, %v4197
      %v4774 = vcombine.low %v4201, %v4205
      %v4776 = vunpack.c.l.s4 1983009808
      %v4777 = vunpack.c.0.s8 %v4776
      %v4778 = vlaneseq
      %v4779 = vshrl.u32 %v4778, 7
      %v4780 = vsub.s32 %v4777, %v4779
      %v4781 = vrot.slane %v4773, %v4780
      %v4783 = vunpack.c.l.s4 1983009808
      %v4784 = vunpack.c.0.s8 %v4783
      %v4785 = vlaneseq
      %v4786 = vshrl.u32 %v4785, 7
      %v4787 = vsub.s32 %v4784, %v4786
      %v4788 = vrot.slane %v4774, %v4787
      %v4789 = vcombine.low %v4781, %v4788
      %v4790 = vcombine.low %v4209, %v4213
      %v4791 = vcombine.low %v4217, %v4221
      %v4793 = vunpack.c.l.s4 1983009808
      %v4794 = vunpack.c.0.s8 %v4793
      %v4795 = vlaneseq
      %v4796 = vshrl.u32 %v4795, 7
      %v4797 = vsub.s32 %v4794, %v4796
      %v4798 = vrot.slane %v4790, %v4797
      %v4800 = vunpack.c.l.s4 1983009808
      %v4801 = vunpack.c.0.s8 %v4800
      %v4802 = vlaneseq
      %v4803 = vshrl.u32 %v4802, 7
      %v4804 = vsub.s32 %v4801, %v4803
      %v4805 = vrot.slane %v4791, %v4804
      %v4806 = vcombine.low %v4798, %v4805
      %v4807 = vcombine.low %v4225, %v4229
      %v4808 = vcombine.low %v4233, %v4237
      %v4810 = vunpack.c.l.s4 1983009808
      %v4811 = vunpack.c.0.s8 %v4810
      %v4812 = vlaneseq
      %v4813 = vshrl.u32 %v4812, 7
      %v4814 = vsub.s32 %v4811, %v4813
      %v4815 = vrot.slane %v4807, %v4814
      %v4817 = vunpack.c.l.s4 1983009808
      %v4818 = vunpack.c.0.s8 %v4817
      %v4819 = vlaneseq
      %v4820 = vshrl.u32 %v4819, 7
      %v4821 = vsub.s32 %v4818, %v4820
      %v4822 = vrot.slane %v4808, %v4821
      %v4823 = vcombine.low %v4815, %v4822
      %v4824 = vcombine.low %v4241, %v4245
      %v4825 = vcombine.low %v4249, %v4253
      %v4827 = vunpack.c.l.s4 1983009808
      %v4828 = vunpack.c.0.s8 %v4827
      %v4829 = vlaneseq
      %v4830 = vshrl.u32 %v4829, 7
      %v4831 = vsub.s32 %v4828, %v4830
      %v4832 = vrot.slane %v4824, %v4831
      %v4834 = vunpack.c.l.s4 1983009808
      %v4835 = vunpack.c.0.s8 %v4834
      %v4836 = vlaneseq
      %v4837 = vshrl.u32 %v4836, 7
      %v4838 = vsub.s32 %v4835, %v4837
      %v4839 = vrot.slane %v4825, %v4838
      %v4840 = vcombine.low %v4832, %v4839
      %v4841 = vcombine.low %v4257, %v4261
      %v4842 = vcombine.low %v4265, %v4269
      %v4844 = vunpack.c.l.s4 1983009808
      %v4845 = vunpack.c.0.s8 %v4844
      %v4846 = vlaneseq
      %v4847 = vshrl.u32 %v4846, 7
      %v4848 = vsub.s32 %v4845, %v4847
      %v4849 = vrot.slane %v4841, %v4848
      %v4851 = vunpack.c.l.s4 1983009808
      %v4852 = vunpack.c.0.s8 %v4851
      %v4853 = vlaneseq
      %v4854 = vshrl.u32 %v4853, 7
      %v4855 = vsub.s32 %v4852, %v4854
      %v4856 = vrot.slane %v4842, %v4855
      %v4857 = vcombine.low %v4849, %v4856
      %v4858 = vcombine.low %v4273, %v4277
      %v4859 = vcombine.low %v4281, %v4285
      %v4861 = vunpack.c.l.s4 1983009808
      %v4862 = vunpack.c.0.s8 %v4861
      %v4863 = vlaneseq
      %v4864 = vshrl.u32 %v4863, 7
      %v4865 = vsub.s32 %v4862, %v4864
      %v4866 = vrot.slane %v4858, %v4865
      %v4868 = vunpack.c.l.s4 1983009808
      %v4869 = vunpack.c.0.s8 %v4868
      %v4870 = vlaneseq
      %v4871 = vshrl.u32 %v4870, 7
      %v4872 = vsub.s32 %v4869, %v4871
      %v4873 = vrot.slane %v4859, %v4872
      %v4874 = vcombine.low %v4866, %v4873
      %v4875 = vcombine.low %v4289, %v4293
      %v4876 = vcombine.low %v4297, %v4301
      %v4878 = vunpack.c.l.s4 1983009808
      %v4879 = vunpack.c.0.s8 %v4878
      %v4880 = vlaneseq
      %v4881 = vshrl.u32 %v4880, 7
      %v4882 = vsub.s32 %v4879, %v4881
      %v4883 = vrot.slane %v4875, %v4882
      %v4885 = vunpack.c.l.s4 1983009808
      %v4886 = vunpack.c.0.s8 %v4885
      %v4887 = vlaneseq
      %v4888 = vshrl.u32 %v4887, 7
      %v4889 = vsub.s32 %v4886, %v4888
      %v4890 = vrot.slane %v4876, %v4889
      %v4891 = vcombine.low %v4883, %v4890
      %v4892 = vcombine.low %v4305, %v4309
      %v4893 = vcombine.low %v4313, %v4317
      %v4895 = vunpack.c.l.s4 1983009808
      %v4896 = vunpack.c.0.s8 %v4895
      %v4897 = vlaneseq
      %v4898 = vshrl.u32 %v4897, 7
      %v4899 = vsub.s32 %v4896, %v4898
      %v4900 = vrot.slane %v4892, %v4899
      %v4902 = vunpack.c.l.s4 1983009808
      %v4903 = vunpack.c.0.s8 %v4902
      %v4904 = vlaneseq
      %v4905 = vshrl.u32 %v4904, 7
      %v4906 = vsub.s32 %v4903, %v4905
      %v4907 = vrot.slane %v4893, %v4906
      %v4908 = vcombine.low %v4900, %v4907
      %v4909 = vcombine.low %v4321, %v4325
      %v4910 = vcombine.low %v4329, %v4333
      %v4912 = vunpack.c.l.s4 1983009808
      %v4913 = vunpack.c.0.s8 %v4912
      %v4914 = vlaneseq
      %v4915 = vshrl.u32 %v4914, 7
      %v4916 = vsub.s32 %v4913, %v4915
      %v4917 = vrot.slane %v4909, %v4916
      %v4919 = vunpack.c.l.s4 1983009808
      %v4920 = vunpack.c.0.s8 %v4919
      %v4921 = vlaneseq
      %v4922 = vshrl.u32 %v4921, 7
      %v4923 = vsub.s32 %v4920, %v4922
      %v4924 = vrot.slane %v4910, %v4923
      %v4925 = vcombine.low %v4917, %v4924
      %4926 = vrot.lane.b32.xlu0 %v4670, 64
      %v4927 = vpop.permute.xlu0 %4926
      %4928 = vrot.lane.b32.xlu0 %v4687, 64
      %v4929 = vpop.permute.xlu0 %4928
      %4930 = vrot.lane.b32.xlu0 %v4704, 64
      %v4931 = vpop.permute.xlu0 %4930
      %4932 = vrot.lane.b32.xlu0 %v4721, 64
      %v4933 = vpop.permute.xlu0 %4932
      %4934 = vrot.lane.b32.xlu0 %v4738, 64
      %v4935 = vpop.permute.xlu0 %4934
      %4936 = vrot.lane.b32.xlu0 %v4755, 64
      %v4937 = vpop.permute.xlu0 %4936
      %4938 = vrot.lane.b32.xlu0 %v4772, 64
      %v4939 = vpop.permute.xlu0 %4938
      %4940 = vrot.lane.b32.xlu0 %v4789, 64
      %v4941 = vpop.permute.xlu0 %4940
      %4942 = vrot.lane.b32.xlu0 %v4806, 64
      %v4943 = vpop.permute.xlu0 %4942
      %4944 = vrot.lane.b32.xlu0 %v4823, 64
      %v4945 = vpop.permute.xlu0 %4944
      %4946 = vrot.lane.b32.xlu0 %v4840, 64
      %v4947 = vpop.permute.xlu0 %4946
      %4948 = vrot.lane.b32.xlu0 %v4857, 64
      %v4949 = vpop.permute.xlu0 %4948
      %4950 = vrot.lane.b32.xlu0 %v4874, 64
      %v4951 = vpop.permute.xlu0 %4950
      %4952 = vrot.lane.b32.xlu0 %v4891, 64
      %v4953 = vpop.permute.xlu0 %4952
      %4954 = vrot.lane.b32.xlu0 %v4908, 64
      %v4955 = vpop.permute.xlu0 %4954
      %4956 = vrot.lane.b32.xlu0 %v4925, 64
      %v4957 = vpop.permute.xlu0 %4956
      %v4974 = vsel %vm2083, %v4607, %v4927
      %v4975 = vsel %vm2084, %v4609, %v4929
      %v4976 = vsel %vm2083, %v4611, %v4931
      %v4977 = vsel %vm2084, %v4613, %v4933
      %v4978 = vsel %vm2083, %v4615, %v4935
      %v4979 = vsel %vm2084, %v4617, %v4937
      %v4980 = vsel %vm2083, %v4619, %v4939
      %v4981 = vsel %vm2084, %v4621, %v4941
      %v4982 = vsel %vm2083, %v4623, %v4943
      %v4983 = vsel %vm2084, %v4625, %v4945
      %v4984 = vsel %vm2083, %v4627, %v4947
      %v4985 = vsel %vm2084, %v4629, %v4949
      %v4986 = vsel %vm2083, %v4631, %v4951
      %v4987 = vsel %vm2084, %v4633, %v4953
      %v4988 = vsel %vm2083, %v4635, %v4955
      %v4989 = vsel %vm2084, %v4637, %v4957
      %v4990 = vsel 1, %v2725, %v4974
      %v4991 = vsel 1, %v2726, %v4975
      %v4992 = vsel 0, %v2725, %v4974
      %v4993 = vsel 0, %v2726, %v4975
      %v4994 = vsel 1, %v2727, %v4976
      %v4995 = vsel 1, %v2728, %v4977
      %v4996 = vsel 0, %v2727, %v4976
      %v4997 = vsel 0, %v2728, %v4977
      %v4998 = vsel 1, %v2729, %v4978
      %v4999 = vsel 1, %v2730, %v4979
      %v5000 = vsel 0, %v2729, %v4978
      %v5001 = vsel 0, %v2730, %v4979
      %v5002 = vsel 1, %v2731, %v4980
      %v5003 = vsel 1, %v2732, %v4981
      %v5004 = vsel 0, %v2731, %v4980
      %v5005 = vsel 0, %v2732, %v4981
      %v5006 = vsel 1, %v2733, %v4982
      %v5007 = vsel 1, %v2734, %v4983
      %v5008 = vsel 0, %v2733, %v4982
      %v5009 = vsel 0, %v2734, %v4983
      %v5010 = vsel 1, %v2735, %v4984
      %v5011 = vsel 1, %v2736, %v4985
      %v5012 = vsel 0, %v2735, %v4984
      %v5013 = vsel 0, %v2736, %v4985
      %v5014 = vsel 1, %v2737, %v4986
      %v5015 = vsel 1, %v2738, %v4987
      %v5016 = vsel 0, %v2737, %v4986
      %v5017 = vsel 0, %v2738, %v4987
      %v5018 = vsel 1, %v2739, %v4988
      %v5019 = vsel 1, %v2740, %v4989
      %v5020 = vsel 0, %v2739, %v4988
      %v5021 = vsel 0, %v2740, %v4989
      %v5022 = vpack.c.bf16 %v4991, %v4990
      %v5023 = vpack.c.bf16 %v4993, %v4992
      %v5024 = vpack.c.bf16 %v4995, %v4994
      %v5025 = vpack.c.bf16 %v4997, %v4996
      %v5026 = vpack.c.bf16 %v4999, %v4998
      %v5027 = vpack.c.bf16 %v5001, %v5000
      %v5028 = vpack.c.bf16 %v5003, %v5002
      %v5029 = vpack.c.bf16 %v5005, %v5004
      %v5030 = vpack.c.bf16 %v5007, %v5006
      %v5031 = vpack.c.bf16 %v5009, %v5008
      %v5032 = vpack.c.bf16 %v5011, %v5010
      %v5033 = vpack.c.bf16 %v5013, %v5012
      %v5034 = vpack.c.bf16 %v5015, %v5014
      %v5035 = vpack.c.bf16 %v5017, %v5016
      %v5036 = vpack.c.bf16 %v5019, %v5018
      %v5037 = vpack.c.bf16 %v5021, %v5020
      %v5038 = vld [vmem:[%s5] sm:$0xf]
      %v5039 = vld [vmem:[%s5 + $0x4] sm:$0xf]
      %v5040 = vld [vmem:[%s5 + $0x8] sm:$0xf]
      %v5041 = vld [vmem:[%s5 + $0xc] sm:$0xf]
      %v5042 = vld [vmem:[%s5 + $0x10] sm:$0xf]
      %v5043 = vld [vmem:[%s5 + $0x14] sm:$0xf]
      %v5044 = vld [vmem:[%s5 + $0x18] sm:$0xf]
      %v5045 = vld [vmem:[%s5 + $0x1c] sm:$0xf]
      %v5046 = vld [vmem:[%s6] sm:$0x1]
      %v5048 = vlaneseq
      %v5049 = vshrl.u32 %v5048, 7
      %v5050 = vsub.s32 0, %v5049
      %v5051 = vrot.slane %v5046, %v5050
      %v5061 = vunpack.c.l.b16 %v5038
      %v5062 = vunpack.c.l.b16 %v5039
      %v5063 = vunpack.c.l.b16 %v5040
      %v5064 = vunpack.c.l.b16 %v5041
      %v5065 = vunpack.c.l.b16 %v5042
      %v5066 = vunpack.c.l.b16 %v5043
      %v5067 = vunpack.c.l.b16 %v5044
      %v5068 = vunpack.c.l.b16 %v5045
      %v5069 = vpack.c.b16 %v5062, %v5061
      %v5070 = vpack.c.b16 %v5064, %v5063
      %v5071 = vpack.c.b16 %v5066, %v5065
      %v5072 = vpack.c.b16 %v5068, %v5067
      %vm5077 = vcmask 523264
      %v5079 = vsel %vm5077, %v5022, 0
      %v5082 = vsel %vm5077, %v5023, 0
      %v5085 = vsel %vm5077, %v5024, 0
      %v5088 = vsel %vm5077, %v5025, 0
      %v5091 = vsel %vm5077, %v5026, 0
      %v5094 = vsel %vm5077, %v5027, 0
      %v5097 = vsel %vm5077, %v5028, 0
      %v5100 = vsel %vm5077, %v5029, 0
      %v5103 = vsel %vm5077, %v5030, 0
      %v5106 = vsel %vm5077, %v5031, 0
      %v5109 = vsel %vm5077, %v5032, 0
      %v5112 = vsel %vm5077, %v5033, 0
      %v5115 = vsel %vm5077, %v5034, 0
      %v5118 = vsel %vm5077, %v5035, 0
      %v5121 = vsel %vm5077, %v5036, 0
      %v5124 = vsel %vm5077, %v5037, 0
      %5126 = vmatprep.subr.bf16.mxu0 0
      %5127 = vmatpush1.bf16.msra.mxu0 %v5069
      %5128 = vmatprep.subr.bf16.mxu0 0
      %5129 = vmatpush1.bf16.msra.mxu0 %v5070
      %5130 = vmatprep.subr.bf16.mxu0 0
      %5131 = vmatpush1.bf16.msra.mxu0 %v5071
      %5132 = vmatprep.subr.bf16.mxu0 0
      %5133 = vmatpush1.bf16.msra.mxu0 %v5072
      %5134 = vmatprep.subr.bf16.mxu0 0
      %5135 = vmatpush1.bf16.msra.mxu0 0
      %5136 = vmatprep.subr.bf16.mxu0 0
      %5137 = vmatpush1.bf16.msra.mxu0 0
      %5138 = vmatprep.subr.bf16.mxu0 0
      %5139 = vmatpush1.bf16.msra.mxu0 0
      %5140 = vmatprep.subr.bf16.mxu0 0
      %5141 = vmatpush1.bf16.msra.mxu0 0
      %5142 = vmatprep.subr.bf16.mxu0 0
      %5143 = vmatpush1.bf16.msra.mxu0 0
      %5144 = vmatprep.subr.bf16.mxu0 0
      %5145 = vmatpush1.bf16.msra.mxu0 0
      %5146 = vmatprep.subr.bf16.mxu0 0
      %5147 = vmatpush1.bf16.msra.mxu0 0
      %5148 = vmatprep.subr.bf16.mxu0 0
      %5149 = vmatpush1.bf16.msra.mxu0 0
      %5150 = vmatprep.subr.bf16.mxu0 0
      %5151 = vmatpush1.bf16.msra.mxu0 0
      %5152 = vmatprep.subr.bf16.mxu0 0
      %5153 = vmatpush1.bf16.msra.mxu0 0
      %5154 = vmatprep.subr.bf16.mxu0 0
      %5155 = vmatpush1.bf16.msra.mxu0 0
      %5156 = vmatprep.subr.bf16.mxu0 0
      %5157 = vmatpush1.bf16.msra.mxu0 0
      %5158 = vmatprep.mubr.bf16.mxu0 0
      %5159 = vmatmul.mubr.bf16.gmra.mrb[0].mxu0 %v5079
      %v5160 = vpop.f32.mrb[0].mxu0
      %v5161 = vadd.f32 %v5051, %v5160
      %v5162 = vpop.f32.mrb[0].mxu0
      %v5163 = vpop.f32.mrb[0].mxu0
      %v5164 = vadd.f32 %v5051, %v5163
      %v5165 = vpop.f32.mrb[0].mxu0
      %5166 = vmatprep.mubr.bf16.mxu0 0
      %5167 = vmatmul.mubr.bf16.gmra.mrb[0].mxu0 %v5082
      %v5168 = vpop.f32.mrb[0].mxu0
      %v5169 = vadd.f32 %v5051, %v5168
      %v5170 = vpop.f32.mrb[0].mxu0
      %v5171 = vpop.f32.mrb[0].mxu0
      %v5172 = vadd.f32 %v5051, %v5171
      %v5173 = vpop.f32.mrb[0].mxu0
      %5174 = vmatprep.mubr.bf16.mxu0 0
      %5175 = vmatmul.mubr.bf16.gmra.mrb[0].mxu0 %v5085
      %v5176 = vpop.f32.mrb[0].mxu0
      %v5177 = vadd.f32 %v5051, %v5176
      %v5178 = vpop.f32.mrb[0].mxu0
      %v5179 = vpop.f32.mrb[0].mxu0
      %v5180 = vadd.f32 %v5051, %v5179
      %v5181 = vpop.f32.mrb[0].mxu0
      %5182 = vmatprep.mubr.bf16.mxu0 0
      %5183 = vmatmul.mubr.bf16.gmra.mrb[0].mxu0 %v5088
      %v5184 = vpop.f32.mrb[0].mxu0
      %v5185 = vadd.f32 %v5051, %v5184
      %v5186 = vpop.f32.mrb[0].mxu0
      %v5187 = vpop.f32.mrb[0].mxu0
      %v5188 = vadd.f32 %v5051, %v5187
      %v5189 = vpop.f32.mrb[0].mxu0
      %5190 = vmatprep.mubr.bf16.mxu0 0
      %5191 = vmatmul.mubr.bf16.gmra.mrb[0].mxu0 %v5091
      %v5192 = vpop.f32.mrb[0].mxu0
      %v5193 = vadd.f32 %v5051, %v5192
      %v5194 = vpop.f32.mrb[0].mxu0
      %v5195 = vpop.f32.mrb[0].mxu0
      %v5196 = vadd.f32 %v5051, %v5195
      %v5197 = vpop.f32.mrb[0].mxu0
      %5198 = vmatprep.mubr.bf16.mxu0 0
      %5199 = vmatmul.mubr.bf16.gmra.mrb[0].mxu0 %v5094
      %v5200 = vpop.f32.mrb[0].mxu0
      %v5201 = vadd.f32 %v5051, %v5200
      %v5202 = vpop.f32.mrb[0].mxu0
      %v5203 = vpop.f32.mrb[0].mxu0
      %v5204 = vadd.f32 %v5051, %v5203
      %v5205 = vpop.f32.mrb[0].mxu0
      %5206 = vmatprep.mubr.bf16.mxu0 0
      %5207 = vmatmul.mubr.bf16.gmra.mrb[0].mxu0 %v5097
      %v5208 = vpop.f32.mrb[0].mxu0
      %v5209 = vadd.f32 %v5051, %v5208
      %v5210 = vpop.f32.mrb[0].mxu0
      %v5211 = vpop.f32.mrb[0].mxu0
      %v5212 = vadd.f32 %v5051, %v5211
      %v5213 = vpop.f32.mrb[0].mxu0
      %5214 = vmatprep.mubr.bf16.mxu0 0
      %5215 = vmatmul.mubr.bf16.gmra.mrb[0].mxu0 %v5100
      %v5216 = vpop.f32.mrb[0].mxu0
      %v5217 = vadd.f32 %v5051, %v5216
      %v5218 = vpop.f32.mrb[0].mxu0
      %v5219 = vpop.f32.mrb[0].mxu0
      %v5220 = vadd.f32 %v5051, %v5219
      %v5221 = vpop.f32.mrb[0].mxu0
      %5222 = vmatprep.mubr.bf16.mxu0 0
      %5223 = vmatmul.mubr.bf16.gmra.mrb[0].mxu0 %v5103
      %v5224 = vpop.f32.mrb[0].mxu0
      %v5225 = vadd.f32 %v5051, %v5224
      %v5226 = vpop.f32.mrb[0].mxu0
      %v5227 = vpop.f32.mrb[0].mxu0
      %v5228 = vadd.f32 %v5051, %v5227
      %v5229 = vpop.f32.mrb[0].mxu0
      %5230 = vmatprep.mubr.bf16.mxu0 0
      %5231 = vmatmul.mubr.bf16.gmra.mrb[0].mxu0 %v5106
      %v5232 = vpop.f32.mrb[0].mxu0
      %v5233 = vadd.f32 %v5051, %v5232
      %v5234 = vpop.f32.mrb[0].mxu0
      %v5235 = vpop.f32.mrb[0].mxu0
      %v5236 = vadd.f32 %v5051, %v5235
      %v5237 = vpop.f32.mrb[0].mxu0
      %5238 = vmatprep.mubr.bf16.mxu0 0
      %5239 = vmatmul.mubr.bf16.gmra.mrb[0].mxu0 %v5109
      %v5240 = vpop.f32.mrb[0].mxu0
      %v5241 = vadd.f32 %v5051, %v5240
      %v5242 = vpop.f32.mrb[0].mxu0
      %v5243 = vpop.f32.mrb[0].mxu0
      %v5244 = vadd.f32 %v5051, %v5243
      %v5245 = vpop.f32.mrb[0].mxu0
      %5246 = vmatprep.mubr.bf16.mxu0 0
      %5247 = vmatmul.mubr.bf16.gmra.mrb[0].mxu0 %v5112
      %v5248 = vpop.f32.mrb[0].mxu0
      %v5249 = vadd.f32 %v5051, %v5248
      %v5250 = vpop.f32.mrb[0].mxu0
      %v5251 = vpop.f32.mrb[0].mxu0
      %v5252 = vadd.f32 %v5051, %v5251
      %v5253 = vpop.f32.mrb[0].mxu0
      %5254 = vmatprep.mubr.bf16.mxu0 0
      %5255 = vmatmul.mubr.bf16.gmra.mrb[0].mxu0 %v5115
      %v5256 = vpop.f32.mrb[0].mxu0
      %v5257 = vadd.f32 %v5051, %v5256
      %v5258 = vpop.f32.mrb[0].mxu0
      %v5259 = vpop.f32.mrb[0].mxu0
      %v5260 = vadd.f32 %v5051, %v5259
      %v5261 = vpop.f32.mrb[0].mxu0
      %5262 = vmatprep.mubr.bf16.mxu0 0
      %5263 = vmatmul.mubr.bf16.gmra.mrb[0].mxu0 %v5118
      %v5264 = vpop.f32.mrb[0].mxu0
      %v5265 = vadd.f32 %v5051, %v5264
      %v5266 = vpop.f32.mrb[0].mxu0
      %v5267 = vpop.f32.mrb[0].mxu0
      %v5268 = vadd.f32 %v5051, %v5267
      %v5269 = vpop.f32.mrb[0].mxu0
      %5270 = vmatprep.mubr.bf16.mxu0 0
      %5271 = vmatmul.mubr.bf16.gmra.mrb[0].mxu0 %v5121
      %v5272 = vpop.f32.mrb[0].mxu0
      %v5273 = vadd.f32 %v5051, %v5272
      %v5274 = vpop.f32.mrb[0].mxu0
      %v5275 = vpop.f32.mrb[0].mxu0
      %v5276 = vadd.f32 %v5051, %v5275
      %v5277 = vpop.f32.mrb[0].mxu0
      %5278 = vmatprep.mubr.bf16.mxu0 0
      %5279 = vmatmul.mubr.bf16.gmra.mrb[0].mxu0 %v5124
      %v5280 = vpop.f32.mrb[0].mxu0
      %v5281 = vadd.f32 %v5051, %v5280
      %v5282 = vpop.f32.mrb[0].mxu0
      %v5283 = vpop.f32.mrb[0].mxu0
      %v5284 = vadd.f32 %v5051, %v5283
      %v5285 = vpop.f32.mrb[0].mxu0
      %5286 = vdwg.mxu0
      %5287 = vst.msk [vmem:[%s278] sm:$0xff] %vm315, %v5161
      %5288 = vst.msk [vmem:[%s278 + $0x8] sm:$0xff] %vm315, %v5164
      %5289 = vst.msk [vmem:[%s278 + $0x10] sm:$0xff] %vm315, %v5169
      %5290 = vst.msk [vmem:[%s278 + $0x18] sm:$0xff] %vm315, %v5172
      %5291 = vst.msk [vmem:[%s278 + $0x20] sm:$0xff] %vm315, %v5177
      %5292 = vst.msk [vmem:[%s278 + $0x28] sm:$0xff] %vm315, %v5180
      %5293 = vst.msk [vmem:[%s278 + $0x30] sm:$0xff] %vm315, %v5185
      %5294 = vst.msk [vmem:[%s278 + $0x38] sm:$0xff] %vm315, %v5188
      %5295 = vst.msk [vmem:[%s278 + $0x40] sm:$0xff] %vm315, %v5193
      %5296 = vst.msk [vmem:[%s278 + $0x48] sm:$0xff] %vm315, %v5196
      %5297 = vst.msk [vmem:[%s278 + $0x50] sm:$0xff] %vm315, %v5201
      %5298 = vst.msk [vmem:[%s278 + $0x58] sm:$0xff] %vm315, %v5204
      %5299 = vst.msk [vmem:[%s278 + $0x60] sm:$0xff] %vm315, %v5209
      %5300 = vst.msk [vmem:[%s278 + $0x68] sm:$0xff] %vm315, %v5212
      %5301 = vst.msk [vmem:[%s278 + $0x70] sm:$0xff] %vm315, %v5217
      %5302 = vst.msk [vmem:[%s278 + $0x78] sm:$0xff] %vm315, %v5220
      %5303 = vst.msk [vmem:[%s278 + $0x80] sm:$0xff] %vm315, %v5225
      %5304 = vst.msk [vmem:[%s278 + $0x88] sm:$0xff] %vm315, %v5228
      %5305 = vst.msk [vmem:[%s278 + $0x90] sm:$0xff] %vm315, %v5233
      %5306 = vst.msk [vmem:[%s278 + $0x98] sm:$0xff] %vm315, %v5236
      %5307 = vst.msk [vmem:[%s278 + $0xa0] sm:$0xff] %vm315, %v5241
      %5308 = vst.msk [vmem:[%s278 + $0xa8] sm:$0xff] %vm315, %v5244
      %5309 = vst.msk [vmem:[%s278 + $0xb0] sm:$0xff] %vm315, %v5249
      %5310 = vst.msk [vmem:[%s278 + $0xb8] sm:$0xff] %vm315, %v5252
      %5311 = vst.msk [vmem:[%s278 + $0xc0] sm:$0xff] %vm315, %v5257
      %5312 = vst.msk [vmem:[%s278 + $0xc8] sm:$0xff] %vm315, %v5260
      %5313 = vst.msk [vmem:[%s278 + $0xd0] sm:$0xff] %vm315, %v5265
      %5314 = vst.msk [vmem:[%s278 + $0xd8] sm:$0xff] %vm315, %v5268
      %5315 = vst.msk [vmem:[%s278 + $0xe0] sm:$0xff] %vm315, %v5273
      %5316 = vst.msk [vmem:[%s278 + $0xe8] sm:$0xff] %vm315, %v5276
      %5317 = vst.msk [vmem:[%s278 + $0xf0] sm:$0xff] %vm315, %v5281
      %5318 = vst.msk [vmem:[%s278 + $0xf8] sm:$0xff] %vm315, %v5284
      %p5319 = scmp.lt.s32.totalorder %s18, 1
      %s5320 = scalar_select %p5319, %s18, 1
      %s5321 = smul.addr %s5320, 32
      %s5322 = smul.addr %s5321, 8
      %s5323 = scalar_lea.vmem %s7, %s5322
      // Predicated region
      $region49: #{up_mix_ffn.1} parent=47 // pred_check
        %p5324 = pneg %p188
      $region50: #{up_mix_ffn.1} parent=47 // pred_check_branch
        %5326 = sbr.rel (%p5324) target = $region52
      $region51: #{up_mix_ffn.1} parent=47 // pred_region
        _
      $region52: #{up_mix_ffn.1} parent=47 // pred_fallthru
        _
    $region48: #{up_mix_ffn.1} parent=5 // pred_fallthru
      _
    %p5327 = scmp.le.s32.totalorder 2, %s13
    // Predicated region
    $region53: #{up_mix_ffn.1} parent=5 // pred_check
      %p5328 = pneg %p5327
    $region54: #{up_mix_ffn.1} parent=5 // pred_check_branch
      %5330 = sbr.rel (%p5328) target = $region56
    $region55: #{up_mix_ffn.1} parent=5 // pred_region
      %s5331 = ssub.s32 %s13, 2
      // Predicated region
      $region57: #{up_mix_ffn.1} parent=55 // pred_check
        %p5332 = pneg %p194
      $region58: #{up_mix_ffn.1} parent=55 // pred_check_branch
        %5334 = sbr.rel (%p5332) target = $region60
      $region59: #{up_mix_ffn.1} parent=55 // pred_region
        %p5335 = scmp.lt.s32.totalorder %s19, 1
        %s5336 = scalar_select %p5335, %s19, 1
        %s5337 = smul.addr %s5336, 32
        %s5338 = smul.addr %s5337, 8
        %s5339 = scalar_lea.vmem %s7, %s5338
      $region60: #{up_mix_ffn.1} parent=55 // pred_fallthru
        _
    $region56: #{up_mix_ffn.1} parent=5 // pred_fallthru
      _
  $region6: #{up_mix_ffn.1} parent=0 // loop_footer
    %s17 = sadd.s32 1, %s13
  $region7: #{up_mix_ffn.1} parent=0 // loop_footer_branch
    %12 = sbr.rel target = $region3
  $region8: #{up_mix_ffn.1} parent=0 // loop_exit
    _

</llo_original>
